<compile_context>
chip_gen: v7x
topology: tpu7x:2x2x1
jax: 0.10.0
libtpu: 0.0.40
codegen_flags: <defaults>
</compile_context>

<pallas_src>
import functools
import math

import jax
import jax.numpy as jnp
from jax.experimental import pallas as pl
from jax.experimental.pallas import tpu as pltpu


def knrm_kernel(qid_ref, did_ref, emb_ref, mqbd_ref, mdbd_ref, wb_ref, o_ref,
                *, vocab, n_bins, direct_bins, chain):
    # qid_ref : (1, TBQ, 1) int32   flattened query token ids (TBQ = block_b*Lq)
    # did_ref : (1, TBD, 1) int32   flattened doc token ids   (TBD = block_b*Ld)
    # emb_ref : (V, D)      f32     full embedding table (VMEM resident)
    # mqbd_ref: (1, TBQ, BB) f32    block-diagonal query mask (col = batch slot)
    # mdbd_ref: (1, TBD, BB) f32    block-diagonal doc mask
    # wb_ref  : (n_bins+1,) f32     dense-layer weights + bias, in SMEM
    # o_ref   : (1, 1, BB)  f32     per-batch-slot scores
    emb = emb_ref[...]
    mqbd = mqbd_ref[0]                       # (TBQ, BB)
    mdbd = mdbd_ref[0]                       # (TBD, BB)

    def embed_normed(ids):
        # Fused gather (one-hot @ table on the MXU) + fused L2 normalization
        # rsqrt(max(||x||^2, 1e-24)); all-zero (padding) rows stay exactly 0.
        n = ids.shape[0]
        onehot = (ids == jax.lax.broadcasted_iota(jnp.int32, (n, vocab), 1)
                  ).astype(jnp.float32)
        e = jnp.dot(onehot, emb, preferred_element_type=jnp.float32)
        r = jax.lax.rsqrt(
            jnp.maximum(jnp.sum(e * e, axis=1, keepdims=True), 1e-24))
        return e * r

    qn = embed_normed(qid_ref[0])            # (TBQ, D)
    dn = embed_normed(did_ref[0])            # (TBD, D)

    # Flattened-batch cosine similarity: (TBQ, D) x (TBD, D) -> (TBQ, TBD).
    # Cross-batch entries are junk and are killed by the block-diagonal masks.
    sim = jnp.einsum("qe,ke->qk", qn, dn, preferred_element_type=jnp.float32)

    def pool(pv, k):
        # Mask-weighted doc sum + batch separation in one MXU matmul; the
        # dense-layer weight w[k] (SMEM scalar) is folded into the accumulation.
        ps = jnp.dot(pv, mdbd, preferred_element_type=jnp.float32)  # (TBQ, BB)
        return wb_ref[k] * jnp.log(jnp.maximum(ps, 1e-10))

    lacc = jnp.zeros_like(mqbd)              # (TBQ, BB)

    # Bins with their own sigma (the 1e-3 exact-match bin): direct f32 exp.
    for k, mu_k, c_k in direct_bins:
        diff = sim - mu_k
        lacc = lacc + pool(jnp.exp(c_k * diff * diff), k)

    # Shared-sigma, uniformly spaced bins: anchor exp + 2 ratio exps; every
    # other bin is 2 VPU multiplies (neighbor-ratio recurrence).  All chain
    # values equal true exp(c*(sim-mu)^2) <= 1, so no overflow.
    if chain is not None:
        c, step, a_k, a_mu, fwd, bwd = chain
        diff = sim - a_mu
        g_anchor = jnp.exp(c * diff * diff)
        lacc = lacc + pool(g_anchor, a_k)
        if fwd:
            r_fwd = jnp.exp((-2.0 * c * step) * sim)
            g = g_anchor
            for k, t in fwd:
                g = g * r_fwd * t
                lacc = lacc + pool(g, k)
        if bwd:
            r_bwd = jnp.exp((2.0 * c * step) * sim)
            g = g_anchor
            for k, t in bwd:
                g = g * r_bwd * t
                lacc = lacc + pool(g, k)

    # score[b] = tanh(0.01 * sum_q mq[b, q] * lacc[b*Lq + q, b] + bias)
    s = jnp.sum(lacc * mqbd, axis=0, keepdims=True)          # (1, BB)
    o_ref[...] = jnp.tanh(0.01 * s + wb_ref[n_bins])[None]   # (1, 1, BB)


def knrm_forward(inputs_q, inputs_d, mask_q, mask_d, emb_weights,
                 mu, sigma, dense_w, dense_b, *, block_b=None):
    B, Lq = inputs_q.shape
    _, Ld = inputs_d.shape
    V, D = emb_weights.shape
    mu = [float(x) for x in mu]
    sigma = [float(x) for x in sigma]
    n_bins = len(mu)
    coef = [-0.5 / (s * s) for s in sigma]

    # Batch-block so the flattened doc dim is ~lane-dense (>= 128 lanes).
    # (On v7x at realistic shapes, pass block_b explicitly to keep nb >= 2 so
    # the "parallel" batch axis can shard across both TensorCores.)
    if block_b is None:
        block_b = -(-128 // Ld)
    block_b = int(max(1, min(block_b, B)))
    nb = -(-B // block_b)
    Bp = nb * block_b
    TBQ, TBD = block_b * Lq, block_b * Ld

    def pad_batch(x):
        if Bp == B:
            return x
        return jnp.pad(x, ((0, Bp - B),) + ((0, 0),) * (x.ndim - 1))

    iq = pad_batch(jnp.asarray(inputs_q, jnp.int32)).reshape(nb, TBQ, 1)
    idd = pad_batch(jnp.asarray(inputs_d, jnp.int32)).reshape(nb, TBD, 1)
    mq = pad_batch(jnp.asarray(mask_q, jnp.float32))
    md = pad_batch(jnp.asarray(mask_d, jnp.float32))

    # Block-diagonal masks: column b of a block selects batch-slot b's rows,
    # so one MXU matmul masks docs, sums over docs and separates the batch.
    eye = jnp.eye(block_b, dtype=jnp.float32)
    mqbd = jnp.einsum("nbl,bc->nblc", mq.reshape(nb, block_b, Lq), eye
                      ).reshape(nb, TBQ, block_b)
    mdbd = jnp.einsum("nbl,bc->nblc", md.reshape(nb, block_b, Ld), eye
                      ).reshape(nb, TBD, block_b)

    emb = jnp.asarray(emb_weights, jnp.float32)
    wb = jnp.concatenate([jnp.asarray(dense_w, jnp.float32).reshape(-1),
                          jnp.asarray(dense_b, jnp.float32).reshape(-1)[:1]])

    # Host-side RBF factorization plan for shared-sigma, uniformly spaced bins.
    chain = None
    lo, hi = 1, n_bins - 1
    if n_bins >= 3:
        step = mu[2] - mu[1]
        same_sigma = all(abs(sigma[k] - sigma[1]) < 1e-12
                         for k in range(1, n_bins))
        uniform = abs(step) > 1e-9 and all(
            abs((mu[k + 1] - mu[k]) - step) < 1e-9
            for k in range(1, n_bins - 1))
        if same_sigma and uniform:
            c = coef[1]
            center = 0.5 * (mu[lo] + mu[hi])
            a = min(range(lo, hi + 1), key=lambda k: abs(mu[k] - center))
            worst = max(abs(1.0 - mu[a]), abs(-1.0 - mu[a]))
            if c * worst * worst > -80.0:   # anchor exp cannot underflow
                fwd = tuple(
                    (k, math.exp(c * (step * step + 2.0 * step * mu[k - 1])))
                    for k in range(a + 1, hi + 1))
                bwd = tuple(
                    (k, math.exp(c * (step * step - 2.0 * step * mu[k + 1])))
                    for k in range(a - 1, lo - 1, -1))
                chain = (c, step, a, mu[a], fwd, bwd)

    if chain is None:
        direct_bins = tuple((k, mu[k], coef[k]) for k in range(n_bins))
    else:
        direct_bins = tuple((k, mu[k], coef[k]) for k in range(n_bins)
                            if not (lo <= k <= hi))

    kernel = functools.partial(knrm_kernel, vocab=V, n_bins=n_bins,
                               direct_bins=direct_bins, chain=chain)

    # Advisory cost estimate so XLA schedules the call sensibly.
    n_exp = len(direct_bins) + (0 if chain is None else
                                1 + (1 if chain[4] else 0) + (1 if chain[5] else 0))
    flops = nb * (2 * (TBQ + TBD) * V * D + 2 * TBQ * TBD * D
                  + n_bins * (2 * TBQ * TBD * block_b + 6 * TBQ * TBD))
    transc = nb * (TBQ * TBD * n_exp + n_bins * TBQ * block_b
                   + TBQ + TBD + block_b)
    nbytes = 4 * (iq.size + idd.size + emb.size + mqbd.size + mdbd.size
                  + wb.size + nb * block_b)
    cost = pl.CostEstimate(flops=int(flops), transcendentals=int(transc),
                           bytes_accessed=int(nbytes))

    # Size the scoped-VMEM limit from the per-step footprint (double-buffered
    # blocks + sim/pv temporaries); raise above the 16/32 MiB defaults but stay
    # at/under v7x's 64 MiB physical VMEM.
    step_bytes = 4 * (TBQ + TBD + V * D + (TBQ + TBD) * block_b + block_b)
    scratch_bytes = 4 * 6 * TBQ * TBD
    vmem_limit = int(min(64 * 1024 * 1024,
                         max(32 * 1024 * 1024,
                             4 * step_bytes + 2 * scratch_bytes)))

    out = pl.pallas_call(
        kernel,
        out_shape=jax.ShapeDtypeStruct((nb, 1, block_b), jnp.float32),
        grid=(nb,),
        in_specs=[
            pl.BlockSpec((1, TBQ, 1), lambda i: (i, 0, 0)),
            pl.BlockSpec((1, TBD, 1), lambda i: (i, 0, 0)),
            pl.BlockSpec((V, D), lambda i: (0, 0)),
            pl.BlockSpec((1, TBQ, block_b), lambda i: (i, 0, 0)),
            pl.BlockSpec((1, TBD, block_b), lambda i: (i, 0, 0)),
            pl.BlockSpec(memory_space=pltpu.MemorySpace.SMEM),
        ],
        out_specs=pl.BlockSpec((1, 1, block_b), lambda i: (i, 0, 0)),
        compiler_params=pltpu.CompilerParams(
            dimension_semantics=("parallel",),
            vmem_limit_bytes=vmem_limit),
        cost_estimate=cost,
    )(iq, idd, emb, mqbd, mdbd, wb)

    return out.reshape(Bp)[:B]      # matches torch.squeeze(..., 1) -> (B,)


def _reference(inputs_q, inputs_d, mask_q, mask_d, emb_weights,
               mu, sigma, dense_w, dense_b):
    # Pure-JAX reference mirroring the PyTorch forward, for a sanity check.
    q = jnp.take(emb_weights, inputs_q, axis=0)
    d = jnp.take(emb_weights, inputs_d, axis=0)
    q = q / jnp.maximum(jnp.linalg.norm(q, axis=2, keepdims=True), 1e-12)
    d = d / jnp.maximum(jnp.linalg.norm(d, axis=2, keepdims=True), 1e-12)
    sim = jnp.einsum("bqe,bde->bqd", q, d)[..., None]          # (B,Lq,Ld,1)
    mu_ = jnp.asarray(mu, jnp.float32).reshape(1, 1, 1, -1)
    sg_ = jnp.asarray(sigma, jnp.float32).reshape(1, 1, 1, -1)
    md = mask_d.astype(jnp.float32)[:, None, :, None]
    mq = mask_q.astype(jnp.float32)[:, :, None]
    pv = jnp.exp(-((sim - mu_) ** 2) / (sg_ ** 2) / 2.0) * md
    ps = jnp.sum(pv, axis=2)
    lps = jnp.log(jnp.maximum(ps, 1e-10)) * mq * 0.01
    lps = jnp.sum(lps, axis=1)                                  # (B, K)
    return jnp.tanh(lps @ jnp.asarray(dense_w, jnp.float32).reshape(-1)
                    + jnp.asarray(dense_b, jnp.float32).reshape(-1)[0])


if __name__ == "__main__":
    key = jax.random.PRNGKey(0)
    k_emb, k_q, k_d, k_w, k_b = jax.random.split(key, 5)

    VOCAB, D = 20, 32
    B, Lq, Ld = 8, 8, 16
    N_BINS = 11

    emb = jax.random.normal(k_emb, (VOCAB, D), dtype=jnp.float32) * 0.1
    emb = emb.at[0].set(0.0)  # padding_idx=0 row

    # Standard KNRM kernel centers / widths (exact-match bin + 10 soft bins).
    mu = [1.0, 0.9, 0.7, 0.5, 0.3, 0.1, -0.1, -0.3, -0.5, -0.7, -0.9]
    sigma = [1e-3] + [0.1] * (N_BINS - 1)

    dense_w = jax.random.normal(k_w, (N_BINS,), dtype=jnp.float32) * 0.5
    dense_b = jax.random.normal(k_b, (1,), dtype=jnp.float32) * 0.1

    # Token ids; index 0 acts as padding.
    inputs_q = jax.random.randint(k_q, (B, Lq), 0, VOCAB, dtype=jnp.int32)
    inputs_d = jax.random.randint(k_d, (B, Ld), 0, VOCAB, dtype=jnp.int32)
    mask_q = (inputs_q != 0).astype(jnp.float32)
    mask_d = (inputs_d != 0).astype(jnp.float32)

    out = knrm_forward(inputs_q, inputs_d, mask_q, mask_d, emb,
                       mu, sigma, dense_w, dense_b)   # block_b=8 -> grid=(1,)
    jax.block_until_ready(out)

    ref = _reference(inputs_q, inputs_d, mask_q, mask_d, emb,
                     mu, sigma, dense_w, dense_b)
    assert out.shape == (B,)
    # Fused normalization, flattened-batch matmuls and the shared-sigma exp
    # recurrence reorder f32 ops vs the reference -> modest tolerance.
    assert jnp.allclose(out, ref, atol=2e-4, rtol=2e-4), (out, ref)

    print("KERNEL_OK")
</pallas_src>

<mosaic_0001>
module attributes {stable_mosaic.version = 11 : i64} {
  func.func @knrm_kernel(%arg0: i32, %arg1: memref<1x64x1xi32, #tpu.memory_space<vmem>>, %arg2: memref<1x128x1xi32, #tpu.memory_space<vmem>>, %arg3: memref<20x32xf32, #tpu.memory_space<vmem>>, %arg4: memref<1x64x8xf32, #tpu.memory_space<vmem>>, %arg5: memref<1x128x8xf32, #tpu.memory_space<vmem>>, %arg6: memref<12xf32, #tpu.memory_space<smem>>, %arg7: memref<1x1x8xf32, #tpu.memory_space<vmem>>) attributes {dimension_semantics = [#tpu.dimension_semantics<parallel>], iteration_bounds = array<i64: 1>, scalar_prefetch = 0 : i64, scratch_operands = 0 : i64, tpu.core_type = #tpu.core_type<tc>, window_params = [{transform_indices = @transform_0, window_bounds = array<i64: 1, 64, 1>}, {transform_indices = @transform_1, window_bounds = array<i64: 1, 128, 1>}, {pipeline_mode = #tpu.pipeline_mode<synchronous>, transform_indices = @transform_2, window_bounds = array<i64: 20, 32>}, {transform_indices = @transform_3, window_bounds = array<i64: 1, 64, 8>}, {transform_indices = @transform_4, window_bounds = array<i64: 1, 128, 8>}, {transform_indices = @transform_5, window_bounds = array<i64: 12>}, {transform_indices = @transform_6, window_bounds = array<i64: 1, 1, 8>}]} {
    %c0 = arith.constant 0 : index
    %c0_0 = arith.constant 0 : index
    %0 = vector.load %arg3[%c0, %c0_0] : memref<20x32xf32, #tpu.memory_space<vmem>>, vector<20x32xf32>
    %c0_1 = arith.constant 0 : index
    %c0_2 = arith.constant 0 : index
    %c0_3 = arith.constant 0 : index
    %1 = vector.load %arg4[%c0_1, %c0_2, %c0_3] : memref<1x64x8xf32, #tpu.memory_space<vmem>>, vector<1x64x8xf32>
    %2 = vector.shape_cast %1 : vector<1x64x8xf32> to vector<64x8xf32>
    %c0_4 = arith.constant 0 : index
    %c0_5 = arith.constant 0 : index
    %c0_6 = arith.constant 0 : index
    %3 = vector.load %arg5[%c0_4, %c0_5, %c0_6] : memref<1x128x8xf32, #tpu.memory_space<vmem>>, vector<1x128x8xf32>
    %4 = vector.shape_cast %3 : vector<1x128x8xf32> to vector<128x8xf32>
    %c0_7 = arith.constant 0 : index
    %c0_8 = arith.constant 0 : index
    %c0_9 = arith.constant 0 : index
    %5 = vector.load %arg1[%c0_7, %c0_8, %c0_9] : memref<1x64x1xi32, #tpu.memory_space<vmem>>, vector<1x64x1xi32>
    %6 = vector.shape_cast %5 : vector<1x64x1xi32> to vector<64x1xi32>
    %7 = tpu.iota {dimensions = array<i32: 1>} : vector<64x20xi32>
    %8 = vector.broadcast %6 : vector<64x1xi32> to vector<64x20xi32>
    %9 = arith.cmpi eq, %8, %7 : vector<64x20xi32>
    %10 = arith.extui %9 : vector<64x20xi1> to vector<64x20xi32>
    %11 = arith.sitofp %10 : vector<64x20xi32> to vector<64x20xf32>
    %cst = arith.constant dense<0.000000e+00> : vector<64x32xf32>
    %12 = tpu.matmul %11, %0, %cst {dimension_numbers = #tpu.dot_dimension_numbers<[1], [0], [0], [1], [0, 0, 1, 1], [], []>} : vector<64x20xf32>, vector<20x32xf32>, vector<64x32xf32> -> vector<64x32xf32>
    %13 = arith.mulf %12, %12 : vector<64x32xf32>
    %cst_10 = arith.constant dense<0.000000e+00> : vector<64xf32>
    %14 = vector.multi_reduction <add>, %13, %cst_10 [1] : vector<64x32xf32> to vector<64xf32>
    %15 = vector.shape_cast %14 : vector<64xf32> to vector<64x1xf32>
    %cst_11 = arith.constant 1.000000e-24 : f32
    %16 = vector.broadcast %cst_11 : f32 to vector<64x1xf32>
    %17 = arith.maximumf %15, %16 : vector<64x1xf32>
    %18 = math.rsqrt %17 : vector<64x1xf32>
    %19 = vector.broadcast %18 : vector<64x1xf32> to vector<64x32xf32>
    %20 = arith.mulf %12, %19 : vector<64x32xf32>
    %c0_12 = arith.constant 0 : index
    %c0_13 = arith.constant 0 : index
    %c0_14 = arith.constant 0 : index
    %21 = vector.load %arg2[%c0_12, %c0_13, %c0_14] : memref<1x128x1xi32, #tpu.memory_space<vmem>>, vector<1x128x1xi32>
    %22 = vector.shape_cast %21 : vector<1x128x1xi32> to vector<128x1xi32>
    %23 = tpu.iota {dimensions = array<i32: 1>} : vector<128x20xi32>
    %24 = vector.broadcast %22 : vector<128x1xi32> to vector<128x20xi32>
    %25 = arith.cmpi eq, %24, %23 : vector<128x20xi32>
    %26 = arith.extui %25 : vector<128x20xi1> to vector<128x20xi32>
    %27 = arith.sitofp %26 : vector<128x20xi32> to vector<128x20xf32>
    %cst_15 = arith.constant dense<0.000000e+00> : vector<128x32xf32>
    %28 = tpu.matmul %27, %0, %cst_15 {dimension_numbers = #tpu.dot_dimension_numbers<[1], [0], [0], [1], [0, 0, 1, 1], [], []>} : vector<128x20xf32>, vector<20x32xf32>, vector<128x32xf32> -> vector<128x32xf32>
    %29 = arith.mulf %28, %28 : vector<128x32xf32>
    %cst_16 = arith.constant dense<0.000000e+00> : vector<128xf32>
    %30 = vector.multi_reduction <add>, %29, %cst_16 [1] : vector<128x32xf32> to vector<128xf32>
    %31 = vector.shape_cast %30 : vector<128xf32> to vector<128x1xf32>
    %cst_17 = arith.constant 1.000000e-24 : f32
    %32 = vector.broadcast %cst_17 : f32 to vector<128x1xf32>
    %33 = arith.maximumf %31, %32 : vector<128x1xf32>
    %34 = math.rsqrt %33 : vector<128x1xf32>
    %35 = vector.broadcast %34 : vector<128x1xf32> to vector<128x32xf32>
    %36 = arith.mulf %28, %35 : vector<128x32xf32>
    "tpu.trace_start"() <{level = 10 : i32, message = "qe,ke->qk"}> : () -> ()
    %cst_18 = arith.constant dense<0.000000e+00> : vector<64x128xf32>
    %37 = tpu.matmul %20, %36, %cst_18 {dimension_numbers = #tpu.dot_dimension_numbers<[1], [1], [0], [0], [0, 0, 1, 0], [], []>} : vector<64x32xf32>, vector<128x32xf32>, vector<64x128xf32> -> vector<64x128xf32>
    %cst_19 = arith.constant 0.000000e+00 : f32
    "tpu.trace_stop"() : () -> ()
    %38 = vector.broadcast %cst_19 : f32 to vector<64x8xf32>
    %cst_20 = arith.constant 1.000000e+00 : f32
    %39 = vector.broadcast %cst_20 : f32 to vector<64x128xf32>
    %40 = arith.subf %37, %39 : vector<64x128xf32>
    %cst_21 = arith.constant -5.000000e+05 : f32
    %41 = vector.broadcast %cst_21 : f32 to vector<64x128xf32>
    %42 = arith.mulf %41, %40 : vector<64x128xf32>
    %43 = arith.mulf %42, %40 : vector<64x128xf32>
    %44 = math.exp %43 : vector<64x128xf32>
    %cst_22 = arith.constant dense<0.000000e+00> : vector<64x8xf32>
    %45 = tpu.matmul %44, %4, %cst_22 {dimension_numbers = #tpu.dot_dimension_numbers<[1], [0], [0], [1], [0, 0, 1, 1], [], []>} : vector<64x128xf32>, vector<128x8xf32>, vector<64x8xf32> -> vector<64x8xf32>
    %c0_23 = arith.constant 0 : index
    %46 = memref.load %arg6[%c0_23] : memref<12xf32, #tpu.memory_space<smem>>
    %cst_24 = arith.constant 1.000000e-10 : f32
    %47 = vector.broadcast %cst_24 : f32 to vector<64x8xf32>
    %48 = arith.maximumf %45, %47 : vector<64x8xf32>
    %49 = math.log %48 : vector<64x8xf32>
    %50 = vector.broadcast %46 : f32 to vector<64x8xf32>
    %51 = arith.mulf %50, %49 : vector<64x8xf32>
    %52 = arith.addf %38, %51 : vector<64x8xf32>
    %cst_25 = arith.constant 1.000000e-01 : f32
    %53 = vector.broadcast %cst_25 : f32 to vector<64x128xf32>
    %54 = arith.subf %37, %53 : vector<64x128xf32>
    %cst_26 = arith.constant -5.000000e+01 : f32
    %55 = vector.broadcast %cst_26 : f32 to vector<64x128xf32>
    %56 = arith.mulf %55, %54 : vector<64x128xf32>
    %57 = arith.mulf %56, %54 : vector<64x128xf32>
    %58 = math.exp %57 : vector<64x128xf32>
    %cst_27 = arith.constant dense<0.000000e+00> : vector<64x8xf32>
    %59 = tpu.matmul %58, %4, %cst_27 {dimension_numbers = #tpu.dot_dimension_numbers<[1], [0], [0], [1], [0, 0, 1, 1], [], []>} : vector<64x128xf32>, vector<128x8xf32>, vector<64x8xf32> -> vector<64x8xf32>
    %c5 = arith.constant 5 : index
    %60 = memref.load %arg6[%c5] : memref<12xf32, #tpu.memory_space<smem>>
    %cst_28 = arith.constant 1.000000e-10 : f32
    %61 = vector.broadcast %cst_28 : f32 to vector<64x8xf32>
    %62 = arith.maximumf %59, %61 : vector<64x8xf32>
    %63 = math.log %62 : vector<64x8xf32>
    %64 = vector.broadcast %60 : f32 to vector<64x8xf32>
    %65 = arith.mulf %64, %63 : vector<64x8xf32>
    %66 = arith.addf %52, %65 : vector<64x8xf32>
    %cst_29 = arith.constant -2.000000e+01 : f32
    %67 = vector.broadcast %cst_29 : f32 to vector<64x128xf32>
    %68 = arith.mulf %67, %37 : vector<64x128xf32>
    %69 = math.exp %68 : vector<64x128xf32>
    %70 = arith.mulf %58, %69 : vector<64x128xf32>
    %cst_30 = arith.constant 1.000000e+00 : f32
    %71 = vector.broadcast %cst_30 : f32 to vector<64x128xf32>
    %72 = arith.mulf %70, %71 : vector<64x128xf32>
    %cst_31 = arith.constant dense<0.000000e+00> : vector<64x8xf32>
    %73 = tpu.matmul %72, %4, %cst_31 {dimension_numbers = #tpu.dot_dimension_numbers<[1], [0], [0], [1], [0, 0, 1, 1], [], []>} : vector<64x128xf32>, vector<128x8xf32>, vector<64x8xf32> -> vector<64x8xf32>
    %c6 = arith.constant 6 : index
    %74 = memref.load %arg6[%c6] : memref<12xf32, #tpu.memory_space<smem>>
    %cst_32 = arith.constant 1.000000e-10 : f32
    %75 = vector.broadcast %cst_32 : f32 to vector<64x8xf32>
    %76 = arith.maximumf %73, %75 : vector<64x8xf32>
    %77 = math.log %76 : vector<64x8xf32>
    %78 = vector.broadcast %74 : f32 to vector<64x8xf32>
    %79 = arith.mulf %78, %77 : vector<64x8xf32>
    %80 = arith.addf %66, %79 : vector<64x8xf32>
    %81 = arith.mulf %72, %69 : vector<64x128xf32>
    %cst_33 = arith.constant 0.0183156393 : f32
    %82 = vector.broadcast %cst_33 : f32 to vector<64x128xf32>
    %83 = arith.mulf %81, %82 : vector<64x128xf32>
    %cst_34 = arith.constant dense<0.000000e+00> : vector<64x8xf32>
    %84 = tpu.matmul %83, %4, %cst_34 {dimension_numbers = #tpu.dot_dimension_numbers<[1], [0], [0], [1], [0, 0, 1, 1], [], []>} : vector<64x128xf32>, vector<128x8xf32>, vector<64x8xf32> -> vector<64x8xf32>
    %c7 = arith.constant 7 : index
    %85 = memref.load %arg6[%c7] : memref<12xf32, #tpu.memory_space<smem>>
    %cst_35 = arith.constant 1.000000e-10 : f32
    %86 = vector.broadcast %cst_35 : f32 to vector<64x8xf32>
    %87 = arith.maximumf %84, %86 : vector<64x8xf32>
    %88 = math.log %87 : vector<64x8xf32>
    %89 = vector.broadcast %85 : f32 to vector<64x8xf32>
    %90 = arith.mulf %89, %88 : vector<64x8xf32>
    %91 = arith.addf %80, %90 : vector<64x8xf32>
    %92 = arith.mulf %83, %69 : vector<64x128xf32>
    %cst_36 = arith.constant 3.35462624E-4 : f32
    %93 = vector.broadcast %cst_36 : f32 to vector<64x128xf32>
    %94 = arith.mulf %92, %93 : vector<64x128xf32>
    %cst_37 = arith.constant dense<0.000000e+00> : vector<64x8xf32>
    %95 = tpu.matmul %94, %4, %cst_37 {dimension_numbers = #tpu.dot_dimension_numbers<[1], [0], [0], [1], [0, 0, 1, 1], [], []>} : vector<64x128xf32>, vector<128x8xf32>, vector<64x8xf32> -> vector<64x8xf32>
    %c8 = arith.constant 8 : index
    %96 = memref.load %arg6[%c8] : memref<12xf32, #tpu.memory_space<smem>>
    %cst_38 = arith.constant 1.000000e-10 : f32
    %97 = vector.broadcast %cst_38 : f32 to vector<64x8xf32>
    %98 = arith.maximumf %95, %97 : vector<64x8xf32>
    %99 = math.log %98 : vector<64x8xf32>
    %100 = vector.broadcast %96 : f32 to vector<64x8xf32>
    %101 = arith.mulf %100, %99 : vector<64x8xf32>
    %102 = arith.addf %91, %101 : vector<64x8xf32>
    %103 = arith.mulf %94, %69 : vector<64x128xf32>
    %cst_39 = arith.constant 6.14421242E-6 : f32
    %104 = vector.broadcast %cst_39 : f32 to vector<64x128xf32>
    %105 = arith.mulf %103, %104 : vector<64x128xf32>
    %cst_40 = arith.constant dense<0.000000e+00> : vector<64x8xf32>
    %106 = tpu.matmul %105, %4, %cst_40 {dimension_numbers = #tpu.dot_dimension_numbers<[1], [0], [0], [1], [0, 0, 1, 1], [], []>} : vector<64x128xf32>, vector<128x8xf32>, vector<64x8xf32> -> vector<64x8xf32>
    %c9 = arith.constant 9 : index
    %107 = memref.load %arg6[%c9] : memref<12xf32, #tpu.memory_space<smem>>
    %cst_41 = arith.constant 1.000000e-10 : f32
    %108 = vector.broadcast %cst_41 : f32 to vector<64x8xf32>
    %109 = arith.maximumf %106, %108 : vector<64x8xf32>
    %110 = math.log %109 : vector<64x8xf32>
    %111 = vector.broadcast %107 : f32 to vector<64x8xf32>
    %112 = arith.mulf %111, %110 : vector<64x8xf32>
    %113 = arith.addf %102, %112 : vector<64x8xf32>
    %114 = arith.mulf %105, %69 : vector<64x128xf32>
    %cst_42 = arith.constant 1.12535176E-7 : f32
    %115 = vector.broadcast %cst_42 : f32 to vector<64x128xf32>
    %116 = arith.mulf %114, %115 : vector<64x128xf32>
    %cst_43 = arith.constant dense<0.000000e+00> : vector<64x8xf32>
    %117 = tpu.matmul %116, %4, %cst_43 {dimension_numbers = #tpu.dot_dimension_numbers<[1], [0], [0], [1], [0, 0, 1, 1], [], []>} : vector<64x128xf32>, vector<128x8xf32>, vector<64x8xf32> -> vector<64x8xf32>
    %c10 = arith.constant 10 : index
    %118 = memref.load %arg6[%c10] : memref<12xf32, #tpu.memory_space<smem>>
    %cst_44 = arith.constant 1.000000e-10 : f32
    %119 = vector.broadcast %cst_44 : f32 to vector<64x8xf32>
    %120 = arith.maximumf %117, %119 : vector<64x8xf32>
    %121 = math.log %120 : vector<64x8xf32>
    %122 = vector.broadcast %118 : f32 to vector<64x8xf32>
    %123 = arith.mulf %122, %121 : vector<64x8xf32>
    %124 = arith.addf %113, %123 : vector<64x8xf32>
    %cst_45 = arith.constant 2.000000e+01 : f32
    %125 = vector.broadcast %cst_45 : f32 to vector<64x128xf32>
    %126 = arith.mulf %125, %37 : vector<64x128xf32>
    %127 = math.exp %126 : vector<64x128xf32>
    %128 = arith.mulf %58, %127 : vector<64x128xf32>
    %cst_46 = arith.constant 0.0183156393 : f32
    %129 = vector.broadcast %cst_46 : f32 to vector<64x128xf32>
    %130 = arith.mulf %128, %129 : vector<64x128xf32>
    %cst_47 = arith.constant dense<0.000000e+00> : vector<64x8xf32>
    %131 = tpu.matmul %130, %4, %cst_47 {dimension_numbers = #tpu.dot_dimension_numbers<[1], [0], [0], [1], [0, 0, 1, 1], [], []>} : vector<64x128xf32>, vector<128x8xf32>, vector<64x8xf32> -> vector<64x8xf32>
    %c4 = arith.constant 4 : index
    %132 = memref.load %arg6[%c4] : memref<12xf32, #tpu.memory_space<smem>>
    %cst_48 = arith.constant 1.000000e-10 : f32
    %133 = vector.broadcast %cst_48 : f32 to vector<64x8xf32>
    %134 = arith.maximumf %131, %133 : vector<64x8xf32>
    %135 = math.log %134 : vector<64x8xf32>
    %136 = vector.broadcast %132 : f32 to vector<64x8xf32>
    %137 = arith.mulf %136, %135 : vector<64x8xf32>
    %138 = arith.addf %124, %137 : vector<64x8xf32>
    %139 = arith.mulf %130, %127 : vector<64x128xf32>
    %cst_49 = arith.constant 3.35462624E-4 : f32
    %140 = vector.broadcast %cst_49 : f32 to vector<64x128xf32>
    %141 = arith.mulf %139, %140 : vector<64x128xf32>
    %cst_50 = arith.constant dense<0.000000e+00> : vector<64x8xf32>
    %142 = tpu.matmul %141, %4, %cst_50 {dimension_numbers = #tpu.dot_dimension_numbers<[1], [0], [0], [1], [0, 0, 1, 1], [], []>} : vector<64x128xf32>, vector<128x8xf32>, vector<64x8xf32> -> vector<64x8xf32>
    %c3 = arith.constant 3 : index
    %143 = memref.load %arg6[%c3] : memref<12xf32, #tpu.memory_space<smem>>
    %cst_51 = arith.constant 1.000000e-10 : f32
    %144 = vector.broadcast %cst_51 : f32 to vector<64x8xf32>
    %145 = arith.maximumf %142, %144 : vector<64x8xf32>
    %146 = math.log %145 : vector<64x8xf32>
    %147 = vector.broadcast %143 : f32 to vector<64x8xf32>
    %148 = arith.mulf %147, %146 : vector<64x8xf32>
    %149 = arith.addf %138, %148 : vector<64x8xf32>
    %150 = arith.mulf %141, %127 : vector<64x128xf32>
    %cst_52 = arith.constant 6.14421242E-6 : f32
    %151 = vector.broadcast %cst_52 : f32 to vector<64x128xf32>
    %152 = arith.mulf %150, %151 : vector<64x128xf32>
    %cst_53 = arith.constant dense<0.000000e+00> : vector<64x8xf32>
    %153 = tpu.matmul %152, %4, %cst_53 {dimension_numbers = #tpu.dot_dimension_numbers<[1], [0], [0], [1], [0, 0, 1, 1], [], []>} : vector<64x128xf32>, vector<128x8xf32>, vector<64x8xf32> -> vector<64x8xf32>
    %c2 = arith.constant 2 : index
    %154 = memref.load %arg6[%c2] : memref<12xf32, #tpu.memory_space<smem>>
    %cst_54 = arith.constant 1.000000e-10 : f32
    %155 = vector.broadcast %cst_54 : f32 to vector<64x8xf32>
    %156 = arith.maximumf %153, %155 : vector<64x8xf32>
    %157 = math.log %156 : vector<64x8xf32>
    %158 = vector.broadcast %154 : f32 to vector<64x8xf32>
    %159 = arith.mulf %158, %157 : vector<64x8xf32>
    %160 = arith.addf %149, %159 : vector<64x8xf32>
    %161 = arith.mulf %152, %127 : vector<64x128xf32>
    %cst_55 = arith.constant 1.12535176E-7 : f32
    %162 = vector.broadcast %cst_55 : f32 to vector<64x128xf32>
    %163 = arith.mulf %161, %162 : vector<64x128xf32>
    %cst_56 = arith.constant dense<0.000000e+00> : vector<64x8xf32>
    %164 = tpu.matmul %163, %4, %cst_56 {dimension_numbers = #tpu.dot_dimension_numbers<[1], [0], [0], [1], [0, 0, 1, 1], [], []>} : vector<64x128xf32>, vector<128x8xf32>, vector<64x8xf32> -> vector<64x8xf32>
    %c1 = arith.constant 1 : index
    %165 = memref.load %arg6[%c1] : memref<12xf32, #tpu.memory_space<smem>>
    %cst_57 = arith.constant 1.000000e-10 : f32
    %166 = vector.broadcast %cst_57 : f32 to vector<64x8xf32>
    %167 = arith.maximumf %164, %166 : vector<64x8xf32>
    %168 = math.log %167 : vector<64x8xf32>
    %169 = vector.broadcast %165 : f32 to vector<64x8xf32>
    %170 = arith.mulf %169, %168 : vector<64x8xf32>
    %171 = arith.addf %160, %170 : vector<64x8xf32>
    %172 = arith.mulf %171, %2 : vector<64x8xf32>
    %cst_58 = arith.constant dense<0.000000e+00> : vector<8xf32>
    %173 = vector.multi_reduction <add>, %172, %cst_58 [0] : vector<64x8xf32> to vector<8xf32>
    %174 = vector.shape_cast %173 : vector<8xf32> to vector<1x8xf32>
    %cst_59 = arith.constant 0.00999999977 : f32
    %175 = vector.broadcast %cst_59 : f32 to vector<1x8xf32>
    %176 = arith.mulf %175, %174 : vector<1x8xf32>
    %c11 = arith.constant 11 : index
    %177 = memref.load %arg6[%c11] : memref<12xf32, #tpu.memory_space<smem>>
    %178 = vector.broadcast %177 : f32 to vector<1x8xf32>
    %179 = arith.addf %176, %178 : vector<1x8xf32>
    %180 = math.tanh %179 : vector<1x8xf32>
    %181 = vector.shape_cast %180 : vector<1x8xf32> to vector<1x1x8xf32>
    %c0_60 = arith.constant 0 : index
    %c0_61 = arith.constant 0 : index
    %c0_62 = arith.constant 0 : index
    %182 = vector.load %arg7[%c0_60, %c0_61, %c0_62] : memref<1x1x8xf32, #tpu.memory_space<vmem>>, vector<1x1x8xf32>
    tpu.vector_store %arg7[%c0_60, %c0_61, %c0_62], %181 {strides = array<i32>} : memref<1x1x8xf32, #tpu.memory_space<vmem>>, vector<1x1x8xf32>,
    return
  }
  func.func @transform_0(%arg0: i32) -> (i32, i32, i32) {
    %c0_i32 = arith.constant 0 : i32
    %c0_i32_0 = arith.constant 0 : i32
    %c0_i32_1 = arith.constant 0 : i32
    return %arg0, %c0_i32, %c0_i32_0 : i32, i32, i32
  }
  func.func @transform_1(%arg0: i32) -> (i32, i32, i32) {
    %c0_i32 = arith.constant 0 : i32
    %c0_i32_0 = arith.constant 0 : i32
    %c0_i32_1 = arith.constant 0 : i32
    return %arg0, %c0_i32, %c0_i32_0 : i32, i32, i32
  }
  func.func @transform_2(%arg0: i32) -> (i32, i32) {
    %c0_i32 = arith.constant 0 : i32
    %c0_i32_0 = arith.constant 0 : i32
    %c0_i32_1 = arith.constant 0 : i32
    return %c0_i32, %c0_i32_0 : i32, i32
  }
  func.func @transform_3(%arg0: i32) -> (i32, i32, i32) {
    %c0_i32 = arith.constant 0 : i32
    %c0_i32_0 = arith.constant 0 : i32
    %c0_i32_1 = arith.constant 0 : i32
    return %arg0, %c0_i32, %c0_i32_0 : i32, i32, i32
  }
  func.func @transform_4(%arg0: i32) -> (i32, i32, i32) {
    %c0_i32 = arith.constant 0 : i32
    %c0_i32_0 = arith.constant 0 : i32
    %c0_i32_1 = arith.constant 0 : i32
    return %arg0, %c0_i32, %c0_i32_0 : i32, i32, i32
  }
  func.func @transform_5(%arg0: i32) -> i32 {
    %c0_i32 = arith.constant 0 : i32
    %c0_i32_0 = arith.constant 0 : i32
    return %c0_i32 : i32
  }
  func.func @transform_6(%arg0: i32) -> (i32, i32, i32) {
    %c0_i32 = arith.constant 0 : i32
    %c0_i32_0 = arith.constant 0 : i32
    %c0_i32_1 = arith.constant 0 : i32
    return %arg0, %c0_i32, %c0_i32_0 : i32, i32, i32
  }
}

</mosaic_0001>

<llo_original>
// kernel: tpu_custom_call.1
$region0: #{tpu_custom_call.1}
  #allocation0 [shape = 'u32[]', space=smem, size = 0x4, offset = 0x4, fixed_abs, tag = 'smem constant byte address 0x4 - core index']
  #allocation1 [shape = 'u32[144,128]{1,0:T(1,128)}', space=vmem, size = 0x12000, scoped, tag = 'internal scratch']
  %s0 = inlined_call_operand.vmem [shape: s32[1,64,1], index: 0, kind: input, shape index: {}]
  %s1 = inlined_call_operand.vmem [shape: s32[1,128,1], index: 1, kind: input, shape index: {}]
  %s2 = inlined_call_operand.vmem [shape: f32[20,32], index: 2, kind: input, shape index: {}]
  %s3 = inlined_call_operand.vmem [shape: f32[1,64,8], index: 3, kind: input, shape index: {}]
  %s4 = inlined_call_operand.vmem [shape: f32[1,128,8], index: 4, kind: input, shape index: {}]
  %s5 = inlined_call_operand.vmem [shape: f32[12], index: 5, kind: input, shape index: {}]
  %s6 = inlined_call_operand.hbm [shape: f32[1,1,8], index: 6, kind: output, shape index: {}]
  %s7 = sld [smem:[#allocation0]]
  $region38: #{tpu_custom_call.1} parent=0
    _
  %s9 = ssub.s32 1, %s7
  %s10 = scalar_select 0, %s9, %s7
  $region1: #{tpu_custom_call.1} parent=0
    #allocation2 [shape = 'u8[512]{0}', space=smem, size = 0x200, scoped, tag = 'input window, operand 5, single buffered']
    #allocation3 [shape = 's32[1]{0}', space=sflag, size = 0x4, scoped, tag = 'scoped memory for tpu_custom_call.1']
    #allocation4 [shape = 's32[1]{0}', space=sflag, size = 0x4, scoped, tag = 'scoped memory for tpu_custom_call.1']
    #allocation5 [shape = 'u8[512]{0}', space=vmem, size = 0x400, scoped, tag = 'output window, operand 0, single buffered']
    %11 = vsyncpa [#allocation4], 0
    %12 = vsyncpa [#allocation3], 0
    // Predicated region
    $region2: #{tpu_custom_call.1} parent=1 // pred_check
      _
    $region3: #{tpu_custom_call.1} parent=1 // pred_check_branch
      %14 = sbr.rel (0) target = $region5
    $region4: #{tpu_custom_call.1} parent=1 // pred_region
      _
    $region5: #{tpu_custom_call.1} parent=1 // pred_fallthru
      _
    // Predicated region
    $region6: #{tpu_custom_call.1} parent=1 // pred_check
      _
    $region7: #{tpu_custom_call.1} parent=1 // pred_check_branch
      %16 = sbr.rel (0) target = $region9
    $region8: #{tpu_custom_call.1} parent=1 // pred_region
      _
    $region9: #{tpu_custom_call.1} parent=1 // pred_fallthru
      _
    // Predicated region
    $region10: #{tpu_custom_call.1} parent=1 // pred_check
      _
    $region11: #{tpu_custom_call.1} parent=1 // pred_check_branch
      %18 = sbr.rel (0) target = $region13
    $region12: #{tpu_custom_call.1} parent=1 // pred_region
      _
    $region13: #{tpu_custom_call.1} parent=1 // pred_fallthru
      _
    // Predicated region
    $region14: #{tpu_custom_call.1} parent=1 // pred_check
      _
    $region15: #{tpu_custom_call.1} parent=1 // pred_check_branch
      %20 = sbr.rel (0) target = $region17
    $region16: #{tpu_custom_call.1} parent=1 // pred_region
      _
    $region17: #{tpu_custom_call.1} parent=1 // pred_fallthru
      _
    // Predicated region
    $region18: #{tpu_custom_call.1} parent=1 // pred_check
      _
    $region19: #{tpu_custom_call.1} parent=1 // pred_check_branch
      %22 = sbr.rel (0) target = $region21
    $region20: #{tpu_custom_call.1} parent=1 // pred_region
      _
    $region21: #{tpu_custom_call.1} parent=1 // pred_fallthru
      _
    // Predicated region
    $region22: #{tpu_custom_call.1} parent=1 // pred_check
      _
    $region23: #{tpu_custom_call.1} parent=1 // pred_check_branch
      %24 = sbr.rel (0) target = $region25
    $region24: #{tpu_custom_call.1} parent=1 // pred_region
      %s26 = ssub.s32 16, 16
      %27 = vsyncadd [#allocation4], %s26
      %s29 = sshll.u32 %s5, 4
      %s30 = int_to_ptr.vmem [resolvable:$true] %s29
      %32 = dma.vmem_to_smem %s30, 16, [#allocation2], [#allocation4]
    $region25: #{tpu_custom_call.1} parent=1 // pred_fallthru
      _
    // Predicated region
    $region26: #{tpu_custom_call.1} parent=1 // pred_check
      _
    $region27: #{tpu_custom_call.1} parent=1 // pred_check_branch
      %34 = sbr.rel (0) target = $region29
    $region28: #{tpu_custom_call.1} parent=1 // pred_region
      %35 = dma.done [#allocation4], 16
    $region29: #{tpu_custom_call.1} parent=1 // pred_fallthru
      _
    %36 = sfence
    %v37 = vld [vmem:[%s2] sm:$0xff]
    %v38 = vld [vmem:[%s2 + $0x8] sm:$0xff]
    %v39 = vld [vmem:[%s2 + $0x10] sm:$0xf]
    %v40 = vld [vmem:[%s3] sm:$0xff]
    %v41 = vld [vmem:[%s3 + $0x8] sm:$0xff]
    %v42 = vld [vmem:[%s3 + $0x10] sm:$0xff]
    %v43 = vld [vmem:[%s3 + $0x18] sm:$0xff]
    %v44 = vld [vmem:[%s3 + $0x20] sm:$0xff]
    %v45 = vld [vmem:[%s3 + $0x28] sm:$0xff]
    %v46 = vld [vmem:[%s3 + $0x30] sm:$0xff]
    %v47 = vld [vmem:[%s3 + $0x38] sm:$0xff]
    %v48 = vld [vmem:[%s4] sm:$0xff]
    %v49 = vld [vmem:[%s4 + $0x8] sm:$0xff]
    %v50 = vld [vmem:[%s4 + $0x10] sm:$0xff]
    %v51 = vld [vmem:[%s4 + $0x18] sm:$0xff]
    %v52 = vld [vmem:[%s4 + $0x20] sm:$0xff]
    %v53 = vld [vmem:[%s4 + $0x28] sm:$0xff]
    %v54 = vld [vmem:[%s4 + $0x30] sm:$0xff]
    %v55 = vld [vmem:[%s4 + $0x38] sm:$0xff]
    %v56 = vld [vmem:[%s4 + $0x40] sm:$0xff]
    %v57 = vld [vmem:[%s4 + $0x48] sm:$0xff]
    %v58 = vld [vmem:[%s4 + $0x50] sm:$0xff]
    %v59 = vld [vmem:[%s4 + $0x58] sm:$0xff]
    %v60 = vld [vmem:[%s4 + $0x60] sm:$0xff]
    %v61 = vld [vmem:[%s4 + $0x68] sm:$0xff]
    %v62 = vld [vmem:[%s4 + $0x70] sm:$0xff]
    %v63 = vld [vmem:[%s4 + $0x78] sm:$0xff]
    %v64 = vld [vmem:[%s0] sm:$0xff]
    %v65 = vld [vmem:[%s0 + $0x8] sm:$0xff]
    %v66 = vld [vmem:[%s0 + $0x10] sm:$0xff]
    %v67 = vld [vmem:[%s0 + $0x18] sm:$0xff]
    %v68 = vld [vmem:[%s0 + $0x20] sm:$0xff]
    %v69 = vld [vmem:[%s0 + $0x28] sm:$0xff]
    %v70 = vld [vmem:[%s0 + $0x30] sm:$0xff]
    %v71 = vld [vmem:[%s0 + $0x38] sm:$0xff]
    %v72 = vlaneseq
    %v73 = vand.u32 %v72, 127
    %74 = vset.pattern.permute.xlu0 0
    %75 = vperm.xlu0 %74, %v64
    %v76 = vpop.permute.xlu0 %75
    %77 = vset.pattern.permute.xlu0 0
    %78 = vperm.xlu0 %77, %v65
    %v79 = vpop.permute.xlu0 %78
    %80 = vset.pattern.permute.xlu0 0
    %81 = vperm.xlu0 %80, %v66
    %v82 = vpop.permute.xlu0 %81
    %83 = vset.pattern.permute.xlu0 0
    %84 = vperm.xlu0 %83, %v67
    %v85 = vpop.permute.xlu0 %84
    %86 = vset.pattern.permute.xlu0 0
    %87 = vperm.xlu0 %86, %v68
    %v88 = vpop.permute.xlu0 %87
    %89 = vset.pattern.permute.xlu0 0
    %90 = vperm.xlu0 %89, %v69
    %v91 = vpop.permute.xlu0 %90
    %92 = vset.pattern.permute.xlu0 0
    %93 = vperm.xlu0 %92, %v70
    %v94 = vpop.permute.xlu0 %93
    %95 = vset.pattern.permute.xlu0 0
    %96 = vperm.xlu0 %95, %v71
    %v97 = vpop.permute.xlu0 %96
    %vm98 = vcmp.eq.s32.totalorder %v76, %v73
    %vm99 = vcmp.eq.s32.totalorder %v79, %v73
    %vm100 = vcmp.eq.s32.totalorder %v82, %v73
    %vm101 = vcmp.eq.s32.totalorder %v85, %v73
    %vm102 = vcmp.eq.s32.totalorder %v88, %v73
    %vm103 = vcmp.eq.s32.totalorder %v91, %v73
    %vm104 = vcmp.eq.s32.totalorder %v94, %v73
    %vm105 = vcmp.eq.s32.totalorder %v97, %v73
    %v106 = vsel %vm98, 1, 0
    %v107 = vsel %vm99, 1, 0
    %v108 = vsel %vm100, 1, 0
    %v109 = vsel %vm101, 1, 0
    %v110 = vsel %vm102, 1, 0
    %v111 = vsel %vm103, 1, 0
    %v112 = vsel %vm104, 1, 0
    %v113 = vsel %vm105, 1, 0
    %v114 = vcvt.s32.f32 %v106
    %v115 = vcvt.s32.f32 %v107
    %v116 = vcvt.s32.f32 %v108
    %v117 = vcvt.s32.f32 %v109
    %v118 = vcvt.s32.f32 %v110
    %v119 = vcvt.s32.f32 %v111
    %v120 = vcvt.s32.f32 %v112
    %v121 = vcvt.s32.f32 %v113
    %vm122 = vcmask 162816
    %v124 = vsel %vm122, %v114, 0
    %v127 = vsel %vm122, %v115, 0
    %v130 = vsel %vm122, %v116, 0
    %v133 = vsel %vm122, %v117, 0
    %v136 = vsel %vm122, %v118, 0
    %v139 = vsel %vm122, %v119, 0
    %v142 = vsel %vm122, %v120, 0
    %v145 = vsel %vm122, %v121, 0
    %vm147 = vcmask 1043456
    %v149 = vsel %vm147, %v39, 0
    %151 = vmatprep.subr.mxu0 0.0
    %152 = vmatpush1.msra.mxu0 %v37
    %153 = vmatprep.subr.mxu0 0.0
    %154 = vmatpush1.msra.mxu0 %v38
    %155 = vmatprep.subr.mxu0 0.0
    %156 = vmatpush1.msra.mxu0 %v149
    %157 = vmatprep.subr.mxu0 0.0
    %158 = vmatpush1.msra.mxu0 0.0
    %159 = vmatprep.subr.mxu0 0.0
    %160 = vmatpush1.msra.mxu0 0.0
    %161 = vmatprep.subr.mxu0 0.0
    %162 = vmatpush1.msra.mxu0 0.0
    %163 = vmatprep.subr.mxu0 0.0
    %164 = vmatpush1.msra.mxu0 0.0
    %165 = vmatprep.subr.mxu0 0.0
    %166 = vmatpush1.msra.mxu0 0.0
    %167 = vmatprep.subr.mxu0 0.0
    %168 = vmatpush1.msra.mxu0 0.0
    %169 = vmatprep.subr.mxu0 0.0
    %170 = vmatpush1.msra.mxu0 0.0
    %171 = vmatprep.subr.mxu0 0.0
    %172 = vmatpush1.msra.mxu0 0.0
    %173 = vmatprep.subr.mxu0 0.0
    %174 = vmatpush1.msra.mxu0 0.0
    %175 = vmatprep.subr.mxu0 0.0
    %176 = vmatpush1.msra.mxu0 0.0
    %177 = vmatprep.subr.mxu0 0.0
    %178 = vmatpush1.msra.mxu0 0.0
    %179 = vmatprep.subr.mxu0 0.0
    %180 = vmatpush1.msra.mxu0 0.0
    %181 = vmatprep.subr.mxu0 0.0
    %182 = vmatpush1.msra.mxu0 0.0
    %183 = vmatprep.subr.mxu0 0.0
    %184 = vmatpush1.msra.mxu0 0.0
    %185 = vmatprep.subr.mxu0 0.0
    %186 = vmatpush1.msra.mxu0 0.0
    %187 = vmatprep.subr.mxu0 0.0
    %188 = vmatpush1.msra.mxu0 0.0
    %189 = vmatprep.subr.mxu0 0.0
    %190 = vmatpush1.msra.mxu0 0.0
    %191 = vmatprep.subr.mxu0 0.0
    %192 = vmatpush1.msra.mxu0 0.0
    %193 = vmatprep.subr.mxu0 0.0
    %194 = vmatpush1.msra.mxu0 0.0
    %195 = vmatprep.subr.mxu0 0.0
    %196 = vmatpush1.msra.mxu0 0.0
    %197 = vmatprep.subr.mxu0 0.0
    %198 = vmatpush1.msra.mxu0 0.0
    %199 = vmatprep.subr.mxu0 0.0
    %200 = vmatpush1.msra.mxu0 0.0
    %201 = vmatprep.subr.mxu0 0.0
    %202 = vmatpush1.msra.mxu0 0.0
    %203 = vmatprep.subr.mxu0 0.0
    %204 = vmatpush1.msra.mxu0 0.0
    %205 = vmatprep.subr.mxu0 0.0
    %206 = vmatpush1.msra.mxu0 0.0
    %207 = vmatprep.subr.mxu0 0.0
    %208 = vmatpush1.msra.mxu0 0.0
    %209 = vmatprep.subr.mxu0 0.0
    %210 = vmatpush1.msra.mxu0 0.0
    %211 = vmatprep.subr.mxu0 0.0
    %212 = vmatpush1.msra.mxu0 0.0
    %213 = vmatprep.subr.mxu0 0.0
    %214 = vmatpush1.msra.mxu0 0.0
    %215 = vmatprep.mubr.f32.mxu0 0.0
    %216 = vmatmul.mubr.f32.gmra.mrb[0].mxu0 %v124
    %v217 = vpop.f32.mrb[0].mxu0
    %v218 = vadd.f32 0.0, %v217
    %v219 = vpop.f32.mrb[0].mxu0
    %220 = vmatprep.mubr.f32.mxu0 0.0
    %221 = vmatmul.mubr.f32.gmra.mrb[0].mxu0 %v127
    %v222 = vpop.f32.mrb[0].mxu0
    %v223 = vadd.f32 0.0, %v222
    %v224 = vpop.f32.mrb[0].mxu0
    %225 = vmatprep.mubr.f32.mxu0 0.0
    %226 = vmatmul.mubr.f32.gmra.mrb[0].mxu0 %v130
    %v227 = vpop.f32.mrb[0].mxu0
    %v228 = vadd.f32 0.0, %v227
    %v229 = vpop.f32.mrb[0].mxu0
    %230 = vmatprep.mubr.f32.mxu0 0.0
    %231 = vmatmul.mubr.f32.gmra.mrb[0].mxu0 %v133
    %v232 = vpop.f32.mrb[0].mxu0
    %v233 = vadd.f32 0.0, %v232
    %v234 = vpop.f32.mrb[0].mxu0
    %235 = vmatprep.mubr.f32.mxu0 0.0
    %236 = vmatmul.mubr.f32.gmra.mrb[0].mxu0 %v136
    %v237 = vpop.f32.mrb[0].mxu0
    %v238 = vadd.f32 0.0, %v237
    %v239 = vpop.f32.mrb[0].mxu0
    %240 = vmatprep.mubr.f32.mxu0 0.0
    %241 = vmatmul.mubr.f32.gmra.mrb[0].mxu0 %v139
    %v242 = vpop.f32.mrb[0].mxu0
    %v243 = vadd.f32 0.0, %v242
    %v244 = vpop.f32.mrb[0].mxu0
    %245 = vmatprep.mubr.f32.mxu0 0.0
    %246 = vmatmul.mubr.f32.gmra.mrb[0].mxu0 %v142
    %v247 = vpop.f32.mrb[0].mxu0
    %v248 = vadd.f32 0.0, %v247
    %v249 = vpop.f32.mrb[0].mxu0
    %250 = vmatprep.mubr.f32.mxu0 0.0
    %251 = vmatmul.mubr.f32.gmra.mrb[0].mxu0 %v145
    %v252 = vpop.f32.mrb[0].mxu0
    %v253 = vadd.f32 0.0, %v252
    %v254 = vpop.f32.mrb[0].mxu0
    %255 = vdwg.mxu0
    %v256 = vmul.f32 %v218, %v218
    %v257 = vmul.f32 %v223, %v223
    %v258 = vmul.f32 %v228, %v228
    %v259 = vmul.f32 %v233, %v233
    %v260 = vmul.f32 %v238, %v238
    %v261 = vmul.f32 %v243, %v243
    %v262 = vmul.f32 %v248, %v248
    %v263 = vmul.f32 %v253, %v253
    %vm264 = vcmask 261120
    %v265 = vsel %vm264, %v256, 0.0
    %266 = vadd.xlane.f32.xlu0 %v265
    %v267 = vpop.xlane.xlu0 %266
    %v268 = vsel %vm264, %v257, 0.0
    %269 = vadd.xlane.f32.xlu0 %v268
    %v270 = vpop.xlane.xlu0 %269
    %v271 = vsel %vm264, %v258, 0.0
    %272 = vadd.xlane.f32.xlu0 %v271
    %v273 = vpop.xlane.xlu0 %272
    %v274 = vsel %vm264, %v259, 0.0
    %275 = vadd.xlane.f32.xlu0 %v274
    %v276 = vpop.xlane.xlu0 %275
    %v277 = vsel %vm264, %v260, 0.0
    %278 = vadd.xlane.f32.xlu0 %v277
    %v279 = vpop.xlane.xlu0 %278
    %v280 = vsel %vm264, %v261, 0.0
    %281 = vadd.xlane.f32.xlu0 %v280
    %v282 = vpop.xlane.xlu0 %281
    %v283 = vsel %vm264, %v262, 0.0
    %284 = vadd.xlane.f32.xlu0 %v283
    %v285 = vpop.xlane.xlu0 %284
    %v286 = vsel %vm264, %v263, 0.0
    %287 = vadd.xlane.f32.xlu0 %v286
    %v288 = vpop.xlane.xlu0 %287
    %v289 = vmax.f32 %v267, 1e-24
    %v290 = vmax.f32 %v270, 1e-24
    %v291 = vmax.f32 %v273, 1e-24
    %v292 = vmax.f32 %v276, 1e-24
    %v293 = vmax.f32 %v279, 1e-24
    %v294 = vmax.f32 %v282, 1e-24
    %v295 = vmax.f32 %v285, 1e-24
    %v296 = vmax.f32 %v288, 1e-24
    %v297 = vrsqrt.pop %v289
    %v298 = vrsqrt.pop %v290
    %v299 = vrsqrt.pop %v291
    %v300 = vrsqrt.pop %v292
    %v301 = vrsqrt.pop %v293
    %v302 = vrsqrt.pop %v294
    %v303 = vrsqrt.pop %v295
    %v304 = vrsqrt.pop %v296
    %v305 = vmul.f32 %v218, %v297
    %v306 = vmul.f32 %v223, %v298
    %v307 = vmul.f32 %v228, %v299
    %v308 = vmul.f32 %v233, %v300
    %v309 = vmul.f32 %v238, %v301
    %v310 = vmul.f32 %v243, %v302
    %v311 = vmul.f32 %v248, %v303
    %v312 = vmul.f32 %v253, %v304
    %v313 = vld [vmem:[%s1] sm:$0xff]
    %v314 = vld [vmem:[%s1 + $0x8] sm:$0xff]
    %v315 = vld [vmem:[%s1 + $0x10] sm:$0xff]
    %v316 = vld [vmem:[%s1 + $0x18] sm:$0xff]
    %v317 = vld [vmem:[%s1 + $0x20] sm:$0xff]
    %v318 = vld [vmem:[%s1 + $0x28] sm:$0xff]
    %v319 = vld [vmem:[%s1 + $0x30] sm:$0xff]
    %v320 = vld [vmem:[%s1 + $0x38] sm:$0xff]
    %v321 = vld [vmem:[%s1 + $0x40] sm:$0xff]
    %v322 = vld [vmem:[%s1 + $0x48] sm:$0xff]
    %v323 = vld [vmem:[%s1 + $0x50] sm:$0xff]
    %v324 = vld [vmem:[%s1 + $0x58] sm:$0xff]
    %v325 = vld [vmem:[%s1 + $0x60] sm:$0xff]
    %v326 = vld [vmem:[%s1 + $0x68] sm:$0xff]
    %v327 = vld [vmem:[%s1 + $0x70] sm:$0xff]
    %v328 = vld [vmem:[%s1 + $0x78] sm:$0xff]
    %329 = vset.pattern.permute.xlu0 0
    %330 = vperm.xlu0 %329, %v313
    %v331 = vpop.permute.xlu0 %330
    %332 = vset.pattern.permute.xlu0 0
    %333 = vperm.xlu0 %332, %v314
    %v334 = vpop.permute.xlu0 %333
    %335 = vset.pattern.permute.xlu0 0
    %336 = vperm.xlu0 %335, %v315
    %v337 = vpop.permute.xlu0 %336
    %338 = vset.pattern.permute.xlu0 0
    %339 = vperm.xlu0 %338, %v316
    %v340 = vpop.permute.xlu0 %339
    %341 = vset.pattern.permute.xlu0 0
    %342 = vperm.xlu0 %341, %v317
    %v343 = vpop.permute.xlu0 %342
    %344 = vset.pattern.permute.xlu0 0
    %345 = vperm.xlu0 %344, %v318
    %v346 = vpop.permute.xlu0 %345
    %347 = vset.pattern.permute.xlu0 0
    %348 = vperm.xlu0 %347, %v319
    %v349 = vpop.permute.xlu0 %348
    %350 = vset.pattern.permute.xlu0 0
    %351 = vperm.xlu0 %350, %v320
    %v352 = vpop.permute.xlu0 %351
    %353 = vset.pattern.permute.xlu0 0
    %354 = vperm.xlu0 %353, %v321
    %v355 = vpop.permute.xlu0 %354
    %356 = vset.pattern.permute.xlu0 0
    %357 = vperm.xlu0 %356, %v322
    %v358 = vpop.permute.xlu0 %357
    %359 = vset.pattern.permute.xlu0 0
    %360 = vperm.xlu0 %359, %v323
    %v361 = vpop.permute.xlu0 %360
    %362 = vset.pattern.permute.xlu0 0
    %363 = vperm.xlu0 %362, %v324
    %v364 = vpop.permute.xlu0 %363
    %365 = vset.pattern.permute.xlu0 0
    %366 = vperm.xlu0 %365, %v325
    %v367 = vpop.permute.xlu0 %366
    %368 = vset.pattern.permute.xlu0 0
    %369 = vperm.xlu0 %368, %v326
    %v370 = vpop.permute.xlu0 %369
    %371 = vset.pattern.permute.xlu0 0
    %372 = vperm.xlu0 %371, %v327
    %v373 = vpop.permute.xlu0 %372
    %374 = vset.pattern.permute.xlu0 0
    %375 = vperm.xlu0 %374, %v328
    %v376 = vpop.permute.xlu0 %375
    %vm377 = vcmp.eq.s32.totalorder %v331, %v73
    %vm378 = vcmp.eq.s32.totalorder %v334, %v73
    %vm379 = vcmp.eq.s32.totalorder %v337, %v73
    %vm380 = vcmp.eq.s32.totalorder %v340, %v73
    %vm381 = vcmp.eq.s32.totalorder %v343, %v73
    %vm382 = vcmp.eq.s32.totalorder %v346, %v73
    %vm383 = vcmp.eq.s32.totalorder %v349, %v73
    %vm384 = vcmp.eq.s32.totalorder %v352, %v73
    %vm385 = vcmp.eq.s32.totalorder %v355, %v73
    %vm386 = vcmp.eq.s32.totalorder %v358, %v73
    %vm387 = vcmp.eq.s32.totalorder %v361, %v73
    %vm388 = vcmp.eq.s32.totalorder %v364, %v73
    %vm389 = vcmp.eq.s32.totalorder %v367, %v73
    %vm390 = vcmp.eq.s32.totalorder %v370, %v73
    %vm391 = vcmp.eq.s32.totalorder %v373, %v73
    %vm392 = vcmp.eq.s32.totalorder %v376, %v73
    %v393 = vsel %vm377, 1, 0
    %v394 = vsel %vm378, 1, 0
    %v395 = vsel %vm379, 1, 0
    %v396 = vsel %vm380, 1, 0
    %v397 = vsel %vm381, 1, 0
    %v398 = vsel %vm382, 1, 0
    %v399 = vsel %vm383, 1, 0
    %v400 = vsel %vm384, 1, 0
    %v401 = vsel %vm385, 1, 0
    %v402 = vsel %vm386, 1, 0
    %v403 = vsel %vm387, 1, 0
    %v404 = vsel %vm388, 1, 0
    %v405 = vsel %vm389, 1, 0
    %v406 = vsel %vm390, 1, 0
    %v407 = vsel %vm391, 1, 0
    %v408 = vsel %vm392, 1, 0
    %v409 = vcvt.s32.f32 %v393
    %v410 = vcvt.s32.f32 %v394
    %v411 = vcvt.s32.f32 %v395
    %v412 = vcvt.s32.f32 %v396
    %v413 = vcvt.s32.f32 %v397
    %v414 = vcvt.s32.f32 %v398
    %v415 = vcvt.s32.f32 %v399
    %v416 = vcvt.s32.f32 %v400
    %v417 = vcvt.s32.f32 %v401
    %v418 = vcvt.s32.f32 %v402
    %v419 = vcvt.s32.f32 %v403
    %v420 = vcvt.s32.f32 %v404
    %v421 = vcvt.s32.f32 %v405
    %v422 = vcvt.s32.f32 %v406
    %v423 = vcvt.s32.f32 %v407
    %v424 = vcvt.s32.f32 %v408
    %v426 = vsel %vm122, %v409, 0
    %v429 = vsel %vm122, %v410, 0
    %v432 = vsel %vm122, %v411, 0
    %v435 = vsel %vm122, %v412, 0
    %v438 = vsel %vm122, %v413, 0
    %v441 = vsel %vm122, %v414, 0
    %v444 = vsel %vm122, %v415, 0
    %v447 = vsel %vm122, %v416, 0
    %v450 = vsel %vm122, %v417, 0
    %v453 = vsel %vm122, %v418, 0
    %v456 = vsel %vm122, %v419, 0
    %v459 = vsel %vm122, %v420, 0
    %v462 = vsel %vm122, %v421, 0
    %v465 = vsel %vm122, %v422, 0
    %v468 = vsel %vm122, %v423, 0
    %v471 = vsel %vm122, %v424, 0
    %473 = vmatprep.subr.mxu0 0.0
    %474 = vmatpush1.msra.mxu0 %v37
    %475 = vmatprep.subr.mxu0 0.0
    %476 = vmatpush1.msra.mxu0 %v38
    %477 = vmatprep.subr.mxu0 0.0
    %478 = vmatpush1.msra.mxu0 %v149
    %479 = vmatprep.subr.mxu0 0.0
    %480 = vmatpush1.msra.mxu0 0.0
    %481 = vmatprep.subr.mxu0 0.0
    %482 = vmatpush1.msra.mxu0 0.0
    %483 = vmatprep.subr.mxu0 0.0
    %484 = vmatpush1.msra.mxu0 0.0
    %485 = vmatprep.subr.mxu0 0.0
    %486 = vmatpush1.msra.mxu0 0.0
    %487 = vmatprep.subr.mxu0 0.0
    %488 = vmatpush1.msra.mxu0 0.0
    %489 = vmatprep.subr.mxu0 0.0
    %490 = vmatpush1.msra.mxu0 0.0
    %491 = vmatprep.subr.mxu0 0.0
    %492 = vmatpush1.msra.mxu0 0.0
    %493 = vmatprep.subr.mxu0 0.0
    %494 = vmatpush1.msra.mxu0 0.0
    %495 = vmatprep.subr.mxu0 0.0
    %496 = vmatpush1.msra.mxu0 0.0
    %497 = vmatprep.subr.mxu0 0.0
    %498 = vmatpush1.msra.mxu0 0.0
    %499 = vmatprep.subr.mxu0 0.0
    %500 = vmatpush1.msra.mxu0 0.0
    %501 = vmatprep.subr.mxu0 0.0
    %502 = vmatpush1.msra.mxu0 0.0
    %503 = vmatprep.subr.mxu0 0.0
    %504 = vmatpush1.msra.mxu0 0.0
    %505 = vmatprep.subr.mxu0 0.0
    %506 = vmatpush1.msra.mxu0 0.0
    %507 = vmatprep.subr.mxu0 0.0
    %508 = vmatpush1.msra.mxu0 0.0
    %509 = vmatprep.subr.mxu0 0.0
    %510 = vmatpush1.msra.mxu0 0.0
    %511 = vmatprep.subr.mxu0 0.0
    %512 = vmatpush1.msra.mxu0 0.0
    %513 = vmatprep.subr.mxu0 0.0
    %514 = vmatpush1.msra.mxu0 0.0
    %515 = vmatprep.subr.mxu0 0.0
    %516 = vmatpush1.msra.mxu0 0.0
    %517 = vmatprep.subr.mxu0 0.0
    %518 = vmatpush1.msra.mxu0 0.0
    %519 = vmatprep.subr.mxu0 0.0
    %520 = vmatpush1.msra.mxu0 0.0
    %521 = vmatprep.subr.mxu0 0.0
    %522 = vmatpush1.msra.mxu0 0.0
    %523 = vmatprep.subr.mxu0 0.0
    %524 = vmatpush1.msra.mxu0 0.0
    %525 = vmatprep.subr.mxu0 0.0
    %526 = vmatpush1.msra.mxu0 0.0
    %527 = vmatprep.subr.mxu0 0.0
    %528 = vmatpush1.msra.mxu0 0.0
    %529 = vmatprep.subr.mxu0 0.0
    %530 = vmatpush1.msra.mxu0 0.0
    %531 = vmatprep.subr.mxu0 0.0
    %532 = vmatpush1.msra.mxu0 0.0
    %533 = vmatprep.subr.mxu0 0.0
    %534 = vmatpush1.msra.mxu0 0.0
    %535 = vmatprep.subr.mxu0 0.0
    %536 = vmatpush1.msra.mxu0 0.0
    %537 = vmatprep.mubr.f32.mxu0 0.0
    %538 = vmatmul.mubr.f32.gmra.mrb[0].mxu0 %v426
    %v539 = vpop.f32.mrb[0].mxu0
    %v540 = vadd.f32 0.0, %v539
    %v541 = vpop.f32.mrb[0].mxu0
    %542 = vmatprep.mubr.f32.mxu0 0.0
    %543 = vmatmul.mubr.f32.gmra.mrb[0].mxu0 %v429
    %v544 = vpop.f32.mrb[0].mxu0
    %v545 = vadd.f32 0.0, %v544
    %v546 = vpop.f32.mrb[0].mxu0
    %547 = vmatprep.mubr.f32.mxu0 0.0
    %548 = vmatmul.mubr.f32.gmra.mrb[0].mxu0 %v432
    %v549 = vpop.f32.mrb[0].mxu0
    %v550 = vadd.f32 0.0, %v549
    %v551 = vpop.f32.mrb[0].mxu0
    %552 = vmatprep.mubr.f32.mxu0 0.0
    %553 = vmatmul.mubr.f32.gmra.mrb[0].mxu0 %v435
    %v554 = vpop.f32.mrb[0].mxu0
    %v555 = vadd.f32 0.0, %v554
    %v556 = vpop.f32.mrb[0].mxu0
    %557 = vmatprep.mubr.f32.mxu0 0.0
    %558 = vmatmul.mubr.f32.gmra.mrb[0].mxu0 %v438
    %v559 = vpop.f32.mrb[0].mxu0
    %v560 = vadd.f32 0.0, %v559
    %v561 = vpop.f32.mrb[0].mxu0
    %562 = vmatprep.mubr.f32.mxu0 0.0
    %563 = vmatmul.mubr.f32.gmra.mrb[0].mxu0 %v441
    %v564 = vpop.f32.mrb[0].mxu0
    %v565 = vadd.f32 0.0, %v564
    %v566 = vpop.f32.mrb[0].mxu0
    %567 = vmatprep.mubr.f32.mxu0 0.0
    %568 = vmatmul.mubr.f32.gmra.mrb[0].mxu0 %v444
    %v569 = vpop.f32.mrb[0].mxu0
    %v570 = vadd.f32 0.0, %v569
    %v571 = vpop.f32.mrb[0].mxu0
    %572 = vmatprep.mubr.f32.mxu0 0.0
    %573 = vmatmul.mubr.f32.gmra.mrb[0].mxu0 %v447
    %v574 = vpop.f32.mrb[0].mxu0
    %v575 = vadd.f32 0.0, %v574
    %v576 = vpop.f32.mrb[0].mxu0
    %577 = vmatprep.mubr.f32.mxu0 0.0
    %578 = vmatmul.mubr.f32.gmra.mrb[0].mxu0 %v450
    %v579 = vpop.f32.mrb[0].mxu0
    %v580 = vadd.f32 0.0, %v579
    %v581 = vpop.f32.mrb[0].mxu0
    %582 = vmatprep.mubr.f32.mxu0 0.0
    %583 = vmatmul.mubr.f32.gmra.mrb[0].mxu0 %v453
    %v584 = vpop.f32.mrb[0].mxu0
    %v585 = vadd.f32 0.0, %v584
    %v586 = vpop.f32.mrb[0].mxu0
    %587 = vmatprep.mubr.f32.mxu0 0.0
    %588 = vmatmul.mubr.f32.gmra.mrb[0].mxu0 %v456
    %v589 = vpop.f32.mrb[0].mxu0
    %v590 = vadd.f32 0.0, %v589
    %v591 = vpop.f32.mrb[0].mxu0
    %592 = vmatprep.mubr.f32.mxu0 0.0
    %593 = vmatmul.mubr.f32.gmra.mrb[0].mxu0 %v459
    %v594 = vpop.f32.mrb[0].mxu0
    %v595 = vadd.f32 0.0, %v594
    %v596 = vpop.f32.mrb[0].mxu0
    %597 = vmatprep.mubr.f32.mxu0 0.0
    %598 = vmatmul.mubr.f32.gmra.mrb[0].mxu0 %v462
    %v599 = vpop.f32.mrb[0].mxu0
    %v600 = vadd.f32 0.0, %v599
    %v601 = vpop.f32.mrb[0].mxu0
    %602 = vmatprep.mubr.f32.mxu0 0.0
    %603 = vmatmul.mubr.f32.gmra.mrb[0].mxu0 %v465
    %v604 = vpop.f32.mrb[0].mxu0
    %v605 = vadd.f32 0.0, %v604
    %v606 = vpop.f32.mrb[0].mxu0
    %607 = vmatprep.mubr.f32.mxu0 0.0
    %608 = vmatmul.mubr.f32.gmra.mrb[0].mxu0 %v468
    %v609 = vpop.f32.mrb[0].mxu0
    %v610 = vadd.f32 0.0, %v609
    %v611 = vpop.f32.mrb[0].mxu0
    %612 = vmatprep.mubr.f32.mxu0 0.0
    %613 = vmatmul.mubr.f32.gmra.mrb[0].mxu0 %v471
    %v614 = vpop.f32.mrb[0].mxu0
    %v615 = vadd.f32 0.0, %v614
    %v616 = vpop.f32.mrb[0].mxu0
    %617 = vdwg.mxu0
    %v618 = vmul.f32 %v540, %v540
    %v619 = vmul.f32 %v545, %v545
    %v620 = vmul.f32 %v550, %v550
    %v621 = vmul.f32 %v555, %v555
    %v622 = vmul.f32 %v560, %v560
    %v623 = vmul.f32 %v565, %v565
    %v624 = vmul.f32 %v570, %v570
    %v625 = vmul.f32 %v575, %v575
    %v626 = vmul.f32 %v580, %v580
    %v627 = vmul.f32 %v585, %v585
    %v628 = vmul.f32 %v590, %v590
    %v629 = vmul.f32 %v595, %v595
    %v630 = vmul.f32 %v600, %v600
    %v631 = vmul.f32 %v605, %v605
    %v632 = vmul.f32 %v610, %v610
    %v633 = vmul.f32 %v615, %v615
    %v634 = vsel %vm264, %v618, 0.0
    %635 = vadd.xlane.f32.xlu0 %v634
    %v636 = vpop.xlane.xlu0 %635
    %v637 = vsel %vm264, %v619, 0.0
    %638 = vadd.xlane.f32.xlu0 %v637
    %v639 = vpop.xlane.xlu0 %638
    %v640 = vsel %vm264, %v620, 0.0
    %641 = vadd.xlane.f32.xlu0 %v640
    %v642 = vpop.xlane.xlu0 %641
    %v643 = vsel %vm264, %v621, 0.0
    %644 = vadd.xlane.f32.xlu0 %v643
    %v645 = vpop.xlane.xlu0 %644
    %v646 = vsel %vm264, %v622, 0.0
    %647 = vadd.xlane.f32.xlu0 %v646
    %v648 = vpop.xlane.xlu0 %647
    %v649 = vsel %vm264, %v623, 0.0
    %650 = vadd.xlane.f32.xlu0 %v649
    %v651 = vpop.xlane.xlu0 %650
    %v652 = vsel %vm264, %v624, 0.0
    %653 = vadd.xlane.f32.xlu0 %v652
    %v654 = vpop.xlane.xlu0 %653
    %v655 = vsel %vm264, %v625, 0.0
    %656 = vadd.xlane.f32.xlu0 %v655
    %v657 = vpop.xlane.xlu0 %656
    %v658 = vsel %vm264, %v626, 0.0
    %659 = vadd.xlane.f32.xlu0 %v658
    %v660 = vpop.xlane.xlu0 %659
    %v661 = vsel %vm264, %v627, 0.0
    %662 = vadd.xlane.f32.xlu0 %v661
    %v663 = vpop.xlane.xlu0 %662
    %v664 = vsel %vm264, %v628, 0.0
    %665 = vadd.xlane.f32.xlu0 %v664
    %v666 = vpop.xlane.xlu0 %665
    %v667 = vsel %vm264, %v629, 0.0
    %668 = vadd.xlane.f32.xlu0 %v667
    %v669 = vpop.xlane.xlu0 %668
    %v670 = vsel %vm264, %v630, 0.0
    %671 = vadd.xlane.f32.xlu0 %v670
    %v672 = vpop.xlane.xlu0 %671
    %v673 = vsel %vm264, %v631, 0.0
    %674 = vadd.xlane.f32.xlu0 %v673
    %v675 = vpop.xlane.xlu0 %674
    %v676 = vsel %vm264, %v632, 0.0
    %677 = vadd.xlane.f32.xlu0 %v676
    %v678 = vpop.xlane.xlu0 %677
    %v679 = vsel %vm264, %v633, 0.0
    %680 = vadd.xlane.f32.xlu0 %v679
    %v681 = vpop.xlane.xlu0 %680
    %v682 = vmax.f32 %v636, 1e-24
    %v683 = vmax.f32 %v639, 1e-24
    %v684 = vmax.f32 %v642, 1e-24
    %v685 = vmax.f32 %v645, 1e-24
    %v686 = vmax.f32 %v648, 1e-24
    %v687 = vmax.f32 %v651, 1e-24
    %v688 = vmax.f32 %v654, 1e-24
    %v689 = vmax.f32 %v657, 1e-24
    %v690 = vmax.f32 %v660, 1e-24
    %v691 = vmax.f32 %v663, 1e-24
    %v692 = vmax.f32 %v666, 1e-24
    %v693 = vmax.f32 %v669, 1e-24
    %v694 = vmax.f32 %v672, 1e-24
    %v695 = vmax.f32 %v675, 1e-24
    %v696 = vmax.f32 %v678, 1e-24
    %v697 = vmax.f32 %v681, 1e-24
    %v698 = vrsqrt.pop %v682
    %v699 = vrsqrt.pop %v683
    %v700 = vrsqrt.pop %v684
    %v701 = vrsqrt.pop %v685
    %v702 = vrsqrt.pop %v686
    %v703 = vrsqrt.pop %v687
    %v704 = vrsqrt.pop %v688
    %v705 = vrsqrt.pop %v689
    %v706 = vrsqrt.pop %v690
    %v707 = vrsqrt.pop %v691
    %v708 = vrsqrt.pop %v692
    %v709 = vrsqrt.pop %v693
    %v710 = vrsqrt.pop %v694
    %v711 = vrsqrt.pop %v695
    %v712 = vrsqrt.pop %v696
    %v713 = vrsqrt.pop %v697
    %v714 = vmul.f32 %v540, %v698
    %v715 = vmul.f32 %v545, %v699
    %v716 = vmul.f32 %v550, %v700
    %v717 = vmul.f32 %v555, %v701
    %v718 = vmul.f32 %v560, %v702
    %v719 = vmul.f32 %v565, %v703
    %v720 = vmul.f32 %v570, %v704
    %v721 = vmul.f32 %v575, %v705
    %v722 = vmul.f32 %v580, %v706
    %v723 = vmul.f32 %v585, %v707
    %v724 = vmul.f32 %v590, %v708
    %v725 = vmul.f32 %v595, %v709
    %v726 = vmul.f32 %v600, %v710
    %v727 = vmul.f32 %v605, %v711
    %v728 = vmul.f32 %v610, %v712
    %v729 = vmul.f32 %v615, %v713
    %v731 = vsel %vm264, %v305, 0
    %v734 = vsel %vm264, %v306, 0
    %v737 = vsel %vm264, %v307, 0
    %v740 = vsel %vm264, %v308, 0
    %v743 = vsel %vm264, %v309, 0
    %v746 = vsel %vm264, %v310, 0
    %v749 = vsel %vm264, %v311, 0
    %v752 = vsel %vm264, %v312, 0
    %v755 = vsel %vm264, %v714, 0
    %v758 = vsel %vm264, %v715, 0
    %v761 = vsel %vm264, %v716, 0
    %v764 = vsel %vm264, %v717, 0
    %v767 = vsel %vm264, %v718, 0
    %v770 = vsel %vm264, %v719, 0
    %v773 = vsel %vm264, %v720, 0
    %v776 = vsel %vm264, %v721, 0
    %v779 = vsel %vm264, %v722, 0
    %v782 = vsel %vm264, %v723, 0
    %v785 = vsel %vm264, %v724, 0
    %v788 = vsel %vm264, %v725, 0
    %v791 = vsel %vm264, %v726, 0
    %v794 = vsel %vm264, %v727, 0
    %v797 = vsel %vm264, %v728, 0
    %v800 = vsel %vm264, %v729, 0
    %802 = vmatprep.subr.mxu0 0.0
    %803 = vmatpush1.xpose.msra.mxu0 %v755
    %804 = vmatprep.subr.mxu0 0.0
    %805 = vmatpush1.xpose.msra.mxu0 %v758
    %806 = vmatprep.subr.mxu0 0.0
    %807 = vmatpush1.xpose.msra.mxu0 %v761
    %808 = vmatprep.subr.mxu0 0.0
    %809 = vmatpush1.xpose.msra.mxu0 %v764
    %810 = vmatprep.subr.mxu0 0.0
    %811 = vmatpush1.xpose.msra.mxu0 %v767
    %812 = vmatprep.subr.mxu0 0.0
    %813 = vmatpush1.xpose.msra.mxu0 %v770
    %814 = vmatprep.subr.mxu0 0.0
    %815 = vmatpush1.xpose.msra.mxu0 %v773
    %816 = vmatprep.subr.mxu0 0.0
    %817 = vmatpush1.xpose.msra.mxu0 %v776
    %818 = vmatprep.subr.mxu0 0.0
    %819 = vmatpush1.xpose.msra.mxu0 %v779
    %820 = vmatprep.subr.mxu0 0.0
    %821 = vmatpush1.xpose.msra.mxu0 %v782
    %822 = vmatprep.subr.mxu0 0.0
    %823 = vmatpush1.xpose.msra.mxu0 %v785
    %824 = vmatprep.subr.mxu0 0.0
    %825 = vmatpush1.xpose.msra.mxu0 %v788
    %826 = vmatprep.subr.mxu0 0.0
    %827 = vmatpush1.xpose.msra.mxu0 %v791
    %828 = vmatprep.subr.mxu0 0.0
    %829 = vmatpush1.xpose.msra.mxu0 %v794
    %830 = vmatprep.subr.mxu0 0.0
    %831 = vmatpush1.xpose.msra.mxu0 %v797
    %832 = vmatprep.subr.mxu0 0.0
    %833 = vmatpush1.xpose.msra.mxu0 %v800
    %834 = vmatprep.subr.mxu0 0.0
    %835 = vmatpush1.xpose.msra.mxu0 0.0
    %836 = vmatprep.subr.mxu0 0.0
    %837 = vmatpush1.xpose.msra.mxu0 0.0
    %838 = vmatprep.subr.mxu0 0.0
    %839 = vmatpush1.xpose.msra.mxu0 0.0
    %840 = vmatprep.subr.mxu0 0.0
    %841 = vmatpush1.xpose.msra.mxu0 0.0
    %842 = vmatprep.subr.mxu0 0.0
    %843 = vmatpush1.xpose.msra.mxu0 0.0
    %844 = vmatprep.subr.mxu0 0.0
    %845 = vmatpush1.xpose.msra.mxu0 0.0
    %846 = vmatprep.subr.mxu0 0.0
    %847 = vmatpush1.xpose.msra.mxu0 0.0
    %848 = vmatprep.subr.mxu0 0.0
    %849 = vmatpush1.xpose.msra.mxu0 0.0
    %850 = vmatprep.subr.mxu0 0.0
    %851 = vmatpush1.xpose.msra.mxu0 0.0
    %852 = vmatprep.subr.mxu0 0.0
    %853 = vmatpush1.xpose.msra.mxu0 0.0
    %854 = vmatprep.subr.mxu0 0.0
    %855 = vmatpush1.xpose.msra.mxu0 0.0
    %856 = vmatprep.subr.mxu0 0.0
    %857 = vmatpush1.xpose.msra.mxu0 0.0
    %858 = vmatprep.subr.mxu0 0.0
    %859 = vmatpush1.xpose.msra.mxu0 0.0
    %860 = vmatprep.subr.mxu0 0.0
    %861 = vmatpush1.xpose.msra.mxu0 0.0
    %862 = vmatprep.subr.mxu0 0.0
    %863 = vmatpush1.xpose.msra.mxu0 0.0
    %864 = vmatprep.subr.mxu0 0.0
    %865 = vmatpush1.xpose.msra.mxu0 0.0
    %866 = vmatprep.mubr.f32.mxu0 0.0
    %867 = vmatmul.mubr.f32.gmra.mrb[0].mxu0 %v731
    %v868 = vpop.f32.mrb[0].mxu0
    %v869 = vadd.f32 0.0, %v868
    %v870 = vpop.f32.mrb[0].mxu0
    %871 = vmatprep.mubr.f32.mxu0 0.0
    %872 = vmatmul.mubr.f32.gmra.mrb[0].mxu0 %v734
    %v873 = vpop.f32.mrb[0].mxu0
    %v874 = vadd.f32 0.0, %v873
    %v875 = vpop.f32.mrb[0].mxu0
    %876 = vmatprep.mubr.f32.mxu0 0.0
    %877 = vmatmul.mubr.f32.gmra.mrb[0].mxu0 %v737
    %v878 = vpop.f32.mrb[0].mxu0
    %v879 = vadd.f32 0.0, %v878
    %v880 = vpop.f32.mrb[0].mxu0
    %881 = vmatprep.mubr.f32.mxu0 0.0
    %882 = vmatmul.mubr.f32.gmra.mrb[0].mxu0 %v740
    %v883 = vpop.f32.mrb[0].mxu0
    %v884 = vadd.f32 0.0, %v883
    %v885 = vpop.f32.mrb[0].mxu0
    %886 = vmatprep.mubr.f32.mxu0 0.0
    %887 = vmatmul.mubr.f32.gmra.mrb[0].mxu0 %v743
    %v888 = vpop.f32.mrb[0].mxu0
    %v889 = vadd.f32 0.0, %v888
    %v890 = vpop.f32.mrb[0].mxu0
    %891 = vmatprep.mubr.f32.mxu0 0.0
    %892 = vmatmul.mubr.f32.gmra.mrb[0].mxu0 %v746
    %v893 = vpop.f32.mrb[0].mxu0
    %v894 = vadd.f32 0.0, %v893
    %v895 = vpop.f32.mrb[0].mxu0
    %896 = vmatprep.mubr.f32.mxu0 0.0
    %897 = vmatmul.mubr.f32.gmra.mrb[0].mxu0 %v749
    %v898 = vpop.f32.mrb[0].mxu0
    %v899 = vadd.f32 0.0, %v898
    %v900 = vpop.f32.mrb[0].mxu0
    %901 = vmatprep.mubr.f32.mxu0 0.0
    %902 = vmatmul.mubr.f32.gmra.mrb[0].mxu0 %v752
    %v903 = vpop.f32.mrb[0].mxu0
    %v904 = vadd.f32 0.0, %v903
    %v905 = vpop.f32.mrb[0].mxu0
    %906 = vdwg.mxu0
    %v907 = vsub.f32 %v869, 1.0
    %v908 = vsub.f32 %v874, 1.0
    %v909 = vsub.f32 %v879, 1.0
    %v910 = vsub.f32 %v884, 1.0
    %v911 = vsub.f32 %v889, 1.0
    %v912 = vsub.f32 %v894, 1.0
    %v913 = vsub.f32 %v899, 1.0
    %v914 = vsub.f32 %v904, 1.0
    %v915 = vmul.f32 %v907, -500000.0
    %v916 = vmul.f32 %v908, -500000.0
    %v917 = vmul.f32 %v909, -500000.0
    %v918 = vmul.f32 %v910, -500000.0
    %v919 = vmul.f32 %v911, -500000.0
    %v920 = vmul.f32 %v912, -500000.0
    %v921 = vmul.f32 %v913, -500000.0
    %v922 = vmul.f32 %v914, -500000.0
    %v923 = vmul.f32 %v915, %v907
    %v924 = vmul.f32 %v916, %v908
    %v925 = vmul.f32 %v917, %v909
    %v926 = vmul.f32 %v918, %v910
    %v927 = vmul.f32 %v919, %v911
    %v928 = vmul.f32 %v920, %v912
    %v929 = vmul.f32 %v921, %v913
    %v930 = vmul.f32 %v922, %v914
    %v931 = vmul.f32 %v923, 1.442695
    %v932 = vpow.pop %v931
    %v933 = vmul.f32 %v924, 1.442695
    %v934 = vpow.pop %v933
    %v935 = vmul.f32 %v925, 1.442695
    %v936 = vpow.pop %v935
    %v937 = vmul.f32 %v926, 1.442695
    %v938 = vpow.pop %v937
    %v939 = vmul.f32 %v927, 1.442695
    %v940 = vpow.pop %v939
    %v941 = vmul.f32 %v928, 1.442695
    %v942 = vpow.pop %v941
    %v943 = vmul.f32 %v929, 1.442695
    %v944 = vpow.pop %v943
    %v945 = vmul.f32 %v930, 1.442695
    %v946 = vpow.pop %v945
    %947 = vmatprep.subr.mxu0 0.0
    %948 = vmatpush1.msra.mxu0 %v48
    %949 = vmatprep.subr.mxu0 0.0
    %950 = vmatpush1.msra.mxu0 %v49
    %951 = vmatprep.subr.mxu0 0.0
    %952 = vmatpush1.msra.mxu0 %v50
    %953 = vmatprep.subr.mxu0 0.0
    %954 = vmatpush1.msra.mxu0 %v51
    %955 = vmatprep.subr.mxu0 0.0
    %956 = vmatpush1.msra.mxu0 %v52
    %957 = vmatprep.subr.mxu0 0.0
    %958 = vmatpush1.msra.mxu0 %v53
    %959 = vmatprep.subr.mxu0 0.0
    %960 = vmatpush1.msra.mxu0 %v54
    %961 = vmatprep.subr.mxu0 0.0
    %962 = vmatpush1.msra.mxu0 %v55
    %963 = vmatprep.subr.mxu0 0.0
    %964 = vmatpush1.msra.mxu0 %v56
    %965 = vmatprep.subr.mxu0 0.0
    %966 = vmatpush1.msra.mxu0 %v57
    %967 = vmatprep.subr.mxu0 0.0
    %968 = vmatpush1.msra.mxu0 %v58
    %969 = vmatprep.subr.mxu0 0.0
    %970 = vmatpush1.msra.mxu0 %v59
    %971 = vmatprep.subr.mxu0 0.0
    %972 = vmatpush1.msra.mxu0 %v60
    %973 = vmatprep.subr.mxu0 0.0
    %974 = vmatpush1.msra.mxu0 %v61
    %975 = vmatprep.subr.mxu0 0.0
    %976 = vmatpush1.msra.mxu0 %v62
    %977 = vmatprep.subr.mxu0 0.0
    %978 = vmatpush1.msra.mxu0 %v63
    %979 = vmatprep.subr.mxu0 0.0
    %980 = vmatpush1.msra.mxu0 0.0
    %981 = vmatprep.subr.mxu0 0.0
    %982 = vmatpush1.msra.mxu0 0.0
    %983 = vmatprep.subr.mxu0 0.0
    %984 = vmatpush1.msra.mxu0 0.0
    %985 = vmatprep.subr.mxu0 0.0
    %986 = vmatpush1.msra.mxu0 0.0
    %987 = vmatprep.subr.mxu0 0.0
    %988 = vmatpush1.msra.mxu0 0.0
    %989 = vmatprep.subr.mxu0 0.0
    %990 = vmatpush1.msra.mxu0 0.0
    %991 = vmatprep.subr.mxu0 0.0
    %992 = vmatpush1.msra.mxu0 0.0
    %993 = vmatprep.subr.mxu0 0.0
    %994 = vmatpush1.msra.mxu0 0.0
    %995 = vmatprep.subr.mxu0 0.0
    %996 = vmatpush1.msra.mxu0 0.0
    %997 = vmatprep.subr.mxu0 0.0
    %998 = vmatpush1.msra.mxu0 0.0
    %999 = vmatprep.subr.mxu0 0.0
    %1000 = vmatpush1.msra.mxu0 0.0
    %1001 = vmatprep.subr.mxu0 0.0
    %1002 = vmatpush1.msra.mxu0 0.0
    %1003 = vmatprep.subr.mxu0 0.0
    %1004 = vmatpush1.msra.mxu0 0.0
    %1005 = vmatprep.subr.mxu0 0.0
    %1006 = vmatpush1.msra.mxu0 0.0
    %1007 = vmatprep.subr.mxu0 0.0
    %1008 = vmatpush1.msra.mxu0 0.0
    %1009 = vmatprep.subr.mxu0 0.0
    %1010 = vmatpush1.msra.mxu0 0.0
    %1011 = vmatprep.mubr.f32.mxu0 0.0
    %1012 = vmatmul.mubr.f32.gmra.mrb[0].mxu0 %v932
    %v1013 = vpop.f32.mrb[0].mxu0
    %v1014 = vadd.f32 0.0, %v1013
    %v1015 = vpop.f32.mrb[0].mxu0
    %1016 = vmatprep.mubr.f32.mxu0 0.0
    %1017 = vmatmul.mubr.f32.gmra.mrb[0].mxu0 %v934
    %v1018 = vpop.f32.mrb[0].mxu0
    %v1019 = vadd.f32 0.0, %v1018
    %v1020 = vpop.f32.mrb[0].mxu0
    %1021 = vmatprep.mubr.f32.mxu0 0.0
    %1022 = vmatmul.mubr.f32.gmra.mrb[0].mxu0 %v936
    %v1023 = vpop.f32.mrb[0].mxu0
    %v1024 = vadd.f32 0.0, %v1023
    %v1025 = vpop.f32.mrb[0].mxu0
    %1026 = vmatprep.mubr.f32.mxu0 0.0
    %1027 = vmatmul.mubr.f32.gmra.mrb[0].mxu0 %v938
    %v1028 = vpop.f32.mrb[0].mxu0
    %v1029 = vadd.f32 0.0, %v1028
    %v1030 = vpop.f32.mrb[0].mxu0
    %1031 = vmatprep.mubr.f32.mxu0 0.0
    %1032 = vmatmul.mubr.f32.gmra.mrb[0].mxu0 %v940
    %v1033 = vpop.f32.mrb[0].mxu0
    %v1034 = vadd.f32 0.0, %v1033
    %v1035 = vpop.f32.mrb[0].mxu0
    %1036 = vmatprep.mubr.f32.mxu0 0.0
    %1037 = vmatmul.mubr.f32.gmra.mrb[0].mxu0 %v942
    %v1038 = vpop.f32.mrb[0].mxu0
    %v1039 = vadd.f32 0.0, %v1038
    %v1040 = vpop.f32.mrb[0].mxu0
    %1041 = vmatprep.mubr.f32.mxu0 0.0
    %1042 = vmatmul.mubr.f32.gmra.mrb[0].mxu0 %v944
    %v1043 = vpop.f32.mrb[0].mxu0
    %v1044 = vadd.f32 0.0, %v1043
    %v1045 = vpop.f32.mrb[0].mxu0
    %1046 = vmatprep.mubr.f32.mxu0 0.0
    %1047 = vmatmul.mubr.f32.gmra.mrb[0].mxu0 %v946
    %v1048 = vpop.f32.mrb[0].mxu0
    %v1049 = vadd.f32 0.0, %v1048
    %v1050 = vpop.f32.mrb[0].mxu0
    %1051 = vdwg.mxu0
    %s1052 = sld [smem:[#allocation2]]
    %v1053 = vmax.f32 %v1014, 1e-10
    %v1054 = vmax.f32 %v1019, 1e-10
    %v1055 = vmax.f32 %v1024, 1e-10
    %v1056 = vmax.f32 %v1029, 1e-10
    %v1057 = vmax.f32 %v1034, 1e-10
    %v1058 = vmax.f32 %v1039, 1e-10
    %v1059 = vmax.f32 %v1044, 1e-10
    %v1060 = vmax.f32 %v1049, 1e-10
    %v1061 = vlog2.pop %v1053
    %v1062 = vmul.f32 %v1061, 0.6931472
    %v1063 = vlog2.pop %v1054
    %v1064 = vmul.f32 %v1063, 0.6931472
    %v1065 = vlog2.pop %v1055
    %v1066 = vmul.f32 %v1065, 0.6931472
    %v1067 = vlog2.pop %v1056
    %v1068 = vmul.f32 %v1067, 0.6931472
    %v1069 = vlog2.pop %v1057
    %v1070 = vmul.f32 %v1069, 0.6931472
    %v1071 = vlog2.pop %v1058
    %v1072 = vmul.f32 %v1071, 0.6931472
    %v1073 = vlog2.pop %v1059
    %v1074 = vmul.f32 %v1073, 0.6931472
    %v1075 = vlog2.pop %v1060
    %v1076 = vmul.f32 %v1075, 0.6931472
    %v1077 = vstv %s1052
    %v1078 = vmul.f32 %v1077, %v1062
    %v1079 = vmul.f32 %v1077, %v1064
    %v1080 = vmul.f32 %v1077, %v1066
    %v1081 = vmul.f32 %v1077, %v1068
    %v1082 = vmul.f32 %v1077, %v1070
    %v1083 = vmul.f32 %v1077, %v1072
    %v1084 = vmul.f32 %v1077, %v1074
    %v1085 = vmul.f32 %v1077, %v1076
    %v1086 = vadd.f32 %v1078, 0.0
    %v1087 = vadd.f32 %v1079, 0.0
    %v1088 = vadd.f32 %v1080, 0.0
    %v1089 = vadd.f32 %v1081, 0.0
    %v1090 = vadd.f32 %v1082, 0.0
    %v1091 = vadd.f32 %v1083, 0.0
    %v1092 = vadd.f32 %v1084, 0.0
    %v1093 = vadd.f32 %v1085, 0.0
    %v1094 = vsub.f32 %v869, 0.1
    %v1095 = vsub.f32 %v874, 0.1
    %v1096 = vsub.f32 %v879, 0.1
    %v1097 = vsub.f32 %v884, 0.1
    %v1098 = vsub.f32 %v889, 0.1
    %v1099 = vsub.f32 %v894, 0.1
    %v1100 = vsub.f32 %v899, 0.1
    %v1101 = vsub.f32 %v904, 0.1
    %v1102 = vmul.f32 %v1094, -50.0
    %v1103 = vmul.f32 %v1095, -50.0
    %v1104 = vmul.f32 %v1096, -50.0
    %v1105 = vmul.f32 %v1097, -50.0
    %v1106 = vmul.f32 %v1098, -50.0
    %v1107 = vmul.f32 %v1099, -50.0
    %v1108 = vmul.f32 %v1100, -50.0
    %v1109 = vmul.f32 %v1101, -50.0
    %v1110 = vmul.f32 %v1102, %v1094
    %v1111 = vmul.f32 %v1103, %v1095
    %v1112 = vmul.f32 %v1104, %v1096
    %v1113 = vmul.f32 %v1105, %v1097
    %v1114 = vmul.f32 %v1106, %v1098
    %v1115 = vmul.f32 %v1107, %v1099
    %v1116 = vmul.f32 %v1108, %v1100
    %v1117 = vmul.f32 %v1109, %v1101
    %v1118 = vmul.f32 %v1110, 1.442695
    %v1119 = vpow.pop %v1118
    %v1120 = vmul.f32 %v1111, 1.442695
    %v1121 = vpow.pop %v1120
    %v1122 = vmul.f32 %v1112, 1.442695
    %v1123 = vpow.pop %v1122
    %v1124 = vmul.f32 %v1113, 1.442695
    %v1125 = vpow.pop %v1124
    %v1126 = vmul.f32 %v1114, 1.442695
    %v1127 = vpow.pop %v1126
    %v1128 = vmul.f32 %v1115, 1.442695
    %v1129 = vpow.pop %v1128
    %v1130 = vmul.f32 %v1116, 1.442695
    %v1131 = vpow.pop %v1130
    %v1132 = vmul.f32 %v1117, 1.442695
    %v1133 = vpow.pop %v1132
    %1134 = vmatprep.subr.mxu0 0.0
    %1135 = vmatpush1.msra.mxu0 %v48
    %1136 = vmatprep.subr.mxu0 0.0
    %1137 = vmatpush1.msra.mxu0 %v49
    %1138 = vmatprep.subr.mxu0 0.0
    %1139 = vmatpush1.msra.mxu0 %v50
    %1140 = vmatprep.subr.mxu0 0.0
    %1141 = vmatpush1.msra.mxu0 %v51
    %1142 = vmatprep.subr.mxu0 0.0
    %1143 = vmatpush1.msra.mxu0 %v52
    %1144 = vmatprep.subr.mxu0 0.0
    %1145 = vmatpush1.msra.mxu0 %v53
    %1146 = vmatprep.subr.mxu0 0.0
    %1147 = vmatpush1.msra.mxu0 %v54
    %1148 = vmatprep.subr.mxu0 0.0
    %1149 = vmatpush1.msra.mxu0 %v55
    %1150 = vmatprep.subr.mxu0 0.0
    %1151 = vmatpush1.msra.mxu0 %v56
    %1152 = vmatprep.subr.mxu0 0.0
    %1153 = vmatpush1.msra.mxu0 %v57
    %1154 = vmatprep.subr.mxu0 0.0
    %1155 = vmatpush1.msra.mxu0 %v58
    %1156 = vmatprep.subr.mxu0 0.0
    %1157 = vmatpush1.msra.mxu0 %v59
    %1158 = vmatprep.subr.mxu0 0.0
    %1159 = vmatpush1.msra.mxu0 %v60
    %1160 = vmatprep.subr.mxu0 0.0
    %1161 = vmatpush1.msra.mxu0 %v61
    %1162 = vmatprep.subr.mxu0 0.0
    %1163 = vmatpush1.msra.mxu0 %v62
    %1164 = vmatprep.subr.mxu0 0.0
    %1165 = vmatpush1.msra.mxu0 %v63
    %1166 = vmatprep.subr.mxu0 0.0
    %1167 = vmatpush1.msra.mxu0 0.0
    %1168 = vmatprep.subr.mxu0 0.0
    %1169 = vmatpush1.msra.mxu0 0.0
    %1170 = vmatprep.subr.mxu0 0.0
    %1171 = vmatpush1.msra.mxu0 0.0
    %1172 = vmatprep.subr.mxu0 0.0
    %1173 = vmatpush1.msra.mxu0 0.0
    %1174 = vmatprep.subr.mxu0 0.0
    %1175 = vmatpush1.msra.mxu0 0.0
    %1176 = vmatprep.subr.mxu0 0.0
    %1177 = vmatpush1.msra.mxu0 0.0
    %1178 = vmatprep.subr.mxu0 0.0
    %1179 = vmatpush1.msra.mxu0 0.0
    %1180 = vmatprep.subr.mxu0 0.0
    %1181 = vmatpush1.msra.mxu0 0.0
    %1182 = vmatprep.subr.mxu0 0.0
    %1183 = vmatpush1.msra.mxu0 0.0
    %1184 = vmatprep.subr.mxu0 0.0
    %1185 = vmatpush1.msra.mxu0 0.0
    %1186 = vmatprep.subr.mxu0 0.0
    %1187 = vmatpush1.msra.mxu0 0.0
    %1188 = vmatprep.subr.mxu0 0.0
    %1189 = vmatpush1.msra.mxu0 0.0
    %1190 = vmatprep.subr.mxu0 0.0
    %1191 = vmatpush1.msra.mxu0 0.0
    %1192 = vmatprep.subr.mxu0 0.0
    %1193 = vmatpush1.msra.mxu0 0.0
    %1194 = vmatprep.subr.mxu0 0.0
    %1195 = vmatpush1.msra.mxu0 0.0
    %1196 = vmatprep.subr.mxu0 0.0
    %1197 = vmatpush1.msra.mxu0 0.0
    %1198 = vmatprep.mubr.f32.mxu0 0.0
    %1199 = vmatmul.mubr.f32.gmra.mrb[0].mxu0 %v1119
    %v1200 = vpop.f32.mrb[0].mxu0
    %v1201 = vadd.f32 0.0, %v1200
    %v1202 = vpop.f32.mrb[0].mxu0
    %1203 = vmatprep.mubr.f32.mxu0 0.0
    %1204 = vmatmul.mubr.f32.gmra.mrb[0].mxu0 %v1121
    %v1205 = vpop.f32.mrb[0].mxu0
    %v1206 = vadd.f32 0.0, %v1205
    %v1207 = vpop.f32.mrb[0].mxu0
    %1208 = vmatprep.mubr.f32.mxu0 0.0
    %1209 = vmatmul.mubr.f32.gmra.mrb[0].mxu0 %v1123
    %v1210 = vpop.f32.mrb[0].mxu0
    %v1211 = vadd.f32 0.0, %v1210
    %v1212 = vpop.f32.mrb[0].mxu0
    %1213 = vmatprep.mubr.f32.mxu0 0.0
    %1214 = vmatmul.mubr.f32.gmra.mrb[0].mxu0 %v1125
    %v1215 = vpop.f32.mrb[0].mxu0
    %v1216 = vadd.f32 0.0, %v1215
    %v1217 = vpop.f32.mrb[0].mxu0
    %1218 = vmatprep.mubr.f32.mxu0 0.0
    %1219 = vmatmul.mubr.f32.gmra.mrb[0].mxu0 %v1127
    %v1220 = vpop.f32.mrb[0].mxu0
    %v1221 = vadd.f32 0.0, %v1220
    %v1222 = vpop.f32.mrb[0].mxu0
    %1223 = vmatprep.mubr.f32.mxu0 0.0
    %1224 = vmatmul.mubr.f32.gmra.mrb[0].mxu0 %v1129
    %v1225 = vpop.f32.mrb[0].mxu0
    %v1226 = vadd.f32 0.0, %v1225
    %v1227 = vpop.f32.mrb[0].mxu0
    %1228 = vmatprep.mubr.f32.mxu0 0.0
    %1229 = vmatmul.mubr.f32.gmra.mrb[0].mxu0 %v1131
    %v1230 = vpop.f32.mrb[0].mxu0
    %v1231 = vadd.f32 0.0, %v1230
    %v1232 = vpop.f32.mrb[0].mxu0
    %1233 = vmatprep.mubr.f32.mxu0 0.0
    %1234 = vmatmul.mubr.f32.gmra.mrb[0].mxu0 %v1133
    %v1235 = vpop.f32.mrb[0].mxu0
    %v1236 = vadd.f32 0.0, %v1235
    %v1237 = vpop.f32.mrb[0].mxu0
    %1238 = vdwg.mxu0
    %s1239 = sld [smem:[#allocation2 + $0x5]]
    %v1240 = vmax.f32 %v1201, 1e-10
    %v1241 = vmax.f32 %v1206, 1e-10
    %v1242 = vmax.f32 %v1211, 1e-10
    %v1243 = vmax.f32 %v1216, 1e-10
    %v1244 = vmax.f32 %v1221, 1e-10
    %v1245 = vmax.f32 %v1226, 1e-10
    %v1246 = vmax.f32 %v1231, 1e-10
    %v1247 = vmax.f32 %v1236, 1e-10
    %v1248 = vlog2.pop %v1240
    %v1249 = vmul.f32 %v1248, 0.6931472
    %v1250 = vlog2.pop %v1241
    %v1251 = vmul.f32 %v1250, 0.6931472
    %v1252 = vlog2.pop %v1242
    %v1253 = vmul.f32 %v1252, 0.6931472
    %v1254 = vlog2.pop %v1243
    %v1255 = vmul.f32 %v1254, 0.6931472
    %v1256 = vlog2.pop %v1244
    %v1257 = vmul.f32 %v1256, 0.6931472
    %v1258 = vlog2.pop %v1245
    %v1259 = vmul.f32 %v1258, 0.6931472
    %v1260 = vlog2.pop %v1246
    %v1261 = vmul.f32 %v1260, 0.6931472
    %v1262 = vlog2.pop %v1247
    %v1263 = vmul.f32 %v1262, 0.6931472
    %v1264 = vstv %s1239
    %v1265 = vmul.f32 %v1264, %v1249
    %v1266 = vmul.f32 %v1264, %v1251
    %v1267 = vmul.f32 %v1264, %v1253
    %v1268 = vmul.f32 %v1264, %v1255
    %v1269 = vmul.f32 %v1264, %v1257
    %v1270 = vmul.f32 %v1264, %v1259
    %v1271 = vmul.f32 %v1264, %v1261
    %v1272 = vmul.f32 %v1264, %v1263
    %v1273 = vadd.f32 %v1086, %v1265
    %v1274 = vadd.f32 %v1087, %v1266
    %v1275 = vadd.f32 %v1088, %v1267
    %v1276 = vadd.f32 %v1089, %v1268
    %v1277 = vadd.f32 %v1090, %v1269
    %v1278 = vadd.f32 %v1091, %v1270
    %v1279 = vadd.f32 %v1092, %v1271
    %v1280 = vadd.f32 %v1093, %v1272
    %v1281 = vmul.f32 %v869, -20.0
    %v1282 = vmul.f32 %v874, -20.0
    %v1283 = vmul.f32 %v879, -20.0
    %v1284 = vmul.f32 %v884, -20.0
    %v1285 = vmul.f32 %v889, -20.0
    %v1286 = vmul.f32 %v894, -20.0
    %v1287 = vmul.f32 %v899, -20.0
    %v1288 = vmul.f32 %v904, -20.0
    %v1289 = vmul.f32 %v1281, 1.442695
    %v1290 = vpow.pop %v1289
    %v1291 = vmul.f32 %v1282, 1.442695
    %v1292 = vpow.pop %v1291
    %v1293 = vmul.f32 %v1283, 1.442695
    %v1294 = vpow.pop %v1293
    %v1295 = vmul.f32 %v1284, 1.442695
    %v1296 = vpow.pop %v1295
    %v1297 = vmul.f32 %v1285, 1.442695
    %v1298 = vpow.pop %v1297
    %v1299 = vmul.f32 %v1286, 1.442695
    %v1300 = vpow.pop %v1299
    %v1301 = vmul.f32 %v1287, 1.442695
    %v1302 = vpow.pop %v1301
    %v1303 = vmul.f32 %v1288, 1.442695
    %v1304 = vpow.pop %v1303
    %v1305 = vmul.f32 %v1119, %v1290
    %v1306 = vmul.f32 %v1121, %v1292
    %v1307 = vmul.f32 %v1123, %v1294
    %v1308 = vmul.f32 %v1125, %v1296
    %v1309 = vmul.f32 %v1127, %v1298
    %v1310 = vmul.f32 %v1129, %v1300
    %v1311 = vmul.f32 %v1131, %v1302
    %v1312 = vmul.f32 %v1133, %v1304
    %1313 = vmatprep.subr.mxu0 0.0
    %1314 = vmatpush1.msra.mxu0 %v48
    %1315 = vmatprep.subr.mxu0 0.0
    %1316 = vmatpush1.msra.mxu0 %v49
    %1317 = vmatprep.subr.mxu0 0.0
    %1318 = vmatpush1.msra.mxu0 %v50
    %1319 = vmatprep.subr.mxu0 0.0
    %1320 = vmatpush1.msra.mxu0 %v51
    %1321 = vmatprep.subr.mxu0 0.0
    %1322 = vmatpush1.msra.mxu0 %v52
    %1323 = vmatprep.subr.mxu0 0.0
    %1324 = vmatpush1.msra.mxu0 %v53
    %1325 = vmatprep.subr.mxu0 0.0
    %1326 = vmatpush1.msra.mxu0 %v54
    %1327 = vmatprep.subr.mxu0 0.0
    %1328 = vmatpush1.msra.mxu0 %v55
    %1329 = vmatprep.subr.mxu0 0.0
    %1330 = vmatpush1.msra.mxu0 %v56
    %1331 = vmatprep.subr.mxu0 0.0
    %1332 = vmatpush1.msra.mxu0 %v57
    %1333 = vmatprep.subr.mxu0 0.0
    %1334 = vmatpush1.msra.mxu0 %v58
    %1335 = vmatprep.subr.mxu0 0.0
    %1336 = vmatpush1.msra.mxu0 %v59
    %1337 = vmatprep.subr.mxu0 0.0
    %1338 = vmatpush1.msra.mxu0 %v60
    %1339 = vmatprep.subr.mxu0 0.0
    %1340 = vmatpush1.msra.mxu0 %v61
    %1341 = vmatprep.subr.mxu0 0.0
    %1342 = vmatpush1.msra.mxu0 %v62
    %1343 = vmatprep.subr.mxu0 0.0
    %1344 = vmatpush1.msra.mxu0 %v63
    %1345 = vmatprep.subr.mxu0 0.0
    %1346 = vmatpush1.msra.mxu0 0.0
    %1347 = vmatprep.subr.mxu0 0.0
    %1348 = vmatpush1.msra.mxu0 0.0
    %1349 = vmatprep.subr.mxu0 0.0
    %1350 = vmatpush1.msra.mxu0 0.0
    %1351 = vmatprep.subr.mxu0 0.0
    %1352 = vmatpush1.msra.mxu0 0.0
    %1353 = vmatprep.subr.mxu0 0.0
    %1354 = vmatpush1.msra.mxu0 0.0
    %1355 = vmatprep.subr.mxu0 0.0
    %1356 = vmatpush1.msra.mxu0 0.0
    %1357 = vmatprep.subr.mxu0 0.0
    %1358 = vmatpush1.msra.mxu0 0.0
    %1359 = vmatprep.subr.mxu0 0.0
    %1360 = vmatpush1.msra.mxu0 0.0
    %1361 = vmatprep.subr.mxu0 0.0
    %1362 = vmatpush1.msra.mxu0 0.0
    %1363 = vmatprep.subr.mxu0 0.0
    %1364 = vmatpush1.msra.mxu0 0.0
    %1365 = vmatprep.subr.mxu0 0.0
    %1366 = vmatpush1.msra.mxu0 0.0
    %1367 = vmatprep.subr.mxu0 0.0
    %1368 = vmatpush1.msra.mxu0 0.0
    %1369 = vmatprep.subr.mxu0 0.0
    %1370 = vmatpush1.msra.mxu0 0.0
    %1371 = vmatprep.subr.mxu0 0.0
    %1372 = vmatpush1.msra.mxu0 0.0
    %1373 = vmatprep.subr.mxu0 0.0
    %1374 = vmatpush1.msra.mxu0 0.0
    %1375 = vmatprep.subr.mxu0 0.0
    %1376 = vmatpush1.msra.mxu0 0.0
    %1377 = vmatprep.mubr.f32.mxu0 0.0
    %1378 = vmatmul.mubr.f32.gmra.mrb[0].mxu0 %v1305
    %v1379 = vpop.f32.mrb[0].mxu0
    %v1380 = vadd.f32 0.0, %v1379
    %v1381 = vpop.f32.mrb[0].mxu0
    %1382 = vmatprep.mubr.f32.mxu0 0.0
    %1383 = vmatmul.mubr.f32.gmra.mrb[0].mxu0 %v1306
    %v1384 = vpop.f32.mrb[0].mxu0
    %v1385 = vadd.f32 0.0, %v1384
    %v1386 = vpop.f32.mrb[0].mxu0
    %1387 = vmatprep.mubr.f32.mxu0 0.0
    %1388 = vmatmul.mubr.f32.gmra.mrb[0].mxu0 %v1307
    %v1389 = vpop.f32.mrb[0].mxu0
    %v1390 = vadd.f32 0.0, %v1389
    %v1391 = vpop.f32.mrb[0].mxu0
    %1392 = vmatprep.mubr.f32.mxu0 0.0
    %1393 = vmatmul.mubr.f32.gmra.mrb[0].mxu0 %v1308
    %v1394 = vpop.f32.mrb[0].mxu0
    %v1395 = vadd.f32 0.0, %v1394
    %v1396 = vpop.f32.mrb[0].mxu0
    %1397 = vmatprep.mubr.f32.mxu0 0.0
    %1398 = vmatmul.mubr.f32.gmra.mrb[0].mxu0 %v1309
    %v1399 = vpop.f32.mrb[0].mxu0
    %v1400 = vadd.f32 0.0, %v1399
    %v1401 = vpop.f32.mrb[0].mxu0
    %1402 = vmatprep.mubr.f32.mxu0 0.0
    %1403 = vmatmul.mubr.f32.gmra.mrb[0].mxu0 %v1310
    %v1404 = vpop.f32.mrb[0].mxu0
    %v1405 = vadd.f32 0.0, %v1404
    %v1406 = vpop.f32.mrb[0].mxu0
    %1407 = vmatprep.mubr.f32.mxu0 0.0
    %1408 = vmatmul.mubr.f32.gmra.mrb[0].mxu0 %v1311
    %v1409 = vpop.f32.mrb[0].mxu0
    %v1410 = vadd.f32 0.0, %v1409
    %v1411 = vpop.f32.mrb[0].mxu0
    %1412 = vmatprep.mubr.f32.mxu0 0.0
    %1413 = vmatmul.mubr.f32.gmra.mrb[0].mxu0 %v1312
    %v1414 = vpop.f32.mrb[0].mxu0
    %v1415 = vadd.f32 0.0, %v1414
    %v1416 = vpop.f32.mrb[0].mxu0
    %1417 = vdwg.mxu0
    %s1418 = sld [smem:[#allocation2 + $0x6]]
    %v1419 = vmax.f32 %v1380, 1e-10
    %v1420 = vmax.f32 %v1385, 1e-10
    %v1421 = vmax.f32 %v1390, 1e-10
    %v1422 = vmax.f32 %v1395, 1e-10
    %v1423 = vmax.f32 %v1400, 1e-10
    %v1424 = vmax.f32 %v1405, 1e-10
    %v1425 = vmax.f32 %v1410, 1e-10
    %v1426 = vmax.f32 %v1415, 1e-10
    %v1427 = vlog2.pop %v1419
    %v1428 = vmul.f32 %v1427, 0.6931472
    %v1429 = vlog2.pop %v1420
    %v1430 = vmul.f32 %v1429, 0.6931472
    %v1431 = vlog2.pop %v1421
    %v1432 = vmul.f32 %v1431, 0.6931472
    %v1433 = vlog2.pop %v1422
    %v1434 = vmul.f32 %v1433, 0.6931472
    %v1435 = vlog2.pop %v1423
    %v1436 = vmul.f32 %v1435, 0.6931472
    %v1437 = vlog2.pop %v1424
    %v1438 = vmul.f32 %v1437, 0.6931472
    %v1439 = vlog2.pop %v1425
    %v1440 = vmul.f32 %v1439, 0.6931472
    %v1441 = vlog2.pop %v1426
    %v1442 = vmul.f32 %v1441, 0.6931472
    %v1443 = vstv %s1418
    %v1444 = vmul.f32 %v1443, %v1428
    %v1445 = vmul.f32 %v1443, %v1430
    %v1446 = vmul.f32 %v1443, %v1432
    %v1447 = vmul.f32 %v1443, %v1434
    %v1448 = vmul.f32 %v1443, %v1436
    %v1449 = vmul.f32 %v1443, %v1438
    %v1450 = vmul.f32 %v1443, %v1440
    %v1451 = vmul.f32 %v1443, %v1442
    %v1452 = vadd.f32 %v1273, %v1444
    %v1453 = vadd.f32 %v1274, %v1445
    %v1454 = vadd.f32 %v1275, %v1446
    %v1455 = vadd.f32 %v1276, %v1447
    %v1456 = vadd.f32 %v1277, %v1448
    %v1457 = vadd.f32 %v1278, %v1449
    %v1458 = vadd.f32 %v1279, %v1450
    %v1459 = vadd.f32 %v1280, %v1451
    %v1460 = vmul.f32 %v1305, %v1290
    %v1461 = vmul.f32 %v1306, %v1292
    %v1462 = vmul.f32 %v1307, %v1294
    %v1463 = vmul.f32 %v1308, %v1296
    %v1464 = vmul.f32 %v1309, %v1298
    %v1465 = vmul.f32 %v1310, %v1300
    %v1466 = vmul.f32 %v1311, %v1302
    %v1467 = vmul.f32 %v1312, %v1304
    %v1468 = vmul.f32 %v1460, 0.01831564
    %v1469 = vmul.f32 %v1461, 0.01831564
    %v1470 = vmul.f32 %v1462, 0.01831564
    %v1471 = vmul.f32 %v1463, 0.01831564
    %v1472 = vmul.f32 %v1464, 0.01831564
    %v1473 = vmul.f32 %v1465, 0.01831564
    %v1474 = vmul.f32 %v1466, 0.01831564
    %v1475 = vmul.f32 %v1467, 0.01831564
    %1476 = vmatprep.subr.mxu0 0.0
    %1477 = vmatpush1.msra.mxu0 %v48
    %1478 = vmatprep.subr.mxu0 0.0
    %1479 = vmatpush1.msra.mxu0 %v49
    %1480 = vmatprep.subr.mxu0 0.0
    %1481 = vmatpush1.msra.mxu0 %v50
    %1482 = vmatprep.subr.mxu0 0.0
    %1483 = vmatpush1.msra.mxu0 %v51
    %1484 = vmatprep.subr.mxu0 0.0
    %1485 = vmatpush1.msra.mxu0 %v52
    %1486 = vmatprep.subr.mxu0 0.0
    %1487 = vmatpush1.msra.mxu0 %v53
    %1488 = vmatprep.subr.mxu0 0.0
    %1489 = vmatpush1.msra.mxu0 %v54
    %1490 = vmatprep.subr.mxu0 0.0
    %1491 = vmatpush1.msra.mxu0 %v55
    %1492 = vmatprep.subr.mxu0 0.0
    %1493 = vmatpush1.msra.mxu0 %v56
    %1494 = vmatprep.subr.mxu0 0.0
    %1495 = vmatpush1.msra.mxu0 %v57
    %1496 = vmatprep.subr.mxu0 0.0
    %1497 = vmatpush1.msra.mxu0 %v58
    %1498 = vmatprep.subr.mxu0 0.0
    %1499 = vmatpush1.msra.mxu0 %v59
    %1500 = vmatprep.subr.mxu0 0.0
    %1501 = vmatpush1.msra.mxu0 %v60
    %1502 = vmatprep.subr.mxu0 0.0
    %1503 = vmatpush1.msra.mxu0 %v61
    %1504 = vmatprep.subr.mxu0 0.0
    %1505 = vmatpush1.msra.mxu0 %v62
    %1506 = vmatprep.subr.mxu0 0.0
    %1507 = vmatpush1.msra.mxu0 %v63
    %1508 = vmatprep.subr.mxu0 0.0
    %1509 = vmatpush1.msra.mxu0 0.0
    %1510 = vmatprep.subr.mxu0 0.0
    %1511 = vmatpush1.msra.mxu0 0.0
    %1512 = vmatprep.subr.mxu0 0.0
    %1513 = vmatpush1.msra.mxu0 0.0
    %1514 = vmatprep.subr.mxu0 0.0
    %1515 = vmatpush1.msra.mxu0 0.0
    %1516 = vmatprep.subr.mxu0 0.0
    %1517 = vmatpush1.msra.mxu0 0.0
    %1518 = vmatprep.subr.mxu0 0.0
    %1519 = vmatpush1.msra.mxu0 0.0
    %1520 = vmatprep.subr.mxu0 0.0
    %1521 = vmatpush1.msra.mxu0 0.0
    %1522 = vmatprep.subr.mxu0 0.0
    %1523 = vmatpush1.msra.mxu0 0.0
    %1524 = vmatprep.subr.mxu0 0.0
    %1525 = vmatpush1.msra.mxu0 0.0
    %1526 = vmatprep.subr.mxu0 0.0
    %1527 = vmatpush1.msra.mxu0 0.0
    %1528 = vmatprep.subr.mxu0 0.0
    %1529 = vmatpush1.msra.mxu0 0.0
    %1530 = vmatprep.subr.mxu0 0.0
    %1531 = vmatpush1.msra.mxu0 0.0
    %1532 = vmatprep.subr.mxu0 0.0
    %1533 = vmatpush1.msra.mxu0 0.0
    %1534 = vmatprep.subr.mxu0 0.0
    %1535 = vmatpush1.msra.mxu0 0.0
    %1536 = vmatprep.subr.mxu0 0.0
    %1537 = vmatpush1.msra.mxu0 0.0
    %1538 = vmatprep.subr.mxu0 0.0
    %1539 = vmatpush1.msra.mxu0 0.0
    %1540 = vmatprep.mubr.f32.mxu0 0.0
    %1541 = vmatmul.mubr.f32.gmra.mrb[0].mxu0 %v1468
    %v1542 = vpop.f32.mrb[0].mxu0
    %v1543 = vadd.f32 0.0, %v1542
    %v1544 = vpop.f32.mrb[0].mxu0
    %1545 = vmatprep.mubr.f32.mxu0 0.0
    %1546 = vmatmul.mubr.f32.gmra.mrb[0].mxu0 %v1469
    %v1547 = vpop.f32.mrb[0].mxu0
    %v1548 = vadd.f32 0.0, %v1547
    %v1549 = vpop.f32.mrb[0].mxu0
    %1550 = vmatprep.mubr.f32.mxu0 0.0
    %1551 = vmatmul.mubr.f32.gmra.mrb[0].mxu0 %v1470
    %v1552 = vpop.f32.mrb[0].mxu0
    %v1553 = vadd.f32 0.0, %v1552
    %v1554 = vpop.f32.mrb[0].mxu0
    %1555 = vmatprep.mubr.f32.mxu0 0.0
    %1556 = vmatmul.mubr.f32.gmra.mrb[0].mxu0 %v1471
    %v1557 = vpop.f32.mrb[0].mxu0
    %v1558 = vadd.f32 0.0, %v1557
    %v1559 = vpop.f32.mrb[0].mxu0
    %1560 = vmatprep.mubr.f32.mxu0 0.0
    %1561 = vmatmul.mubr.f32.gmra.mrb[0].mxu0 %v1472
    %v1562 = vpop.f32.mrb[0].mxu0
    %v1563 = vadd.f32 0.0, %v1562
    %v1564 = vpop.f32.mrb[0].mxu0
    %1565 = vmatprep.mubr.f32.mxu0 0.0
    %1566 = vmatmul.mubr.f32.gmra.mrb[0].mxu0 %v1473
    %v1567 = vpop.f32.mrb[0].mxu0
    %v1568 = vadd.f32 0.0, %v1567
    %v1569 = vpop.f32.mrb[0].mxu0
    %1570 = vmatprep.mubr.f32.mxu0 0.0
    %1571 = vmatmul.mubr.f32.gmra.mrb[0].mxu0 %v1474
    %v1572 = vpop.f32.mrb[0].mxu0
    %v1573 = vadd.f32 0.0, %v1572
    %v1574 = vpop.f32.mrb[0].mxu0
    %1575 = vmatprep.mubr.f32.mxu0 0.0
    %1576 = vmatmul.mubr.f32.gmra.mrb[0].mxu0 %v1475
    %v1577 = vpop.f32.mrb[0].mxu0
    %v1578 = vadd.f32 0.0, %v1577
    %v1579 = vpop.f32.mrb[0].mxu0
    %1580 = vdwg.mxu0
    %s1581 = sld [smem:[#allocation2 + $0x7]]
    %v1582 = vmax.f32 %v1543, 1e-10
    %v1583 = vmax.f32 %v1548, 1e-10
    %v1584 = vmax.f32 %v1553, 1e-10
    %v1585 = vmax.f32 %v1558, 1e-10
    %v1586 = vmax.f32 %v1563, 1e-10
    %v1587 = vmax.f32 %v1568, 1e-10
    %v1588 = vmax.f32 %v1573, 1e-10
    %v1589 = vmax.f32 %v1578, 1e-10
    %v1590 = vlog2.pop %v1582
    %v1591 = vmul.f32 %v1590, 0.6931472
    %v1592 = vlog2.pop %v1583
    %v1593 = vmul.f32 %v1592, 0.6931472
    %v1594 = vlog2.pop %v1584
    %v1595 = vmul.f32 %v1594, 0.6931472
    %v1596 = vlog2.pop %v1585
    %v1597 = vmul.f32 %v1596, 0.6931472
    %v1598 = vlog2.pop %v1586
    %v1599 = vmul.f32 %v1598, 0.6931472
    %v1600 = vlog2.pop %v1587
    %v1601 = vmul.f32 %v1600, 0.6931472
    %v1602 = vlog2.pop %v1588
    %v1603 = vmul.f32 %v1602, 0.6931472
    %v1604 = vlog2.pop %v1589
    %v1605 = vmul.f32 %v1604, 0.6931472
    %v1606 = vstv %s1581
    %v1607 = vmul.f32 %v1606, %v1591
    %v1608 = vmul.f32 %v1606, %v1593
    %v1609 = vmul.f32 %v1606, %v1595
    %v1610 = vmul.f32 %v1606, %v1597
    %v1611 = vmul.f32 %v1606, %v1599
    %v1612 = vmul.f32 %v1606, %v1601
    %v1613 = vmul.f32 %v1606, %v1603
    %v1614 = vmul.f32 %v1606, %v1605
    %v1615 = vadd.f32 %v1452, %v1607
    %v1616 = vadd.f32 %v1453, %v1608
    %v1617 = vadd.f32 %v1454, %v1609
    %v1618 = vadd.f32 %v1455, %v1610
    %v1619 = vadd.f32 %v1456, %v1611
    %v1620 = vadd.f32 %v1457, %v1612
    %v1621 = vadd.f32 %v1458, %v1613
    %v1622 = vadd.f32 %v1459, %v1614
    %v1623 = vmul.f32 %v1468, %v1290
    %v1624 = vmul.f32 %v1469, %v1292
    %v1625 = vmul.f32 %v1470, %v1294
    %v1626 = vmul.f32 %v1471, %v1296
    %v1627 = vmul.f32 %v1472, %v1298
    %v1628 = vmul.f32 %v1473, %v1300
    %v1629 = vmul.f32 %v1474, %v1302
    %v1630 = vmul.f32 %v1475, %v1304
    %v1631 = vmul.f32 %v1623, 0.00033546262
    %v1632 = vmul.f32 %v1624, 0.00033546262
    %v1633 = vmul.f32 %v1625, 0.00033546262
    %v1634 = vmul.f32 %v1626, 0.00033546262
    %v1635 = vmul.f32 %v1627, 0.00033546262
    %v1636 = vmul.f32 %v1628, 0.00033546262
    %v1637 = vmul.f32 %v1629, 0.00033546262
    %v1638 = vmul.f32 %v1630, 0.00033546262
    %1639 = vmatprep.subr.mxu0 0.0
    %1640 = vmatpush1.msra.mxu0 %v48
    %1641 = vmatprep.subr.mxu0 0.0
    %1642 = vmatpush1.msra.mxu0 %v49
    %1643 = vmatprep.subr.mxu0 0.0
    %1644 = vmatpush1.msra.mxu0 %v50
    %1645 = vmatprep.subr.mxu0 0.0
    %1646 = vmatpush1.msra.mxu0 %v51
    %1647 = vmatprep.subr.mxu0 0.0
    %1648 = vmatpush1.msra.mxu0 %v52
    %1649 = vmatprep.subr.mxu0 0.0
    %1650 = vmatpush1.msra.mxu0 %v53
    %1651 = vmatprep.subr.mxu0 0.0
    %1652 = vmatpush1.msra.mxu0 %v54
    %1653 = vmatprep.subr.mxu0 0.0
    %1654 = vmatpush1.msra.mxu0 %v55
    %1655 = vmatprep.subr.mxu0 0.0
    %1656 = vmatpush1.msra.mxu0 %v56
    %1657 = vmatprep.subr.mxu0 0.0
    %1658 = vmatpush1.msra.mxu0 %v57
    %1659 = vmatprep.subr.mxu0 0.0
    %1660 = vmatpush1.msra.mxu0 %v58
    %1661 = vmatprep.subr.mxu0 0.0
    %1662 = vmatpush1.msra.mxu0 %v59
    %1663 = vmatprep.subr.mxu0 0.0
    %1664 = vmatpush1.msra.mxu0 %v60
    %1665 = vmatprep.subr.mxu0 0.0
    %1666 = vmatpush1.msra.mxu0 %v61
    %1667 = vmatprep.subr.mxu0 0.0
    %1668 = vmatpush1.msra.mxu0 %v62
    %1669 = vmatprep.subr.mxu0 0.0
    %1670 = vmatpush1.msra.mxu0 %v63
    %1671 = vmatprep.subr.mxu0 0.0
    %1672 = vmatpush1.msra.mxu0 0.0
    %1673 = vmatprep.subr.mxu0 0.0
    %1674 = vmatpush1.msra.mxu0 0.0
    %1675 = vmatprep.subr.mxu0 0.0
    %1676 = vmatpush1.msra.mxu0 0.0
    %1677 = vmatprep.subr.mxu0 0.0
    %1678 = vmatpush1.msra.mxu0 0.0
    %1679 = vmatprep.subr.mxu0 0.0
    %1680 = vmatpush1.msra.mxu0 0.0
    %1681 = vmatprep.subr.mxu0 0.0
    %1682 = vmatpush1.msra.mxu0 0.0
    %1683 = vmatprep.subr.mxu0 0.0
    %1684 = vmatpush1.msra.mxu0 0.0
    %1685 = vmatprep.subr.mxu0 0.0
    %1686 = vmatpush1.msra.mxu0 0.0
    %1687 = vmatprep.subr.mxu0 0.0
    %1688 = vmatpush1.msra.mxu0 0.0
    %1689 = vmatprep.subr.mxu0 0.0
    %1690 = vmatpush1.msra.mxu0 0.0
    %1691 = vmatprep.subr.mxu0 0.0
    %1692 = vmatpush1.msra.mxu0 0.0
    %1693 = vmatprep.subr.mxu0 0.0
    %1694 = vmatpush1.msra.mxu0 0.0
    %1695 = vmatprep.subr.mxu0 0.0
    %1696 = vmatpush1.msra.mxu0 0.0
    %1697 = vmatprep.subr.mxu0 0.0
    %1698 = vmatpush1.msra.mxu0 0.0
    %1699 = vmatprep.subr.mxu0 0.0
    %1700 = vmatpush1.msra.mxu0 0.0
    %1701 = vmatprep.subr.mxu0 0.0
    %1702 = vmatpush1.msra.mxu0 0.0
    %1703 = vmatprep.mubr.f32.mxu0 0.0
    %1704 = vmatmul.mubr.f32.gmra.mrb[0].mxu0 %v1631
    %v1705 = vpop.f32.mrb[0].mxu0
    %v1706 = vadd.f32 0.0, %v1705
    %v1707 = vpop.f32.mrb[0].mxu0
    %1708 = vmatprep.mubr.f32.mxu0 0.0
    %1709 = vmatmul.mubr.f32.gmra.mrb[0].mxu0 %v1632
    %v1710 = vpop.f32.mrb[0].mxu0
    %v1711 = vadd.f32 0.0, %v1710
    %v1712 = vpop.f32.mrb[0].mxu0
    %1713 = vmatprep.mubr.f32.mxu0 0.0
    %1714 = vmatmul.mubr.f32.gmra.mrb[0].mxu0 %v1633
    %v1715 = vpop.f32.mrb[0].mxu0
    %v1716 = vadd.f32 0.0, %v1715
    %v1717 = vpop.f32.mrb[0].mxu0
    %1718 = vmatprep.mubr.f32.mxu0 0.0
    %1719 = vmatmul.mubr.f32.gmra.mrb[0].mxu0 %v1634
    %v1720 = vpop.f32.mrb[0].mxu0
    %v1721 = vadd.f32 0.0, %v1720
    %v1722 = vpop.f32.mrb[0].mxu0
    %1723 = vmatprep.mubr.f32.mxu0 0.0
    %1724 = vmatmul.mubr.f32.gmra.mrb[0].mxu0 %v1635
    %v1725 = vpop.f32.mrb[0].mxu0
    %v1726 = vadd.f32 0.0, %v1725
    %v1727 = vpop.f32.mrb[0].mxu0
    %1728 = vmatprep.mubr.f32.mxu0 0.0
    %1729 = vmatmul.mubr.f32.gmra.mrb[0].mxu0 %v1636
    %v1730 = vpop.f32.mrb[0].mxu0
    %v1731 = vadd.f32 0.0, %v1730
    %v1732 = vpop.f32.mrb[0].mxu0
    %1733 = vmatprep.mubr.f32.mxu0 0.0
    %1734 = vmatmul.mubr.f32.gmra.mrb[0].mxu0 %v1637
    %v1735 = vpop.f32.mrb[0].mxu0
    %v1736 = vadd.f32 0.0, %v1735
    %v1737 = vpop.f32.mrb[0].mxu0
    %1738 = vmatprep.mubr.f32.mxu0 0.0
    %1739 = vmatmul.mubr.f32.gmra.mrb[0].mxu0 %v1638
    %v1740 = vpop.f32.mrb[0].mxu0
    %v1741 = vadd.f32 0.0, %v1740
    %v1742 = vpop.f32.mrb[0].mxu0
    %1743 = vdwg.mxu0
    %s1744 = sld [smem:[#allocation2 + $0x8]]
    %v1745 = vmax.f32 %v1706, 1e-10
    %v1746 = vmax.f32 %v1711, 1e-10
    %v1747 = vmax.f32 %v1716, 1e-10
    %v1748 = vmax.f32 %v1721, 1e-10
    %v1749 = vmax.f32 %v1726, 1e-10
    %v1750 = vmax.f32 %v1731, 1e-10
    %v1751 = vmax.f32 %v1736, 1e-10
    %v1752 = vmax.f32 %v1741, 1e-10
    %v1753 = vlog2.pop %v1745
    %v1754 = vmul.f32 %v1753, 0.6931472
    %v1755 = vlog2.pop %v1746
    %v1756 = vmul.f32 %v1755, 0.6931472
    %v1757 = vlog2.pop %v1747
    %v1758 = vmul.f32 %v1757, 0.6931472
    %v1759 = vlog2.pop %v1748
    %v1760 = vmul.f32 %v1759, 0.6931472
    %v1761 = vlog2.pop %v1749
    %v1762 = vmul.f32 %v1761, 0.6931472
    %v1763 = vlog2.pop %v1750
    %v1764 = vmul.f32 %v1763, 0.6931472
    %v1765 = vlog2.pop %v1751
    %v1766 = vmul.f32 %v1765, 0.6931472
    %v1767 = vlog2.pop %v1752
    %v1768 = vmul.f32 %v1767, 0.6931472
    %v1769 = vstv %s1744
    %v1770 = vmul.f32 %v1769, %v1754
    %v1771 = vmul.f32 %v1769, %v1756
    %v1772 = vmul.f32 %v1769, %v1758
    %v1773 = vmul.f32 %v1769, %v1760
    %v1774 = vmul.f32 %v1769, %v1762
    %v1775 = vmul.f32 %v1769, %v1764
    %v1776 = vmul.f32 %v1769, %v1766
    %v1777 = vmul.f32 %v1769, %v1768
    %v1778 = vadd.f32 %v1615, %v1770
    %v1779 = vadd.f32 %v1616, %v1771
    %v1780 = vadd.f32 %v1617, %v1772
    %v1781 = vadd.f32 %v1618, %v1773
    %v1782 = vadd.f32 %v1619, %v1774
    %v1783 = vadd.f32 %v1620, %v1775
    %v1784 = vadd.f32 %v1621, %v1776
    %v1785 = vadd.f32 %v1622, %v1777
    %v1786 = vmul.f32 %v1631, %v1290
    %v1787 = vmul.f32 %v1632, %v1292
    %v1788 = vmul.f32 %v1633, %v1294
    %v1789 = vmul.f32 %v1634, %v1296
    %v1790 = vmul.f32 %v1635, %v1298
    %v1791 = vmul.f32 %v1636, %v1300
    %v1792 = vmul.f32 %v1637, %v1302
    %v1793 = vmul.f32 %v1638, %v1304
    %v1794 = vmul.f32 %v1786, 6.1442124e-06
    %v1795 = vmul.f32 %v1787, 6.1442124e-06
    %v1796 = vmul.f32 %v1788, 6.1442124e-06
    %v1797 = vmul.f32 %v1789, 6.1442124e-06
    %v1798 = vmul.f32 %v1790, 6.1442124e-06
    %v1799 = vmul.f32 %v1791, 6.1442124e-06
    %v1800 = vmul.f32 %v1792, 6.1442124e-06
    %v1801 = vmul.f32 %v1793, 6.1442124e-06
    %1802 = vmatprep.subr.mxu0 0.0
    %1803 = vmatpush1.msra.mxu0 %v48
    %1804 = vmatprep.subr.mxu0 0.0
    %1805 = vmatpush1.msra.mxu0 %v49
    %1806 = vmatprep.subr.mxu0 0.0
    %1807 = vmatpush1.msra.mxu0 %v50
    %1808 = vmatprep.subr.mxu0 0.0
    %1809 = vmatpush1.msra.mxu0 %v51
    %1810 = vmatprep.subr.mxu0 0.0
    %1811 = vmatpush1.msra.mxu0 %v52
    %1812 = vmatprep.subr.mxu0 0.0
    %1813 = vmatpush1.msra.mxu0 %v53
    %1814 = vmatprep.subr.mxu0 0.0
    %1815 = vmatpush1.msra.mxu0 %v54
    %1816 = vmatprep.subr.mxu0 0.0
    %1817 = vmatpush1.msra.mxu0 %v55
    %1818 = vmatprep.subr.mxu0 0.0
    %1819 = vmatpush1.msra.mxu0 %v56
    %1820 = vmatprep.subr.mxu0 0.0
    %1821 = vmatpush1.msra.mxu0 %v57
    %1822 = vmatprep.subr.mxu0 0.0
    %1823 = vmatpush1.msra.mxu0 %v58
    %1824 = vmatprep.subr.mxu0 0.0
    %1825 = vmatpush1.msra.mxu0 %v59
    %1826 = vmatprep.subr.mxu0 0.0
    %1827 = vmatpush1.msra.mxu0 %v60
    %1828 = vmatprep.subr.mxu0 0.0
    %1829 = vmatpush1.msra.mxu0 %v61
    %1830 = vmatprep.subr.mxu0 0.0
    %1831 = vmatpush1.msra.mxu0 %v62
    %1832 = vmatprep.subr.mxu0 0.0
    %1833 = vmatpush1.msra.mxu0 %v63
    %1834 = vmatprep.subr.mxu0 0.0
    %1835 = vmatpush1.msra.mxu0 0.0
    %1836 = vmatprep.subr.mxu0 0.0
    %1837 = vmatpush1.msra.mxu0 0.0
    %1838 = vmatprep.subr.mxu0 0.0
    %1839 = vmatpush1.msra.mxu0 0.0
    %1840 = vmatprep.subr.mxu0 0.0
    %1841 = vmatpush1.msra.mxu0 0.0
    %1842 = vmatprep.subr.mxu0 0.0
    %1843 = vmatpush1.msra.mxu0 0.0
    %1844 = vmatprep.subr.mxu0 0.0
    %1845 = vmatpush1.msra.mxu0 0.0
    %1846 = vmatprep.subr.mxu0 0.0
    %1847 = vmatpush1.msra.mxu0 0.0
    %1848 = vmatprep.subr.mxu0 0.0
    %1849 = vmatpush1.msra.mxu0 0.0
    %1850 = vmatprep.subr.mxu0 0.0
    %1851 = vmatpush1.msra.mxu0 0.0
    %1852 = vmatprep.subr.mxu0 0.0
    %1853 = vmatpush1.msra.mxu0 0.0
    %1854 = vmatprep.subr.mxu0 0.0
    %1855 = vmatpush1.msra.mxu0 0.0
    %1856 = vmatprep.subr.mxu0 0.0
    %1857 = vmatpush1.msra.mxu0 0.0
    %1858 = vmatprep.subr.mxu0 0.0
    %1859 = vmatpush1.msra.mxu0 0.0
    %1860 = vmatprep.subr.mxu0 0.0
    %1861 = vmatpush1.msra.mxu0 0.0
    %1862 = vmatprep.subr.mxu0 0.0
    %1863 = vmatpush1.msra.mxu0 0.0
    %1864 = vmatprep.subr.mxu0 0.0
    %1865 = vmatpush1.msra.mxu0 0.0
    %1866 = vmatprep.mubr.f32.mxu0 0.0
    %1867 = vmatmul.mubr.f32.gmra.mrb[0].mxu0 %v1794
    %v1868 = vpop.f32.mrb[0].mxu0
    %v1869 = vadd.f32 0.0, %v1868
    %v1870 = vpop.f32.mrb[0].mxu0
    %1871 = vmatprep.mubr.f32.mxu0 0.0
    %1872 = vmatmul.mubr.f32.gmra.mrb[0].mxu0 %v1795
    %v1873 = vpop.f32.mrb[0].mxu0
    %v1874 = vadd.f32 0.0, %v1873
    %v1875 = vpop.f32.mrb[0].mxu0
    %1876 = vmatprep.mubr.f32.mxu0 0.0
    %1877 = vmatmul.mubr.f32.gmra.mrb[0].mxu0 %v1796
    %v1878 = vpop.f32.mrb[0].mxu0
    %v1879 = vadd.f32 0.0, %v1878
    %v1880 = vpop.f32.mrb[0].mxu0
    %1881 = vmatprep.mubr.f32.mxu0 0.0
    %1882 = vmatmul.mubr.f32.gmra.mrb[0].mxu0 %v1797
    %v1883 = vpop.f32.mrb[0].mxu0
    %v1884 = vadd.f32 0.0, %v1883
    %v1885 = vpop.f32.mrb[0].mxu0
    %1886 = vmatprep.mubr.f32.mxu0 0.0
    %1887 = vmatmul.mubr.f32.gmra.mrb[0].mxu0 %v1798
    %v1888 = vpop.f32.mrb[0].mxu0
    %v1889 = vadd.f32 0.0, %v1888
    %v1890 = vpop.f32.mrb[0].mxu0
    %1891 = vmatprep.mubr.f32.mxu0 0.0
    %1892 = vmatmul.mubr.f32.gmra.mrb[0].mxu0 %v1799
    %v1893 = vpop.f32.mrb[0].mxu0
    %v1894 = vadd.f32 0.0, %v1893
    %v1895 = vpop.f32.mrb[0].mxu0
    %1896 = vmatprep.mubr.f32.mxu0 0.0
    %1897 = vmatmul.mubr.f32.gmra.mrb[0].mxu0 %v1800
    %v1898 = vpop.f32.mrb[0].mxu0
    %v1899 = vadd.f32 0.0, %v1898
    %v1900 = vpop.f32.mrb[0].mxu0
    %1901 = vmatprep.mubr.f32.mxu0 0.0
    %1902 = vmatmul.mubr.f32.gmra.mrb[0].mxu0 %v1801
    %v1903 = vpop.f32.mrb[0].mxu0
    %v1904 = vadd.f32 0.0, %v1903
    %v1905 = vpop.f32.mrb[0].mxu0
    %1906 = vdwg.mxu0
    %s1907 = sld [smem:[#allocation2 + $0x9]]
    %v1908 = vmax.f32 %v1869, 1e-10
    %v1909 = vmax.f32 %v1874, 1e-10
    %v1910 = vmax.f32 %v1879, 1e-10
    %v1911 = vmax.f32 %v1884, 1e-10
    %v1912 = vmax.f32 %v1889, 1e-10
    %v1913 = vmax.f32 %v1894, 1e-10
    %v1914 = vmax.f32 %v1899, 1e-10
    %v1915 = vmax.f32 %v1904, 1e-10
    %v1916 = vlog2.pop %v1908
    %v1917 = vmul.f32 %v1916, 0.6931472
    %v1918 = vlog2.pop %v1909
    %v1919 = vmul.f32 %v1918, 0.6931472
    %v1920 = vlog2.pop %v1910
    %v1921 = vmul.f32 %v1920, 0.6931472
    %v1922 = vlog2.pop %v1911
    %v1923 = vmul.f32 %v1922, 0.6931472
    %v1924 = vlog2.pop %v1912
    %v1925 = vmul.f32 %v1924, 0.6931472
    %v1926 = vlog2.pop %v1913
    %v1927 = vmul.f32 %v1926, 0.6931472
    %v1928 = vlog2.pop %v1914
    %v1929 = vmul.f32 %v1928, 0.6931472
    %v1930 = vlog2.pop %v1915
    %v1931 = vmul.f32 %v1930, 0.6931472
    %v1932 = vstv %s1907
    %v1933 = vmul.f32 %v1932, %v1917
    %v1934 = vmul.f32 %v1932, %v1919
    %v1935 = vmul.f32 %v1932, %v1921
    %v1936 = vmul.f32 %v1932, %v1923
    %v1937 = vmul.f32 %v1932, %v1925
    %v1938 = vmul.f32 %v1932, %v1927
    %v1939 = vmul.f32 %v1932, %v1929
    %v1940 = vmul.f32 %v1932, %v1931
    %v1941 = vadd.f32 %v1778, %v1933
    %v1942 = vadd.f32 %v1779, %v1934
    %v1943 = vadd.f32 %v1780, %v1935
    %v1944 = vadd.f32 %v1781, %v1936
    %v1945 = vadd.f32 %v1782, %v1937
    %v1946 = vadd.f32 %v1783, %v1938
    %v1947 = vadd.f32 %v1784, %v1939
    %v1948 = vadd.f32 %v1785, %v1940
    %v1949 = vmul.f32 %v1794, %v1290
    %v1950 = vmul.f32 %v1795, %v1292
    %v1951 = vmul.f32 %v1796, %v1294
    %v1952 = vmul.f32 %v1797, %v1296
    %v1953 = vmul.f32 %v1798, %v1298
    %v1954 = vmul.f32 %v1799, %v1300
    %v1955 = vmul.f32 %v1800, %v1302
    %v1956 = vmul.f32 %v1801, %v1304
    %v1957 = vmul.f32 %v1949, 1.12535176e-07
    %v1958 = vmul.f32 %v1950, 1.12535176e-07
    %v1959 = vmul.f32 %v1951, 1.12535176e-07
    %v1960 = vmul.f32 %v1952, 1.12535176e-07
    %v1961 = vmul.f32 %v1953, 1.12535176e-07
    %v1962 = vmul.f32 %v1954, 1.12535176e-07
    %v1963 = vmul.f32 %v1955, 1.12535176e-07
    %v1964 = vmul.f32 %v1956, 1.12535176e-07
    %1965 = vmatprep.subr.mxu0 0.0
    %1966 = vmatpush1.msra.mxu0 %v48
    %1967 = vmatprep.subr.mxu0 0.0
    %1968 = vmatpush1.msra.mxu0 %v49
    %1969 = vmatprep.subr.mxu0 0.0
    %1970 = vmatpush1.msra.mxu0 %v50
    %1971 = vmatprep.subr.mxu0 0.0
    %1972 = vmatpush1.msra.mxu0 %v51
    %1973 = vmatprep.subr.mxu0 0.0
    %1974 = vmatpush1.msra.mxu0 %v52
    %1975 = vmatprep.subr.mxu0 0.0
    %1976 = vmatpush1.msra.mxu0 %v53
    %1977 = vmatprep.subr.mxu0 0.0
    %1978 = vmatpush1.msra.mxu0 %v54
    %1979 = vmatprep.subr.mxu0 0.0
    %1980 = vmatpush1.msra.mxu0 %v55
    %1981 = vmatprep.subr.mxu0 0.0
    %1982 = vmatpush1.msra.mxu0 %v56
    %1983 = vmatprep.subr.mxu0 0.0
    %1984 = vmatpush1.msra.mxu0 %v57
    %1985 = vmatprep.subr.mxu0 0.0
    %1986 = vmatpush1.msra.mxu0 %v58
    %1987 = vmatprep.subr.mxu0 0.0
    %1988 = vmatpush1.msra.mxu0 %v59
    %1989 = vmatprep.subr.mxu0 0.0
    %1990 = vmatpush1.msra.mxu0 %v60
    %1991 = vmatprep.subr.mxu0 0.0
    %1992 = vmatpush1.msra.mxu0 %v61
    %1993 = vmatprep.subr.mxu0 0.0
    %1994 = vmatpush1.msra.mxu0 %v62
    %1995 = vmatprep.subr.mxu0 0.0
    %1996 = vmatpush1.msra.mxu0 %v63
    %1997 = vmatprep.subr.mxu0 0.0
    %1998 = vmatpush1.msra.mxu0 0.0
    %1999 = vmatprep.subr.mxu0 0.0
    %2000 = vmatpush1.msra.mxu0 0.0
    %2001 = vmatprep.subr.mxu0 0.0
    %2002 = vmatpush1.msra.mxu0 0.0
    %2003 = vmatprep.subr.mxu0 0.0
    %2004 = vmatpush1.msra.mxu0 0.0
    %2005 = vmatprep.subr.mxu0 0.0
    %2006 = vmatpush1.msra.mxu0 0.0
    %2007 = vmatprep.subr.mxu0 0.0
    %2008 = vmatpush1.msra.mxu0 0.0
    %2009 = vmatprep.subr.mxu0 0.0
    %2010 = vmatpush1.msra.mxu0 0.0
    %2011 = vmatprep.subr.mxu0 0.0
    %2012 = vmatpush1.msra.mxu0 0.0
    %2013 = vmatprep.subr.mxu0 0.0
    %2014 = vmatpush1.msra.mxu0 0.0
    %2015 = vmatprep.subr.mxu0 0.0
    %2016 = vmatpush1.msra.mxu0 0.0
    %2017 = vmatprep.subr.mxu0 0.0
    %2018 = vmatpush1.msra.mxu0 0.0
    %2019 = vmatprep.subr.mxu0 0.0
    %2020 = vmatpush1.msra.mxu0 0.0
    %2021 = vmatprep.subr.mxu0 0.0
    %2022 = vmatpush1.msra.mxu0 0.0
    %2023 = vmatprep.subr.mxu0 0.0
    %2024 = vmatpush1.msra.mxu0 0.0
    %2025 = vmatprep.subr.mxu0 0.0
    %2026 = vmatpush1.msra.mxu0 0.0
    %2027 = vmatprep.subr.mxu0 0.0
    %2028 = vmatpush1.msra.mxu0 0.0
    %2029 = vmatprep.mubr.f32.mxu0 0.0
    %2030 = vmatmul.mubr.f32.gmra.mrb[0].mxu0 %v1957
    %v2031 = vpop.f32.mrb[0].mxu0
    %v2032 = vadd.f32 0.0, %v2031
    %v2033 = vpop.f32.mrb[0].mxu0
    %2034 = vmatprep.mubr.f32.mxu0 0.0
    %2035 = vmatmul.mubr.f32.gmra.mrb[0].mxu0 %v1958
    %v2036 = vpop.f32.mrb[0].mxu0
    %v2037 = vadd.f32 0.0, %v2036
    %v2038 = vpop.f32.mrb[0].mxu0
    %2039 = vmatprep.mubr.f32.mxu0 0.0
    %2040 = vmatmul.mubr.f32.gmra.mrb[0].mxu0 %v1959
    %v2041 = vpop.f32.mrb[0].mxu0
    %v2042 = vadd.f32 0.0, %v2041
    %v2043 = vpop.f32.mrb[0].mxu0
    %2044 = vmatprep.mubr.f32.mxu0 0.0
    %2045 = vmatmul.mubr.f32.gmra.mrb[0].mxu0 %v1960
    %v2046 = vpop.f32.mrb[0].mxu0
    %v2047 = vadd.f32 0.0, %v2046
    %v2048 = vpop.f32.mrb[0].mxu0
    %2049 = vmatprep.mubr.f32.mxu0 0.0
    %2050 = vmatmul.mubr.f32.gmra.mrb[0].mxu0 %v1961
    %v2051 = vpop.f32.mrb[0].mxu0
    %v2052 = vadd.f32 0.0, %v2051
    %v2053 = vpop.f32.mrb[0].mxu0
    %2054 = vmatprep.mubr.f32.mxu0 0.0
    %2055 = vmatmul.mubr.f32.gmra.mrb[0].mxu0 %v1962
    %v2056 = vpop.f32.mrb[0].mxu0
    %v2057 = vadd.f32 0.0, %v2056
    %v2058 = vpop.f32.mrb[0].mxu0
    %2059 = vmatprep.mubr.f32.mxu0 0.0
    %2060 = vmatmul.mubr.f32.gmra.mrb[0].mxu0 %v1963
    %v2061 = vpop.f32.mrb[0].mxu0
    %v2062 = vadd.f32 0.0, %v2061
    %v2063 = vpop.f32.mrb[0].mxu0
    %2064 = vmatprep.mubr.f32.mxu0 0.0
    %2065 = vmatmul.mubr.f32.gmra.mrb[0].mxu0 %v1964
    %v2066 = vpop.f32.mrb[0].mxu0
    %v2067 = vadd.f32 0.0, %v2066
    %v2068 = vpop.f32.mrb[0].mxu0
    %2069 = vdwg.mxu0
    %s2070 = sld [smem:[#allocation2 + $0xa]]
    %v2071 = vmax.f32 %v2032, 1e-10
    %v2072 = vmax.f32 %v2037, 1e-10
    %v2073 = vmax.f32 %v2042, 1e-10
    %v2074 = vmax.f32 %v2047, 1e-10
    %v2075 = vmax.f32 %v2052, 1e-10
    %v2076 = vmax.f32 %v2057, 1e-10
    %v2077 = vmax.f32 %v2062, 1e-10
    %v2078 = vmax.f32 %v2067, 1e-10
    %v2079 = vlog2.pop %v2071
    %v2080 = vmul.f32 %v2079, 0.6931472
    %v2081 = vlog2.pop %v2072
    %v2082 = vmul.f32 %v2081, 0.6931472
    %v2083 = vlog2.pop %v2073
    %v2084 = vmul.f32 %v2083, 0.6931472
    %v2085 = vlog2.pop %v2074
    %v2086 = vmul.f32 %v2085, 0.6931472
    %v2087 = vlog2.pop %v2075
    %v2088 = vmul.f32 %v2087, 0.6931472
    %v2089 = vlog2.pop %v2076
    %v2090 = vmul.f32 %v2089, 0.6931472
    %v2091 = vlog2.pop %v2077
    %v2092 = vmul.f32 %v2091, 0.6931472
    %v2093 = vlog2.pop %v2078
    %v2094 = vmul.f32 %v2093, 0.6931472
    %v2095 = vstv %s2070
    %v2096 = vmul.f32 %v2095, %v2080
    %v2097 = vmul.f32 %v2095, %v2082
    %v2098 = vmul.f32 %v2095, %v2084
    %v2099 = vmul.f32 %v2095, %v2086
    %v2100 = vmul.f32 %v2095, %v2088
    %v2101 = vmul.f32 %v2095, %v2090
    %v2102 = vmul.f32 %v2095, %v2092
    %v2103 = vmul.f32 %v2095, %v2094
    %v2104 = vadd.f32 %v1941, %v2096
    %v2105 = vadd.f32 %v1942, %v2097
    %v2106 = vadd.f32 %v1943, %v2098
    %v2107 = vadd.f32 %v1944, %v2099
    %v2108 = vadd.f32 %v1945, %v2100
    %v2109 = vadd.f32 %v1946, %v2101
    %v2110 = vadd.f32 %v1947, %v2102
    %v2111 = vadd.f32 %v1948, %v2103
    %v2112 = vmul.f32 %v869, 20.0
    %v2113 = vmul.f32 %v874, 20.0
    %v2114 = vmul.f32 %v879, 20.0
    %v2115 = vmul.f32 %v884, 20.0
    %v2116 = vmul.f32 %v889, 20.0
    %v2117 = vmul.f32 %v894, 20.0
    %v2118 = vmul.f32 %v899, 20.0
    %v2119 = vmul.f32 %v904, 20.0
    %v2120 = vmul.f32 %v2112, 1.442695
    %v2121 = vpow.pop %v2120
    %v2122 = vmul.f32 %v2113, 1.442695
    %v2123 = vpow.pop %v2122
    %v2124 = vmul.f32 %v2114, 1.442695
    %v2125 = vpow.pop %v2124
    %v2126 = vmul.f32 %v2115, 1.442695
    %v2127 = vpow.pop %v2126
    %v2128 = vmul.f32 %v2116, 1.442695
    %v2129 = vpow.pop %v2128
    %v2130 = vmul.f32 %v2117, 1.442695
    %v2131 = vpow.pop %v2130
    %v2132 = vmul.f32 %v2118, 1.442695
    %v2133 = vpow.pop %v2132
    %v2134 = vmul.f32 %v2119, 1.442695
    %v2135 = vpow.pop %v2134
    %v2136 = vmul.f32 %v1119, %v2121
    %v2137 = vmul.f32 %v1121, %v2123
    %v2138 = vmul.f32 %v1123, %v2125
    %v2139 = vmul.f32 %v1125, %v2127
    %v2140 = vmul.f32 %v1127, %v2129
    %v2141 = vmul.f32 %v1129, %v2131
    %v2142 = vmul.f32 %v1131, %v2133
    %v2143 = vmul.f32 %v1133, %v2135
    %v2144 = vmul.f32 %v2136, 0.01831564
    %v2145 = vmul.f32 %v2137, 0.01831564
    %v2146 = vmul.f32 %v2138, 0.01831564
    %v2147 = vmul.f32 %v2139, 0.01831564
    %v2148 = vmul.f32 %v2140, 0.01831564
    %v2149 = vmul.f32 %v2141, 0.01831564
    %v2150 = vmul.f32 %v2142, 0.01831564
    %v2151 = vmul.f32 %v2143, 0.01831564
    %2152 = vmatprep.subr.mxu0 0.0
    %2153 = vmatpush1.msra.mxu0 %v48
    %2154 = vmatprep.subr.mxu0 0.0
    %2155 = vmatpush1.msra.mxu0 %v49
    %2156 = vmatprep.subr.mxu0 0.0
    %2157 = vmatpush1.msra.mxu0 %v50
    %2158 = vmatprep.subr.mxu0 0.0
    %2159 = vmatpush1.msra.mxu0 %v51
    %2160 = vmatprep.subr.mxu0 0.0
    %2161 = vmatpush1.msra.mxu0 %v52
    %2162 = vmatprep.subr.mxu0 0.0
    %2163 = vmatpush1.msra.mxu0 %v53
    %2164 = vmatprep.subr.mxu0 0.0
    %2165 = vmatpush1.msra.mxu0 %v54
    %2166 = vmatprep.subr.mxu0 0.0
    %2167 = vmatpush1.msra.mxu0 %v55
    %2168 = vmatprep.subr.mxu0 0.0
    %2169 = vmatpush1.msra.mxu0 %v56
    %2170 = vmatprep.subr.mxu0 0.0
    %2171 = vmatpush1.msra.mxu0 %v57
    %2172 = vmatprep.subr.mxu0 0.0
    %2173 = vmatpush1.msra.mxu0 %v58
    %2174 = vmatprep.subr.mxu0 0.0
    %2175 = vmatpush1.msra.mxu0 %v59
    %2176 = vmatprep.subr.mxu0 0.0
    %2177 = vmatpush1.msra.mxu0 %v60
    %2178 = vmatprep.subr.mxu0 0.0
    %2179 = vmatpush1.msra.mxu0 %v61
    %2180 = vmatprep.subr.mxu0 0.0
    %2181 = vmatpush1.msra.mxu0 %v62
    %2182 = vmatprep.subr.mxu0 0.0
    %2183 = vmatpush1.msra.mxu0 %v63
    %2184 = vmatprep.subr.mxu0 0.0
    %2185 = vmatpush1.msra.mxu0 0.0
    %2186 = vmatprep.subr.mxu0 0.0
    %2187 = vmatpush1.msra.mxu0 0.0
    %2188 = vmatprep.subr.mxu0 0.0
    %2189 = vmatpush1.msra.mxu0 0.0
    %2190 = vmatprep.subr.mxu0 0.0
    %2191 = vmatpush1.msra.mxu0 0.0
    %2192 = vmatprep.subr.mxu0 0.0
    %2193 = vmatpush1.msra.mxu0 0.0
    %2194 = vmatprep.subr.mxu0 0.0
    %2195 = vmatpush1.msra.mxu0 0.0
    %2196 = vmatprep.subr.mxu0 0.0
    %2197 = vmatpush1.msra.mxu0 0.0
    %2198 = vmatprep.subr.mxu0 0.0
    %2199 = vmatpush1.msra.mxu0 0.0
    %2200 = vmatprep.subr.mxu0 0.0
    %2201 = vmatpush1.msra.mxu0 0.0
    %2202 = vmatprep.subr.mxu0 0.0
    %2203 = vmatpush1.msra.mxu0 0.0
    %2204 = vmatprep.subr.mxu0 0.0
    %2205 = vmatpush1.msra.mxu0 0.0
    %2206 = vmatprep.subr.mxu0 0.0
    %2207 = vmatpush1.msra.mxu0 0.0
    %2208 = vmatprep.subr.mxu0 0.0
    %2209 = vmatpush1.msra.mxu0 0.0
    %2210 = vmatprep.subr.mxu0 0.0
    %2211 = vmatpush1.msra.mxu0 0.0
    %2212 = vmatprep.subr.mxu0 0.0
    %2213 = vmatpush1.msra.mxu0 0.0
    %2214 = vmatprep.subr.mxu0 0.0
    %2215 = vmatpush1.msra.mxu0 0.0
    %2216 = vmatprep.mubr.f32.mxu0 0.0
    %2217 = vmatmul.mubr.f32.gmra.mrb[0].mxu0 %v2144
    %v2218 = vpop.f32.mrb[0].mxu0
    %v2219 = vadd.f32 0.0, %v2218
    %v2220 = vpop.f32.mrb[0].mxu0
    %2221 = vmatprep.mubr.f32.mxu0 0.0
    %2222 = vmatmul.mubr.f32.gmra.mrb[0].mxu0 %v2145
    %v2223 = vpop.f32.mrb[0].mxu0
    %v2224 = vadd.f32 0.0, %v2223
    %v2225 = vpop.f32.mrb[0].mxu0
    %2226 = vmatprep.mubr.f32.mxu0 0.0
    %2227 = vmatmul.mubr.f32.gmra.mrb[0].mxu0 %v2146
    %v2228 = vpop.f32.mrb[0].mxu0
    %v2229 = vadd.f32 0.0, %v2228
    %v2230 = vpop.f32.mrb[0].mxu0
    %2231 = vmatprep.mubr.f32.mxu0 0.0
    %2232 = vmatmul.mubr.f32.gmra.mrb[0].mxu0 %v2147
    %v2233 = vpop.f32.mrb[0].mxu0
    %v2234 = vadd.f32 0.0, %v2233
    %v2235 = vpop.f32.mrb[0].mxu0
    %2236 = vmatprep.mubr.f32.mxu0 0.0
    %2237 = vmatmul.mubr.f32.gmra.mrb[0].mxu0 %v2148
    %v2238 = vpop.f32.mrb[0].mxu0
    %v2239 = vadd.f32 0.0, %v2238
    %v2240 = vpop.f32.mrb[0].mxu0
    %2241 = vmatprep.mubr.f32.mxu0 0.0
    %2242 = vmatmul.mubr.f32.gmra.mrb[0].mxu0 %v2149
    %v2243 = vpop.f32.mrb[0].mxu0
    %v2244 = vadd.f32 0.0, %v2243
    %v2245 = vpop.f32.mrb[0].mxu0
    %2246 = vmatprep.mubr.f32.mxu0 0.0
    %2247 = vmatmul.mubr.f32.gmra.mrb[0].mxu0 %v2150
    %v2248 = vpop.f32.mrb[0].mxu0
    %v2249 = vadd.f32 0.0, %v2248
    %v2250 = vpop.f32.mrb[0].mxu0
    %2251 = vmatprep.mubr.f32.mxu0 0.0
    %2252 = vmatmul.mubr.f32.gmra.mrb[0].mxu0 %v2151
    %v2253 = vpop.f32.mrb[0].mxu0
    %v2254 = vadd.f32 0.0, %v2253
    %v2255 = vpop.f32.mrb[0].mxu0
    %2256 = vdwg.mxu0
    %s2257 = sld [smem:[#allocation2 + $0x4]]
    %v2258 = vmax.f32 %v2219, 1e-10
    %v2259 = vmax.f32 %v2224, 1e-10
    %v2260 = vmax.f32 %v2229, 1e-10
    %v2261 = vmax.f32 %v2234, 1e-10
    %v2262 = vmax.f32 %v2239, 1e-10
    %v2263 = vmax.f32 %v2244, 1e-10
    %v2264 = vmax.f32 %v2249, 1e-10
    %v2265 = vmax.f32 %v2254, 1e-10
    %v2266 = vlog2.pop %v2258
    %v2267 = vmul.f32 %v2266, 0.6931472
    %v2268 = vlog2.pop %v2259
    %v2269 = vmul.f32 %v2268, 0.6931472
    %v2270 = vlog2.pop %v2260
    %v2271 = vmul.f32 %v2270, 0.6931472
    %v2272 = vlog2.pop %v2261
    %v2273 = vmul.f32 %v2272, 0.6931472
    %v2274 = vlog2.pop %v2262
    %v2275 = vmul.f32 %v2274, 0.6931472
    %v2276 = vlog2.pop %v2263
    %v2277 = vmul.f32 %v2276, 0.6931472
    %v2278 = vlog2.pop %v2264
    %v2279 = vmul.f32 %v2278, 0.6931472
    %v2280 = vlog2.pop %v2265
    %v2281 = vmul.f32 %v2280, 0.6931472
    %v2282 = vstv %s2257
    %v2283 = vmul.f32 %v2282, %v2267
    %v2284 = vmul.f32 %v2282, %v2269
    %v2285 = vmul.f32 %v2282, %v2271
    %v2286 = vmul.f32 %v2282, %v2273
    %v2287 = vmul.f32 %v2282, %v2275
    %v2288 = vmul.f32 %v2282, %v2277
    %v2289 = vmul.f32 %v2282, %v2279
    %v2290 = vmul.f32 %v2282, %v2281
    %v2291 = vadd.f32 %v2104, %v2283
    %v2292 = vadd.f32 %v2105, %v2284
    %v2293 = vadd.f32 %v2106, %v2285
    %v2294 = vadd.f32 %v2107, %v2286
    %v2295 = vadd.f32 %v2108, %v2287
    %v2296 = vadd.f32 %v2109, %v2288
    %v2297 = vadd.f32 %v2110, %v2289
    %v2298 = vadd.f32 %v2111, %v2290
    %v2299 = vmul.f32 %v2144, %v2121
    %v2300 = vmul.f32 %v2145, %v2123
    %v2301 = vmul.f32 %v2146, %v2125
    %v2302 = vmul.f32 %v2147, %v2127
    %v2303 = vmul.f32 %v2148, %v2129
    %v2304 = vmul.f32 %v2149, %v2131
    %v2305 = vmul.f32 %v2150, %v2133
    %v2306 = vmul.f32 %v2151, %v2135
    %v2307 = vmul.f32 %v2299, 0.00033546262
    %v2308 = vmul.f32 %v2300, 0.00033546262
    %v2309 = vmul.f32 %v2301, 0.00033546262
    %v2310 = vmul.f32 %v2302, 0.00033546262
    %v2311 = vmul.f32 %v2303, 0.00033546262
    %v2312 = vmul.f32 %v2304, 0.00033546262
    %v2313 = vmul.f32 %v2305, 0.00033546262
    %v2314 = vmul.f32 %v2306, 0.00033546262
    %2315 = vmatprep.subr.mxu0 0.0
    %2316 = vmatpush1.msra.mxu0 %v48
    %2317 = vmatprep.subr.mxu0 0.0
    %2318 = vmatpush1.msra.mxu0 %v49
    %2319 = vmatprep.subr.mxu0 0.0
    %2320 = vmatpush1.msra.mxu0 %v50
    %2321 = vmatprep.subr.mxu0 0.0
    %2322 = vmatpush1.msra.mxu0 %v51
    %2323 = vmatprep.subr.mxu0 0.0
    %2324 = vmatpush1.msra.mxu0 %v52
    %2325 = vmatprep.subr.mxu0 0.0
    %2326 = vmatpush1.msra.mxu0 %v53
    %2327 = vmatprep.subr.mxu0 0.0
    %2328 = vmatpush1.msra.mxu0 %v54
    %2329 = vmatprep.subr.mxu0 0.0
    %2330 = vmatpush1.msra.mxu0 %v55
    %2331 = vmatprep.subr.mxu0 0.0
    %2332 = vmatpush1.msra.mxu0 %v56
    %2333 = vmatprep.subr.mxu0 0.0
    %2334 = vmatpush1.msra.mxu0 %v57
    %2335 = vmatprep.subr.mxu0 0.0
    %2336 = vmatpush1.msra.mxu0 %v58
    %2337 = vmatprep.subr.mxu0 0.0
    %2338 = vmatpush1.msra.mxu0 %v59
    %2339 = vmatprep.subr.mxu0 0.0
    %2340 = vmatpush1.msra.mxu0 %v60
    %2341 = vmatprep.subr.mxu0 0.0
    %2342 = vmatpush1.msra.mxu0 %v61
    %2343 = vmatprep.subr.mxu0 0.0
    %2344 = vmatpush1.msra.mxu0 %v62
    %2345 = vmatprep.subr.mxu0 0.0
    %2346 = vmatpush1.msra.mxu0 %v63
    %2347 = vmatprep.subr.mxu0 0.0
    %2348 = vmatpush1.msra.mxu0 0.0
    %2349 = vmatprep.subr.mxu0 0.0
    %2350 = vmatpush1.msra.mxu0 0.0
    %2351 = vmatprep.subr.mxu0 0.0
    %2352 = vmatpush1.msra.mxu0 0.0
    %2353 = vmatprep.subr.mxu0 0.0
    %2354 = vmatpush1.msra.mxu0 0.0
    %2355 = vmatprep.subr.mxu0 0.0
    %2356 = vmatpush1.msra.mxu0 0.0
    %2357 = vmatprep.subr.mxu0 0.0
    %2358 = vmatpush1.msra.mxu0 0.0
    %2359 = vmatprep.subr.mxu0 0.0
    %2360 = vmatpush1.msra.mxu0 0.0
    %2361 = vmatprep.subr.mxu0 0.0
    %2362 = vmatpush1.msra.mxu0 0.0
    %2363 = vmatprep.subr.mxu0 0.0
    %2364 = vmatpush1.msra.mxu0 0.0
    %2365 = vmatprep.subr.mxu0 0.0
    %2366 = vmatpush1.msra.mxu0 0.0
    %2367 = vmatprep.subr.mxu0 0.0
    %2368 = vmatpush1.msra.mxu0 0.0
    %2369 = vmatprep.subr.mxu0 0.0
    %2370 = vmatpush1.msra.mxu0 0.0
    %2371 = vmatprep.subr.mxu0 0.0
    %2372 = vmatpush1.msra.mxu0 0.0
    %2373 = vmatprep.subr.mxu0 0.0
    %2374 = vmatpush1.msra.mxu0 0.0
    %2375 = vmatprep.subr.mxu0 0.0
    %2376 = vmatpush1.msra.mxu0 0.0
    %2377 = vmatprep.subr.mxu0 0.0
    %2378 = vmatpush1.msra.mxu0 0.0
    %2379 = vmatprep.mubr.f32.mxu0 0.0
    %2380 = vmatmul.mubr.f32.gmra.mrb[0].mxu0 %v2307
    %v2381 = vpop.f32.mrb[0].mxu0
    %v2382 = vadd.f32 0.0, %v2381
    %v2383 = vpop.f32.mrb[0].mxu0
    %2384 = vmatprep.mubr.f32.mxu0 0.0
    %2385 = vmatmul.mubr.f32.gmra.mrb[0].mxu0 %v2308
    %v2386 = vpop.f32.mrb[0].mxu0
    %v2387 = vadd.f32 0.0, %v2386
    %v2388 = vpop.f32.mrb[0].mxu0
    %2389 = vmatprep.mubr.f32.mxu0 0.0
    %2390 = vmatmul.mubr.f32.gmra.mrb[0].mxu0 %v2309
    %v2391 = vpop.f32.mrb[0].mxu0
    %v2392 = vadd.f32 0.0, %v2391
    %v2393 = vpop.f32.mrb[0].mxu0
    %2394 = vmatprep.mubr.f32.mxu0 0.0
    %2395 = vmatmul.mubr.f32.gmra.mrb[0].mxu0 %v2310
    %v2396 = vpop.f32.mrb[0].mxu0
    %v2397 = vadd.f32 0.0, %v2396
    %v2398 = vpop.f32.mrb[0].mxu0
    %2399 = vmatprep.mubr.f32.mxu0 0.0
    %2400 = vmatmul.mubr.f32.gmra.mrb[0].mxu0 %v2311
    %v2401 = vpop.f32.mrb[0].mxu0
    %v2402 = vadd.f32 0.0, %v2401
    %v2403 = vpop.f32.mrb[0].mxu0
    %2404 = vmatprep.mubr.f32.mxu0 0.0
    %2405 = vmatmul.mubr.f32.gmra.mrb[0].mxu0 %v2312
    %v2406 = vpop.f32.mrb[0].mxu0
    %v2407 = vadd.f32 0.0, %v2406
    %v2408 = vpop.f32.mrb[0].mxu0
    %2409 = vmatprep.mubr.f32.mxu0 0.0
    %2410 = vmatmul.mubr.f32.gmra.mrb[0].mxu0 %v2313
    %v2411 = vpop.f32.mrb[0].mxu0
    %v2412 = vadd.f32 0.0, %v2411
    %v2413 = vpop.f32.mrb[0].mxu0
    %2414 = vmatprep.mubr.f32.mxu0 0.0
    %2415 = vmatmul.mubr.f32.gmra.mrb[0].mxu0 %v2314
    %v2416 = vpop.f32.mrb[0].mxu0
    %v2417 = vadd.f32 0.0, %v2416
    %v2418 = vpop.f32.mrb[0].mxu0
    %2419 = vdwg.mxu0
    %s2420 = sld [smem:[#allocation2 + $0x3]]
    %v2421 = vmax.f32 %v2382, 1e-10
    %v2422 = vmax.f32 %v2387, 1e-10
    %v2423 = vmax.f32 %v2392, 1e-10
    %v2424 = vmax.f32 %v2397, 1e-10
    %v2425 = vmax.f32 %v2402, 1e-10
    %v2426 = vmax.f32 %v2407, 1e-10
    %v2427 = vmax.f32 %v2412, 1e-10
    %v2428 = vmax.f32 %v2417, 1e-10
    %v2429 = vlog2.pop %v2421
    %v2430 = vmul.f32 %v2429, 0.6931472
    %v2431 = vlog2.pop %v2422
    %v2432 = vmul.f32 %v2431, 0.6931472
    %v2433 = vlog2.pop %v2423
    %v2434 = vmul.f32 %v2433, 0.6931472
    %v2435 = vlog2.pop %v2424
    %v2436 = vmul.f32 %v2435, 0.6931472
    %v2437 = vlog2.pop %v2425
    %v2438 = vmul.f32 %v2437, 0.6931472
    %v2439 = vlog2.pop %v2426
    %v2440 = vmul.f32 %v2439, 0.6931472
    %v2441 = vlog2.pop %v2427
    %v2442 = vmul.f32 %v2441, 0.6931472
    %v2443 = vlog2.pop %v2428
    %v2444 = vmul.f32 %v2443, 0.6931472
    %v2445 = vstv %s2420
    %v2446 = vmul.f32 %v2445, %v2430
    %v2447 = vmul.f32 %v2445, %v2432
    %v2448 = vmul.f32 %v2445, %v2434
    %v2449 = vmul.f32 %v2445, %v2436
    %v2450 = vmul.f32 %v2445, %v2438
    %v2451 = vmul.f32 %v2445, %v2440
    %v2452 = vmul.f32 %v2445, %v2442
    %v2453 = vmul.f32 %v2445, %v2444
    %v2454 = vadd.f32 %v2291, %v2446
    %v2455 = vadd.f32 %v2292, %v2447
    %v2456 = vadd.f32 %v2293, %v2448
    %v2457 = vadd.f32 %v2294, %v2449
    %v2458 = vadd.f32 %v2295, %v2450
    %v2459 = vadd.f32 %v2296, %v2451
    %v2460 = vadd.f32 %v2297, %v2452
    %v2461 = vadd.f32 %v2298, %v2453
    %v2462 = vmul.f32 %v2307, %v2121
    %v2463 = vmul.f32 %v2308, %v2123
    %v2464 = vmul.f32 %v2309, %v2125
    %v2465 = vmul.f32 %v2310, %v2127
    %v2466 = vmul.f32 %v2311, %v2129
    %v2467 = vmul.f32 %v2312, %v2131
    %v2468 = vmul.f32 %v2313, %v2133
    %v2469 = vmul.f32 %v2314, %v2135
    %v2470 = vmul.f32 %v2462, 6.1442124e-06
    %v2471 = vmul.f32 %v2463, 6.1442124e-06
    %v2472 = vmul.f32 %v2464, 6.1442124e-06
    %v2473 = vmul.f32 %v2465, 6.1442124e-06
    %v2474 = vmul.f32 %v2466, 6.1442124e-06
    %v2475 = vmul.f32 %v2467, 6.1442124e-06
    %v2476 = vmul.f32 %v2468, 6.1442124e-06
    %v2477 = vmul.f32 %v2469, 6.1442124e-06
    %2478 = vmatprep.subr.mxu0 0.0
    %2479 = vmatpush1.msra.mxu0 %v48
    %2480 = vmatprep.subr.mxu0 0.0
    %2481 = vmatpush1.msra.mxu0 %v49
    %2482 = vmatprep.subr.mxu0 0.0
    %2483 = vmatpush1.msra.mxu0 %v50
    %2484 = vmatprep.subr.mxu0 0.0
    %2485 = vmatpush1.msra.mxu0 %v51
    %2486 = vmatprep.subr.mxu0 0.0
    %2487 = vmatpush1.msra.mxu0 %v52
    %2488 = vmatprep.subr.mxu0 0.0
    %2489 = vmatpush1.msra.mxu0 %v53
    %2490 = vmatprep.subr.mxu0 0.0
    %2491 = vmatpush1.msra.mxu0 %v54
    %2492 = vmatprep.subr.mxu0 0.0
    %2493 = vmatpush1.msra.mxu0 %v55
    %2494 = vmatprep.subr.mxu0 0.0
    %2495 = vmatpush1.msra.mxu0 %v56
    %2496 = vmatprep.subr.mxu0 0.0
    %2497 = vmatpush1.msra.mxu0 %v57
    %2498 = vmatprep.subr.mxu0 0.0
    %2499 = vmatpush1.msra.mxu0 %v58
    %2500 = vmatprep.subr.mxu0 0.0
    %2501 = vmatpush1.msra.mxu0 %v59
    %2502 = vmatprep.subr.mxu0 0.0
    %2503 = vmatpush1.msra.mxu0 %v60
    %2504 = vmatprep.subr.mxu0 0.0
    %2505 = vmatpush1.msra.mxu0 %v61
    %2506 = vmatprep.subr.mxu0 0.0
    %2507 = vmatpush1.msra.mxu0 %v62
    %2508 = vmatprep.subr.mxu0 0.0
    %2509 = vmatpush1.msra.mxu0 %v63
    %2510 = vmatprep.subr.mxu0 0.0
    %2511 = vmatpush1.msra.mxu0 0.0
    %2512 = vmatprep.subr.mxu0 0.0
    %2513 = vmatpush1.msra.mxu0 0.0
    %2514 = vmatprep.subr.mxu0 0.0
    %2515 = vmatpush1.msra.mxu0 0.0
    %2516 = vmatprep.subr.mxu0 0.0
    %2517 = vmatpush1.msra.mxu0 0.0
    %2518 = vmatprep.subr.mxu0 0.0
    %2519 = vmatpush1.msra.mxu0 0.0
    %2520 = vmatprep.subr.mxu0 0.0
    %2521 = vmatpush1.msra.mxu0 0.0
    %2522 = vmatprep.subr.mxu0 0.0
    %2523 = vmatpush1.msra.mxu0 0.0
    %2524 = vmatprep.subr.mxu0 0.0
    %2525 = vmatpush1.msra.mxu0 0.0
    %2526 = vmatprep.subr.mxu0 0.0
    %2527 = vmatpush1.msra.mxu0 0.0
    %2528 = vmatprep.subr.mxu0 0.0
    %2529 = vmatpush1.msra.mxu0 0.0
    %2530 = vmatprep.subr.mxu0 0.0
    %2531 = vmatpush1.msra.mxu0 0.0
    %2532 = vmatprep.subr.mxu0 0.0
    %2533 = vmatpush1.msra.mxu0 0.0
    %2534 = vmatprep.subr.mxu0 0.0
    %2535 = vmatpush1.msra.mxu0 0.0
    %2536 = vmatprep.subr.mxu0 0.0
    %2537 = vmatpush1.msra.mxu0 0.0
    %2538 = vmatprep.subr.mxu0 0.0
    %2539 = vmatpush1.msra.mxu0 0.0
    %2540 = vmatprep.subr.mxu0 0.0
    %2541 = vmatpush1.msra.mxu0 0.0
    %2542 = vmatprep.mubr.f32.mxu0 0.0
    %2543 = vmatmul.mubr.f32.gmra.mrb[0].mxu0 %v2470
    %v2544 = vpop.f32.mrb[0].mxu0
    %v2545 = vadd.f32 0.0, %v2544
    %v2546 = vpop.f32.mrb[0].mxu0
    %2547 = vmatprep.mubr.f32.mxu0 0.0
    %2548 = vmatmul.mubr.f32.gmra.mrb[0].mxu0 %v2471
    %v2549 = vpop.f32.mrb[0].mxu0
    %v2550 = vadd.f32 0.0, %v2549
    %v2551 = vpop.f32.mrb[0].mxu0
    %2552 = vmatprep.mubr.f32.mxu0 0.0
    %2553 = vmatmul.mubr.f32.gmra.mrb[0].mxu0 %v2472
    %v2554 = vpop.f32.mrb[0].mxu0
    %v2555 = vadd.f32 0.0, %v2554
    %v2556 = vpop.f32.mrb[0].mxu0
    %2557 = vmatprep.mubr.f32.mxu0 0.0
    %2558 = vmatmul.mubr.f32.gmra.mrb[0].mxu0 %v2473
    %v2559 = vpop.f32.mrb[0].mxu0
    %v2560 = vadd.f32 0.0, %v2559
    %v2561 = vpop.f32.mrb[0].mxu0
    %2562 = vmatprep.mubr.f32.mxu0 0.0
    %2563 = vmatmul.mubr.f32.gmra.mrb[0].mxu0 %v2474
    %v2564 = vpop.f32.mrb[0].mxu0
    %v2565 = vadd.f32 0.0, %v2564
    %v2566 = vpop.f32.mrb[0].mxu0
    %2567 = vmatprep.mubr.f32.mxu0 0.0
    %2568 = vmatmul.mubr.f32.gmra.mrb[0].mxu0 %v2475
    %v2569 = vpop.f32.mrb[0].mxu0
    %v2570 = vadd.f32 0.0, %v2569
    %v2571 = vpop.f32.mrb[0].mxu0
    %2572 = vmatprep.mubr.f32.mxu0 0.0
    %2573 = vmatmul.mubr.f32.gmra.mrb[0].mxu0 %v2476
    %v2574 = vpop.f32.mrb[0].mxu0
    %v2575 = vadd.f32 0.0, %v2574
    %v2576 = vpop.f32.mrb[0].mxu0
    %2577 = vmatprep.mubr.f32.mxu0 0.0
    %2578 = vmatmul.mubr.f32.gmra.mrb[0].mxu0 %v2477
    %v2579 = vpop.f32.mrb[0].mxu0
    %v2580 = vadd.f32 0.0, %v2579
    %v2581 = vpop.f32.mrb[0].mxu0
    %2582 = vdwg.mxu0
    %s2583 = sld [smem:[#allocation2 + $0x2]]
    %v2584 = vmax.f32 %v2545, 1e-10
    %v2585 = vmax.f32 %v2550, 1e-10
    %v2586 = vmax.f32 %v2555, 1e-10
    %v2587 = vmax.f32 %v2560, 1e-10
    %v2588 = vmax.f32 %v2565, 1e-10
    %v2589 = vmax.f32 %v2570, 1e-10
    %v2590 = vmax.f32 %v2575, 1e-10
    %v2591 = vmax.f32 %v2580, 1e-10
    %v2592 = vlog2.pop %v2584
    %v2593 = vmul.f32 %v2592, 0.6931472
    %v2594 = vlog2.pop %v2585
    %v2595 = vmul.f32 %v2594, 0.6931472
    %v2596 = vlog2.pop %v2586
    %v2597 = vmul.f32 %v2596, 0.6931472
    %v2598 = vlog2.pop %v2587
    %v2599 = vmul.f32 %v2598, 0.6931472
    %v2600 = vlog2.pop %v2588
    %v2601 = vmul.f32 %v2600, 0.6931472
    %v2602 = vlog2.pop %v2589
    %v2603 = vmul.f32 %v2602, 0.6931472
    %v2604 = vlog2.pop %v2590
    %v2605 = vmul.f32 %v2604, 0.6931472
    %v2606 = vlog2.pop %v2591
    %v2607 = vmul.f32 %v2606, 0.6931472
    %v2608 = vstv %s2583
    %v2609 = vmul.f32 %v2608, %v2593
    %v2610 = vmul.f32 %v2608, %v2595
    %v2611 = vmul.f32 %v2608, %v2597
    %v2612 = vmul.f32 %v2608, %v2599
    %v2613 = vmul.f32 %v2608, %v2601
    %v2614 = vmul.f32 %v2608, %v2603
    %v2615 = vmul.f32 %v2608, %v2605
    %v2616 = vmul.f32 %v2608, %v2607
    %v2617 = vadd.f32 %v2454, %v2609
    %v2618 = vadd.f32 %v2455, %v2610
    %v2619 = vadd.f32 %v2456, %v2611
    %v2620 = vadd.f32 %v2457, %v2612
    %v2621 = vadd.f32 %v2458, %v2613
    %v2622 = vadd.f32 %v2459, %v2614
    %v2623 = vadd.f32 %v2460, %v2615
    %v2624 = vadd.f32 %v2461, %v2616
    %v2625 = vmul.f32 %v2470, %v2121
    %v2626 = vmul.f32 %v2471, %v2123
    %v2627 = vmul.f32 %v2472, %v2125
    %v2628 = vmul.f32 %v2473, %v2127
    %v2629 = vmul.f32 %v2474, %v2129
    %v2630 = vmul.f32 %v2475, %v2131
    %v2631 = vmul.f32 %v2476, %v2133
    %v2632 = vmul.f32 %v2477, %v2135
    %v2633 = vmul.f32 %v2625, 1.12535176e-07
    %v2634 = vmul.f32 %v2626, 1.12535176e-07
    %v2635 = vmul.f32 %v2627, 1.12535176e-07
    %v2636 = vmul.f32 %v2628, 1.12535176e-07
    %v2637 = vmul.f32 %v2629, 1.12535176e-07
    %v2638 = vmul.f32 %v2630, 1.12535176e-07
    %v2639 = vmul.f32 %v2631, 1.12535176e-07
    %v2640 = vmul.f32 %v2632, 1.12535176e-07
    %2641 = vmatprep.subr.mxu0 0.0
    %2642 = vmatpush1.msra.mxu0 %v48
    %2643 = vmatprep.subr.mxu0 0.0
    %2644 = vmatpush1.msra.mxu0 %v49
    %2645 = vmatprep.subr.mxu0 0.0
    %2646 = vmatpush1.msra.mxu0 %v50
    %2647 = vmatprep.subr.mxu0 0.0
    %2648 = vmatpush1.msra.mxu0 %v51
    %2649 = vmatprep.subr.mxu0 0.0
    %2650 = vmatpush1.msra.mxu0 %v52
    %2651 = vmatprep.subr.mxu0 0.0
    %2652 = vmatpush1.msra.mxu0 %v53
    %2653 = vmatprep.subr.mxu0 0.0
    %2654 = vmatpush1.msra.mxu0 %v54
    %2655 = vmatprep.subr.mxu0 0.0
    %2656 = vmatpush1.msra.mxu0 %v55
    %2657 = vmatprep.subr.mxu0 0.0
    %2658 = vmatpush1.msra.mxu0 %v56
    %2659 = vmatprep.subr.mxu0 0.0
    %2660 = vmatpush1.msra.mxu0 %v57
    %2661 = vmatprep.subr.mxu0 0.0
    %2662 = vmatpush1.msra.mxu0 %v58
    %2663 = vmatprep.subr.mxu0 0.0
    %2664 = vmatpush1.msra.mxu0 %v59
    %2665 = vmatprep.subr.mxu0 0.0
    %2666 = vmatpush1.msra.mxu0 %v60
    %2667 = vmatprep.subr.mxu0 0.0
    %2668 = vmatpush1.msra.mxu0 %v61
    %2669 = vmatprep.subr.mxu0 0.0
    %2670 = vmatpush1.msra.mxu0 %v62
    %2671 = vmatprep.subr.mxu0 0.0
    %2672 = vmatpush1.msra.mxu0 %v63
    %2673 = vmatprep.subr.mxu0 0.0
    %2674 = vmatpush1.msra.mxu0 0.0
    %2675 = vmatprep.subr.mxu0 0.0
    %2676 = vmatpush1.msra.mxu0 0.0
    %2677 = vmatprep.subr.mxu0 0.0
    %2678 = vmatpush1.msra.mxu0 0.0
    %2679 = vmatprep.subr.mxu0 0.0
    %2680 = vmatpush1.msra.mxu0 0.0
    %2681 = vmatprep.subr.mxu0 0.0
    %2682 = vmatpush1.msra.mxu0 0.0
    %2683 = vmatprep.subr.mxu0 0.0
    %2684 = vmatpush1.msra.mxu0 0.0
    %2685 = vmatprep.subr.mxu0 0.0
    %2686 = vmatpush1.msra.mxu0 0.0
    %2687 = vmatprep.subr.mxu0 0.0
    %2688 = vmatpush1.msra.mxu0 0.0
    %2689 = vmatprep.subr.mxu0 0.0
    %2690 = vmatpush1.msra.mxu0 0.0
    %2691 = vmatprep.subr.mxu0 0.0
    %2692 = vmatpush1.msra.mxu0 0.0
    %2693 = vmatprep.subr.mxu0 0.0
    %2694 = vmatpush1.msra.mxu0 0.0
    %2695 = vmatprep.subr.mxu0 0.0
    %2696 = vmatpush1.msra.mxu0 0.0
    %2697 = vmatprep.subr.mxu0 0.0
    %2698 = vmatpush1.msra.mxu0 0.0
    %2699 = vmatprep.subr.mxu0 0.0
    %2700 = vmatpush1.msra.mxu0 0.0
    %2701 = vmatprep.subr.mxu0 0.0
    %2702 = vmatpush1.msra.mxu0 0.0
    %2703 = vmatprep.subr.mxu0 0.0
    %2704 = vmatpush1.msra.mxu0 0.0
    %2705 = vmatprep.mubr.f32.mxu0 0.0
    %2706 = vmatmul.mubr.f32.gmra.mrb[0].mxu0 %v2633
    %v2707 = vpop.f32.mrb[0].mxu0
    %v2708 = vadd.f32 0.0, %v2707
    %v2709 = vpop.f32.mrb[0].mxu0
    %2710 = vmatprep.mubr.f32.mxu0 0.0
    %2711 = vmatmul.mubr.f32.gmra.mrb[0].mxu0 %v2634
    %v2712 = vpop.f32.mrb[0].mxu0
    %v2713 = vadd.f32 0.0, %v2712
    %v2714 = vpop.f32.mrb[0].mxu0
    %2715 = vmatprep.mubr.f32.mxu0 0.0
    %2716 = vmatmul.mubr.f32.gmra.mrb[0].mxu0 %v2635
    %v2717 = vpop.f32.mrb[0].mxu0
    %v2718 = vadd.f32 0.0, %v2717
    %v2719 = vpop.f32.mrb[0].mxu0
    %2720 = vmatprep.mubr.f32.mxu0 0.0
    %2721 = vmatmul.mubr.f32.gmra.mrb[0].mxu0 %v2636
    %v2722 = vpop.f32.mrb[0].mxu0
    %v2723 = vadd.f32 0.0, %v2722
    %v2724 = vpop.f32.mrb[0].mxu0
    %2725 = vmatprep.mubr.f32.mxu0 0.0
    %2726 = vmatmul.mubr.f32.gmra.mrb[0].mxu0 %v2637
    %v2727 = vpop.f32.mrb[0].mxu0
    %v2728 = vadd.f32 0.0, %v2727
    %v2729 = vpop.f32.mrb[0].mxu0
    %2730 = vmatprep.mubr.f32.mxu0 0.0
    %2731 = vmatmul.mubr.f32.gmra.mrb[0].mxu0 %v2638
    %v2732 = vpop.f32.mrb[0].mxu0
    %v2733 = vadd.f32 0.0, %v2732
    %v2734 = vpop.f32.mrb[0].mxu0
    %2735 = vmatprep.mubr.f32.mxu0 0.0
    %2736 = vmatmul.mubr.f32.gmra.mrb[0].mxu0 %v2639
    %v2737 = vpop.f32.mrb[0].mxu0
    %v2738 = vadd.f32 0.0, %v2737
    %v2739 = vpop.f32.mrb[0].mxu0
    %2740 = vmatprep.mubr.f32.mxu0 0.0
    %2741 = vmatmul.mubr.f32.gmra.mrb[0].mxu0 %v2640
    %v2742 = vpop.f32.mrb[0].mxu0
    %v2743 = vadd.f32 0.0, %v2742
    %v2744 = vpop.f32.mrb[0].mxu0
    %2745 = vdwg.mxu0
    %s2746 = sld [smem:[#allocation2 + $0x1]]
    %v2747 = vmax.f32 %v2708, 1e-10
    %v2748 = vmax.f32 %v2713, 1e-10
    %v2749 = vmax.f32 %v2718, 1e-10
    %v2750 = vmax.f32 %v2723, 1e-10
    %v2751 = vmax.f32 %v2728, 1e-10
    %v2752 = vmax.f32 %v2733, 1e-10
    %v2753 = vmax.f32 %v2738, 1e-10
    %v2754 = vmax.f32 %v2743, 1e-10
    %v2755 = vlog2.pop %v2747
    %v2756 = vmul.f32 %v2755, 0.6931472
    %v2757 = vlog2.pop %v2748
    %v2758 = vmul.f32 %v2757, 0.6931472
    %v2759 = vlog2.pop %v2749
    %v2760 = vmul.f32 %v2759, 0.6931472
    %v2761 = vlog2.pop %v2750
    %v2762 = vmul.f32 %v2761, 0.6931472
    %v2763 = vlog2.pop %v2751
    %v2764 = vmul.f32 %v2763, 0.6931472
    %v2765 = vlog2.pop %v2752
    %v2766 = vmul.f32 %v2765, 0.6931472
    %v2767 = vlog2.pop %v2753
    %v2768 = vmul.f32 %v2767, 0.6931472
    %v2769 = vlog2.pop %v2754
    %v2770 = vmul.f32 %v2769, 0.6931472
    %v2771 = vstv %s2746
    %v2772 = vmul.f32 %v2771, %v2756
    %v2773 = vmul.f32 %v2771, %v2758
    %v2774 = vmul.f32 %v2771, %v2760
    %v2775 = vmul.f32 %v2771, %v2762
    %v2776 = vmul.f32 %v2771, %v2764
    %v2777 = vmul.f32 %v2771, %v2766
    %v2778 = vmul.f32 %v2771, %v2768
    %v2779 = vmul.f32 %v2771, %v2770
    %v2780 = vadd.f32 %v2617, %v2772
    %v2781 = vadd.f32 %v2618, %v2773
    %v2782 = vadd.f32 %v2619, %v2774
    %v2783 = vadd.f32 %v2620, %v2775
    %v2784 = vadd.f32 %v2621, %v2776
    %v2785 = vadd.f32 %v2622, %v2777
    %v2786 = vadd.f32 %v2623, %v2778
    %v2787 = vadd.f32 %v2624, %v2779
    %v2788 = vmul.f32 %v2780, %v40
    %v2789 = vmul.f32 %v2781, %v41
    %v2790 = vmul.f32 %v2782, %v42
    %v2791 = vmul.f32 %v2783, %v43
    %v2792 = vmul.f32 %v2784, %v44
    %v2793 = vmul.f32 %v2785, %v45
    %v2794 = vmul.f32 %v2786, %v46
    %v2795 = vmul.f32 %v2787, %v47
    %vm2796 = vcmask 64512
    %v2797 = vsel %vm2796, %v2788, 0.0
    %v2798 = vsel %vm2796, %v2789, 0.0
    %v2799 = vadd.f32 %v2797, %v2798
    %v2800 = vsel %vm2796, %v2790, 0.0
    %v2801 = vadd.f32 %v2799, %v2800
    %v2802 = vsel %vm2796, %v2791, 0.0
    %v2803 = vadd.f32 %v2801, %v2802
    %v2804 = vsel %vm2796, %v2792, 0.0
    %v2805 = vadd.f32 %v2803, %v2804
    %v2806 = vsel %vm2796, %v2793, 0.0
    %v2807 = vadd.f32 %v2805, %v2806
    %v2808 = vsel %vm2796, %v2794, 0.0
    %v2809 = vadd.f32 %v2807, %v2808
    %v2810 = vsel %vm2796, %v2795, 0.0
    %v2811 = vadd.f32 %v2809, %v2810
    %v2812 = vrot.slane %v2811, 4
    %v2813 = vadd.f32 %v2811, %v2812
    %v2814 = vrot.slane %v2813, 2
    %v2815 = vadd.f32 %v2813, %v2814
    %v2816 = vrot.slane %v2815, 1
    %v2817 = vadd.f32 %v2815, %v2816
    %v2818 = vmul.f32 %v2817, 0.01
    %s2819 = sld [smem:[#allocation2 + $0xb]]
    %v2820 = vstv %s2819
    %v2821 = vadd.f32 %v2818, %v2820
    %v2822 = vtanh.pop %v2821
    %vm2823 = vcmask 57344
    %2824 = vst.msk [vmem:[#allocation5] sm:$0x1] %vm2823, %v2822
    // Predicated region
    $region30: #{tpu_custom_call.1} parent=1 // pred_check
      _
    $region31: #{tpu_custom_call.1} parent=1 // pred_check_branch
      %2826 = sbr.rel (0) target = $region33
    $region32: #{tpu_custom_call.1} parent=1 // pred_region
      %s2828 = ssub.s32 16, 16
      %2829 = vsyncadd [#allocation3], %s2828
      %s2831 = sshll.u32 [#allocation5], 4
      %s2832 = int_to_ptr.vmem [resolvable:$true] %s2831
      %2834 = dma.vmem_to_hbm [thread:$0]  %s2832, 16, %s6, [#allocation3]
    $region33: #{tpu_custom_call.1} parent=1 // pred_fallthru
      _
    // Predicated region
    $region34: #{tpu_custom_call.1} parent=1 // pred_check
      _
    $region35: #{tpu_custom_call.1} parent=1 // pred_check_branch
      %2836 = sbr.rel (0) target = $region37
    $region36: #{tpu_custom_call.1} parent=1 // pred_region
      %2837 = dma.done [#allocation3], 16
    $region37: #{tpu_custom_call.1} parent=1 // pred_fallthru
      _
    %2838 = vsyncpa [#allocation3], 1
    %2839 = vsyncpa [#allocation4], 1

</llo_original>
